<compile_context>
chip_gen: v5e
topology: v5e:2x2
jax: 0.10.0
libtpu: 0.0.40
codegen_flags: <defaults>
</compile_context>

<pallas_src>
import functools

import jax
import jax.numpy as jnp
from jax import lax
from jax.experimental import pallas as pl
from jax.experimental.pallas import tpu as pltpu

# Lane-padded sizes (true sizes in parentheses).
CIN_P = 8      # input channels (3), padded for sublane-aligned contraction
COUT_P = 128   # backbone out channels (32)
D_P = 128      # proposal / attention dim (32)
DH_P = 128     # FFN hidden dim (64)
OUT_P = 128    # fused cls(9) + box(4) head output, padded to one dense vreg row
NCLS = 9
NBOX = 4


def _simrel_fused_kernel(x_ref, wconv_ref, bconv_ref, prop_ref,
                         wk_ref, wv_ref, w1_ref, b1_ref, wcb_ref, bcb_ref,
                         out_ref, *, H, W):
    """One grid step == one image: conv3x3+ReLU backbone, cross-attention of
    learned proposal queries over the feature tokens, FFN, fused cls+box head."""
    T = H * W
    x = x_ref[0]                                       # (T, CIN_P) f32 tokens

    # token -> (row, col) as exact f32 (avoids vector integer div/mod).
    tok = lax.broadcasted_iota(jnp.int32, (T, 1), 0).astype(jnp.float32)
    row = jnp.floor((tok + 0.5) * (1.0 / W))
    col = tok - row * W

    # ---- backbone: 3x3 same conv as 9 shifted matmuls accumulated in VMEM ----
    acc = jnp.zeros((T, COUT_P), jnp.float32)
    for idx in range(9):
        di = idx // 3 - 1
        dj = idx % 3 - 1
        s = di * W + dj
        shifted = x if s == 0 else pltpu.roll(x, (-s) % T, 0)
        r2 = row + di
        c2 = col + dj
        valid = (r2 > -0.5) & (r2 < H - 0.5) & (c2 > -0.5) & (c2 < W - 0.5)
        lhs = jnp.where(valid, shifted, 0.0)           # zero out-of-image taps
        acc = acc + jnp.dot(lhs, wconv_ref[idx],
                            preferred_element_type=jnp.float32)
    feat = jnp.maximum(acc + bconv_ref[...], 0.0)      # (T, COUT_P) f32, ReLU
    feat_b = feat.astype(jnp.bfloat16)

    # ---- roi head: K/V projection (1/sqrt(D) already folded into wk) ----
    k = jnp.dot(feat_b, wk_ref[...], preferred_element_type=jnp.float32)
    v = jnp.dot(feat_b, wv_ref[...], preferred_element_type=jnp.float32)

    # attention scores: proposals x tokens, contracting D without transposing k.
    p = prop_ref[...]                                  # (Np, D_P) bf16
    s_qk = lax.dot_general(
        p, k.astype(jnp.bfloat16),
        dimension_numbers=(((1,), (1,)), ((), ())),
        preferred_element_type=jnp.float32)            # (Np, T)
    s_qk = s_qk - jnp.max(s_qk, axis=-1, keepdims=True)
    e = jnp.exp(s_qk)
    att = e * pl.reciprocal(jnp.sum(e, axis=-1, keepdims=True), approx=True)
    ctx = jnp.dot(att.astype(jnp.bfloat16), v.astype(jnp.bfloat16),
                  preferred_element_type=jnp.float32)  # (Np, D_P)

    # FFN + fused class/box head: single 128-lane-dense store.
    h = jnp.maximum(
        jnp.dot(ctx.astype(jnp.bfloat16), w1_ref[...],
                preferred_element_type=jnp.float32) + b1_ref[...], 0.0)
    out_ref[0] = (jnp.dot(h.astype(jnp.bfloat16), wcb_ref[...],
                          preferred_element_type=jnp.float32) + bcb_ref[...])


def simrel_fused_call(x_tokens, params, *, H, W):
    """x_tokens: (B, T, CIN_P) f32. Returns raw fused head output (B, Np, OUT_P)."""
    B, T, _ = x_tokens.shape
    Np = params["proposals"].shape[0]
    kernel = functools.partial(_simrel_fused_kernel, H=H, W=W)
    return pl.pallas_call(
        kernel,
        out_shape=jax.ShapeDtypeStruct((B, Np, OUT_P), jnp.float32),
        grid=(B,),
        in_specs=[
            pl.BlockSpec((1, T, CIN_P), lambda b: (b, 0, 0)),       # image tokens
            pl.BlockSpec((9, CIN_P, COUT_P), lambda b: (0, 0, 0)),  # conv weights
            pl.BlockSpec((1, COUT_P), lambda b: (0, 0)),            # conv bias
            pl.BlockSpec((Np, D_P), lambda b: (0, 0)),              # proposals
            pl.BlockSpec((COUT_P, D_P), lambda b: (0, 0)),          # wk (scaled)
            pl.BlockSpec((COUT_P, D_P), lambda b: (0, 0)),          # wv
            pl.BlockSpec((D_P, DH_P), lambda b: (0, 0)),            # w1
            pl.BlockSpec((1, DH_P), lambda b: (0, 0)),              # b1
            pl.BlockSpec((DH_P, OUT_P), lambda b: (0, 0)),          # wc|wb fused
            pl.BlockSpec((1, OUT_P), lambda b: (0, 0)),             # bc|bb fused
        ],
        out_specs=pl.BlockSpec((1, Np, OUT_P), lambda b: (b, 0, 0)),
        compiler_params=pltpu.CompilerParams(
            dimension_semantics=("parallel",)),
    )(x_tokens, params["conv_w"], params["conv_b"], params["proposals"],
      params["wk"], params["wv"], params["w1"], params["b1"],
      params["wcb"], params["bcb"])


def _pad_to(a, shape):
    return jnp.pad(a, [(0, t - s) for s, t in zip(a.shape, shape)])


def init_params(key, *, cin=3, cout=32, n_prop=16, d=32, d_hidden=64,
                n_cls=NCLS):
    ks = jax.random.split(key, 7)
    s = 0.05
    conv_w = s * jax.random.normal(ks[0], (9, cin, cout), jnp.float32)
    proposals = s * jax.random.normal(ks[1], (n_prop, d), jnp.float32)
    # Fold the 1/sqrt(D) attention scale into wk once, at init.
    wk = s * jax.random.normal(ks[2], (cout, d), jnp.float32) / (d ** 0.5)
    wv = s * jax.random.normal(ks[3], (cout, d), jnp.float32)
    w1 = s * jax.random.normal(ks[4], (d, d_hidden), jnp.float32)
    wc = s * jax.random.normal(ks[5], (d_hidden, n_cls), jnp.float32)
    wb = s * jax.random.normal(ks[6], (d_hidden, 4), jnp.float32)
    wcb = jnp.concatenate([wc, wb], axis=1)                # fused cls|box head
    return {
        "conv_w": _pad_to(conv_w, (9, CIN_P, COUT_P)),                       # f32
        "conv_b": jnp.zeros((1, COUT_P), jnp.float32),
        "proposals": _pad_to(proposals, (n_prop, D_P)).astype(jnp.bfloat16),
        "wk": _pad_to(wk, (COUT_P, D_P)).astype(jnp.bfloat16),
        "wv": _pad_to(wv, (COUT_P, D_P)).astype(jnp.bfloat16),
        "w1": _pad_to(w1, (D_P, DH_P)).astype(jnp.bfloat16),
        "b1": jnp.zeros((1, DH_P), jnp.float32),
        "wcb": _pad_to(wcb, (DH_P, OUT_P)).astype(jnp.bfloat16),
        "bcb": jnp.zeros((1, OUT_P), jnp.float32),
    }


@jax.jit
def simrel_rcnn_forward(images_nchw, params):
    """Inference forward. images_nchw: (B, Cin, H, W) f32 (like images.tensors).
    Returns per-image detections (boxes xyxy in pixels, scores, labels, logits)."""
    B, Cin, H, W = images_nchw.shape
    T = H * W
    # Cheap layout glue (O(input) bytes, no 9x im2col blow-up): NCHW -> (B,T,Cin)
    # tokens, channel-padded for the in-kernel conv GEMM.
    x_tokens = jnp.transpose(images_nchw, (0, 2, 3, 1)).reshape(B, T, Cin)
    x_tokens = _pad_to(x_tokens, (B, T, CIN_P))

    raw = simrel_fused_call(x_tokens, params, H=H, W=W)     # (B, Np, 128)
    cls_logits = raw[..., :NCLS]
    boxes_cxcywh = jax.nn.sigmoid(raw[..., NCLS:NCLS + NBOX])

    # BoxList-style post-processing glue: scores / labels / pixel xyxy boxes.
    probs = jax.nn.softmax(cls_logits, axis=-1)
    scores = jnp.max(probs[..., 1:], axis=-1)               # drop background 0
    labels = jnp.argmax(probs[..., 1:], axis=-1) + 1
    cx, cy, bw, bh = jnp.split(boxes_cxcywh, 4, axis=-1)
    boxes_xyxy = jnp.concatenate(
        [(cx - bw / 2) * W, (cy - bh / 2) * H,
         (cx + bw / 2) * W, (cy + bh / 2) * H], axis=-1)
    # TODO(synk): NMS / score thresholding / BoxList construction and the
    # training-mode RPN + relation losses have no clean Pallas equivalent here.
    return {"boxes": boxes_xyxy, "scores": scores, "labels": labels,
            "class_logits": cls_logits}


if __name__ == "__main__":
    key = jax.random.PRNGKey(0)
    k_img, k_par = jax.random.split(key)
    # Small shapes: batch=2, 3 input channels, 16x16 images (NCHW).
    images = jax.random.normal(k_img, (2, 3, 16, 16), jnp.float32)
    params = init_params(k_par)

    result = simrel_rcnn_forward(images, params)
    jax.block_until_ready(result)

    assert result["boxes"].shape == (2, 16, 4)
    assert result["class_logits"].shape == (2, 16, 9)
    assert result["scores"].shape == (2, 16)
    print("KERNEL_OK")
</pallas_src>

<mosaic_0001>
module attributes {stable_mosaic.version = 11 : i64} {
  func.func @_simrel_fused_kernel(%arg0: i32, %arg1: memref<1x256x8xf32, #tpu.memory_space<vmem>>, %arg2: memref<9x8x128xf32, #tpu.memory_space<vmem>>, %arg3: memref<1x128xf32, #tpu.memory_space<vmem>>, %arg4: memref<16x128xbf16, #tpu.memory_space<vmem>>, %arg5: memref<128x128xbf16, #tpu.memory_space<vmem>>, %arg6: memref<128x128xbf16, #tpu.memory_space<vmem>>, %arg7: memref<128x128xbf16, #tpu.memory_space<vmem>>, %arg8: memref<1x128xf32, #tpu.memory_space<vmem>>, %arg9: memref<128x128xbf16, #tpu.memory_space<vmem>>, %arg10: memref<1x128xf32, #tpu.memory_space<vmem>>, %arg11: memref<1x16x128xf32, #tpu.memory_space<vmem>>) attributes {dimension_semantics = [#tpu.dimension_semantics<parallel>], iteration_bounds = array<i64: 2>, scalar_prefetch = 0 : i64, scratch_operands = 0 : i64, tpu.core_type = #tpu.core_type<tc>, window_params = [{transform_indices = @transform_0, window_bounds = array<i64: 1, 256, 8>}, {pipeline_mode = #tpu.pipeline_mode<synchronous>, transform_indices = @transform_1, window_bounds = array<i64: 9, 8, 128>}, {pipeline_mode = #tpu.pipeline_mode<synchronous>, transform_indices = @transform_2, window_bounds = array<i64: 1, 128>}, {pipeline_mode = #tpu.pipeline_mode<synchronous>, transform_indices = @transform_3, window_bounds = array<i64: 16, 128>}, {pipeline_mode = #tpu.pipeline_mode<synchronous>, transform_indices = @transform_4, window_bounds = array<i64: 128, 128>}, {pipeline_mode = #tpu.pipeline_mode<synchronous>, transform_indices = @transform_5, window_bounds = array<i64: 128, 128>}, {pipeline_mode = #tpu.pipeline_mode<synchronous>, transform_indices = @transform_6, window_bounds = array<i64: 128, 128>}, {pipeline_mode = #tpu.pipeline_mode<synchronous>, transform_indices = @transform_7, window_bounds = array<i64: 1, 128>}, {pipeline_mode = #tpu.pipeline_mode<synchronous>, transform_indices = @transform_8, window_bounds = array<i64: 128, 128>}, {pipeline_mode = #tpu.pipeline_mode<synchronous>, transform_indices = @transform_9, window_bounds = array<i64: 1, 128>}, {transform_indices = @transform_10, window_bounds = array<i64: 1, 16, 128>}]} {
    %c0 = arith.constant 0 : index
    %c0_0 = arith.constant 0 : index
    %c0_1 = arith.constant 0 : index
    %0 = vector.load %arg1[%c0, %c0_0, %c0_1] : memref<1x256x8xf32, #tpu.memory_space<vmem>>, vector<1x256x8xf32>
    %1 = vector.shape_cast %0 : vector<1x256x8xf32> to vector<256x8xf32>
    %2 = tpu.iota {dimensions = array<i32: 0>} : vector<256x1xi32>
    %3 = arith.sitofp %2 : vector<256x1xi32> to vector<256x1xf32>
    %cst = arith.constant 5.000000e-01 : f32
    %4 = vector.broadcast %cst : f32 to vector<256x1xf32>
    %5 = arith.addf %3, %4 : vector<256x1xf32>
    %cst_2 = arith.constant 6.250000e-02 : f32
    %6 = vector.broadcast %cst_2 : f32 to vector<256x1xf32>
    %7 = arith.mulf %5, %6 : vector<256x1xf32>
    %8 = math.floor %7 : vector<256x1xf32>
    %cst_3 = arith.constant 1.600000e+01 : f32
    %9 = vector.broadcast %cst_3 : f32 to vector<256x1xf32>
    %10 = arith.mulf %8, %9 : vector<256x1xf32>
    %11 = arith.subf %3, %10 : vector<256x1xf32>
    %cst_4 = arith.constant 0.000000e+00 : f32
    %12 = vector.broadcast %cst_4 : f32 to vector<256x128xf32>
    %c17_i32 = arith.constant 17 : i32
    %13 = tpu.dynamic_rotate %1 by %c17_i32 dim 0 : vector<256x8xf32>, i32 -> vector<256x8xf32>
    %cst_5 = arith.constant -1.000000e+00 : f32
    %14 = vector.broadcast %cst_5 : f32 to vector<256x1xf32>
    %15 = arith.addf %8, %14 : vector<256x1xf32>
    %cst_6 = arith.constant -1.000000e+00 : f32
    %16 = vector.broadcast %cst_6 : f32 to vector<256x1xf32>
    %17 = arith.addf %11, %16 : vector<256x1xf32>
    %cst_7 = arith.constant -5.000000e-01 : f32
    %18 = vector.broadcast %cst_7 : f32 to vector<256x1xf32>
    %19 = arith.cmpf ogt, %15, %18 : vector<256x1xf32>
    %cst_8 = arith.constant 1.550000e+01 : f32
    %20 = vector.broadcast %cst_8 : f32 to vector<256x1xf32>
    %21 = arith.cmpf olt, %15, %20 : vector<256x1xf32>
    %22 = arith.andi %19, %21 : vector<256x1xi1>
    %cst_9 = arith.constant -5.000000e-01 : f32
    %23 = vector.broadcast %cst_9 : f32 to vector<256x1xf32>
    %24 = arith.cmpf ogt, %17, %23 : vector<256x1xf32>
    %25 = arith.andi %22, %24 : vector<256x1xi1>
    %cst_10 = arith.constant 1.550000e+01 : f32
    %26 = vector.broadcast %cst_10 : f32 to vector<256x1xf32>
    %27 = arith.cmpf olt, %17, %26 : vector<256x1xf32>
    %28 = arith.andi %25, %27 : vector<256x1xi1>
    %cst_11 = arith.constant 0.000000e+00 : f32
    %29 = vector.shape_cast %28 : vector<256x1xi1> to vector<256x1xi1>
    %30 = vector.broadcast %29 : vector<256x1xi1> to vector<256x8xi1>
    %31 = vector.broadcast %cst_11 : f32 to vector<256x8xf32>
    %32 = arith.select %30, %13, %31 : vector<256x8xi1>, vector<256x8xf32>
    %c0_12 = arith.constant 0 : index
    %c0_13 = arith.constant 0 : index
    %c0_14 = arith.constant 0 : index
    %33 = vector.load %arg2[%c0_12, %c0_13, %c0_14] : memref<9x8x128xf32, #tpu.memory_space<vmem>>, vector<1x8x128xf32>
    %34 = vector.shape_cast %33 : vector<1x8x128xf32> to vector<8x128xf32>
    %cst_15 = arith.constant dense<0.000000e+00> : vector<256x128xf32>
    %35 = tpu.matmul %32, %34, %cst_15 {dimension_numbers = #tpu.dot_dimension_numbers<[1], [0], [0], [1], [0, 0, 1, 1], [], []>} : vector<256x8xf32>, vector<8x128xf32>, vector<256x128xf32> -> vector<256x128xf32>
    %36 = arith.addf %12, %35 : vector<256x128xf32>
    %c16_i32 = arith.constant 16 : i32
    %37 = tpu.dynamic_rotate %1 by %c16_i32 dim 0 : vector<256x8xf32>, i32 -> vector<256x8xf32>
    %cst_16 = arith.constant -1.000000e+00 : f32
    %38 = vector.broadcast %cst_16 : f32 to vector<256x1xf32>
    %39 = arith.addf %8, %38 : vector<256x1xf32>
    %cst_17 = arith.constant 0.000000e+00 : f32
    %40 = vector.broadcast %cst_17 : f32 to vector<256x1xf32>
    %41 = arith.addf %11, %40 : vector<256x1xf32>
    %cst_18 = arith.constant -5.000000e-01 : f32
    %42 = vector.broadcast %cst_18 : f32 to vector<256x1xf32>
    %43 = arith.cmpf ogt, %39, %42 : vector<256x1xf32>
    %cst_19 = arith.constant 1.550000e+01 : f32
    %44 = vector.broadcast %cst_19 : f32 to vector<256x1xf32>
    %45 = arith.cmpf olt, %39, %44 : vector<256x1xf32>
    %46 = arith.andi %43, %45 : vector<256x1xi1>
    %cst_20 = arith.constant -5.000000e-01 : f32
    %47 = vector.broadcast %cst_20 : f32 to vector<256x1xf32>
    %48 = arith.cmpf ogt, %41, %47 : vector<256x1xf32>
    %49 = arith.andi %46, %48 : vector<256x1xi1>
    %cst_21 = arith.constant 1.550000e+01 : f32
    %50 = vector.broadcast %cst_21 : f32 to vector<256x1xf32>
    %51 = arith.cmpf olt, %41, %50 : vector<256x1xf32>
    %52 = arith.andi %49, %51 : vector<256x1xi1>
    %cst_22 = arith.constant 0.000000e+00 : f32
    %53 = vector.shape_cast %52 : vector<256x1xi1> to vector<256x1xi1>
    %54 = vector.broadcast %53 : vector<256x1xi1> to vector<256x8xi1>
    %55 = vector.broadcast %cst_22 : f32 to vector<256x8xf32>
    %56 = arith.select %54, %37, %55 : vector<256x8xi1>, vector<256x8xf32>
    %c1 = arith.constant 1 : index
    %c0_23 = arith.constant 0 : index
    %c0_24 = arith.constant 0 : index
    %57 = vector.load %arg2[%c1, %c0_23, %c0_24] : memref<9x8x128xf32, #tpu.memory_space<vmem>>, vector<1x8x128xf32>
    %58 = vector.shape_cast %57 : vector<1x8x128xf32> to vector<8x128xf32>
    %cst_25 = arith.constant dense<0.000000e+00> : vector<256x128xf32>
    %59 = tpu.matmul %56, %58, %cst_25 {dimension_numbers = #tpu.dot_dimension_numbers<[1], [0], [0], [1], [0, 0, 1, 1], [], []>} : vector<256x8xf32>, vector<8x128xf32>, vector<256x128xf32> -> vector<256x128xf32>
    %60 = arith.addf %36, %59 : vector<256x128xf32>
    %c15_i32 = arith.constant 15 : i32
    %61 = tpu.dynamic_rotate %1 by %c15_i32 dim 0 : vector<256x8xf32>, i32 -> vector<256x8xf32>
    %cst_26 = arith.constant -1.000000e+00 : f32
    %62 = vector.broadcast %cst_26 : f32 to vector<256x1xf32>
    %63 = arith.addf %8, %62 : vector<256x1xf32>
    %cst_27 = arith.constant 1.000000e+00 : f32
    %64 = vector.broadcast %cst_27 : f32 to vector<256x1xf32>
    %65 = arith.addf %11, %64 : vector<256x1xf32>
    %cst_28 = arith.constant -5.000000e-01 : f32
    %66 = vector.broadcast %cst_28 : f32 to vector<256x1xf32>
    %67 = arith.cmpf ogt, %63, %66 : vector<256x1xf32>
    %cst_29 = arith.constant 1.550000e+01 : f32
    %68 = vector.broadcast %cst_29 : f32 to vector<256x1xf32>
    %69 = arith.cmpf olt, %63, %68 : vector<256x1xf32>
    %70 = arith.andi %67, %69 : vector<256x1xi1>
    %cst_30 = arith.constant -5.000000e-01 : f32
    %71 = vector.broadcast %cst_30 : f32 to vector<256x1xf32>
    %72 = arith.cmpf ogt, %65, %71 : vector<256x1xf32>
    %73 = arith.andi %70, %72 : vector<256x1xi1>
    %cst_31 = arith.constant 1.550000e+01 : f32
    %74 = vector.broadcast %cst_31 : f32 to vector<256x1xf32>
    %75 = arith.cmpf olt, %65, %74 : vector<256x1xf32>
    %76 = arith.andi %73, %75 : vector<256x1xi1>
    %cst_32 = arith.constant 0.000000e+00 : f32
    %77 = vector.shape_cast %76 : vector<256x1xi1> to vector<256x1xi1>
    %78 = vector.broadcast %77 : vector<256x1xi1> to vector<256x8xi1>
    %79 = vector.broadcast %cst_32 : f32 to vector<256x8xf32>
    %80 = arith.select %78, %61, %79 : vector<256x8xi1>, vector<256x8xf32>
    %c2 = arith.constant 2 : index
    %c0_33 = arith.constant 0 : index
    %c0_34 = arith.constant 0 : index
    %81 = vector.load %arg2[%c2, %c0_33, %c0_34] : memref<9x8x128xf32, #tpu.memory_space<vmem>>, vector<1x8x128xf32>
    %82 = vector.shape_cast %81 : vector<1x8x128xf32> to vector<8x128xf32>
    %cst_35 = arith.constant dense<0.000000e+00> : vector<256x128xf32>
    %83 = tpu.matmul %80, %82, %cst_35 {dimension_numbers = #tpu.dot_dimension_numbers<[1], [0], [0], [1], [0, 0, 1, 1], [], []>} : vector<256x8xf32>, vector<8x128xf32>, vector<256x128xf32> -> vector<256x128xf32>
    %84 = arith.addf %60, %83 : vector<256x128xf32>
    %c1_i32 = arith.constant 1 : i32
    %85 = tpu.dynamic_rotate %1 by %c1_i32 dim 0 : vector<256x8xf32>, i32 -> vector<256x8xf32>
    %cst_36 = arith.constant 0.000000e+00 : f32
    %86 = vector.broadcast %cst_36 : f32 to vector<256x1xf32>
    %87 = arith.addf %8, %86 : vector<256x1xf32>
    %cst_37 = arith.constant -1.000000e+00 : f32
    %88 = vector.broadcast %cst_37 : f32 to vector<256x1xf32>
    %89 = arith.addf %11, %88 : vector<256x1xf32>
    %cst_38 = arith.constant -5.000000e-01 : f32
    %90 = vector.broadcast %cst_38 : f32 to vector<256x1xf32>
    %91 = arith.cmpf ogt, %87, %90 : vector<256x1xf32>
    %cst_39 = arith.constant 1.550000e+01 : f32
    %92 = vector.broadcast %cst_39 : f32 to vector<256x1xf32>
    %93 = arith.cmpf olt, %87, %92 : vector<256x1xf32>
    %94 = arith.andi %91, %93 : vector<256x1xi1>
    %cst_40 = arith.constant -5.000000e-01 : f32
    %95 = vector.broadcast %cst_40 : f32 to vector<256x1xf32>
    %96 = arith.cmpf ogt, %89, %95 : vector<256x1xf32>
    %97 = arith.andi %94, %96 : vector<256x1xi1>
    %cst_41 = arith.constant 1.550000e+01 : f32
    %98 = vector.broadcast %cst_41 : f32 to vector<256x1xf32>
    %99 = arith.cmpf olt, %89, %98 : vector<256x1xf32>
    %100 = arith.andi %97, %99 : vector<256x1xi1>
    %cst_42 = arith.constant 0.000000e+00 : f32
    %101 = vector.shape_cast %100 : vector<256x1xi1> to vector<256x1xi1>
    %102 = vector.broadcast %101 : vector<256x1xi1> to vector<256x8xi1>
    %103 = vector.broadcast %cst_42 : f32 to vector<256x8xf32>
    %104 = arith.select %102, %85, %103 : vector<256x8xi1>, vector<256x8xf32>
    %c3 = arith.constant 3 : index
    %c0_43 = arith.constant 0 : index
    %c0_44 = arith.constant 0 : index
    %105 = vector.load %arg2[%c3, %c0_43, %c0_44] : memref<9x8x128xf32, #tpu.memory_space<vmem>>, vector<1x8x128xf32>
    %106 = vector.shape_cast %105 : vector<1x8x128xf32> to vector<8x128xf32>
    %cst_45 = arith.constant dense<0.000000e+00> : vector<256x128xf32>
    %107 = tpu.matmul %104, %106, %cst_45 {dimension_numbers = #tpu.dot_dimension_numbers<[1], [0], [0], [1], [0, 0, 1, 1], [], []>} : vector<256x8xf32>, vector<8x128xf32>, vector<256x128xf32> -> vector<256x128xf32>
    %108 = arith.addf %84, %107 : vector<256x128xf32>
    %cst_46 = arith.constant 0.000000e+00 : f32
    %109 = vector.broadcast %cst_46 : f32 to vector<256x1xf32>
    %110 = arith.addf %8, %109 : vector<256x1xf32>
    %cst_47 = arith.constant 0.000000e+00 : f32
    %111 = vector.broadcast %cst_47 : f32 to vector<256x1xf32>
    %112 = arith.addf %11, %111 : vector<256x1xf32>
    %cst_48 = arith.constant -5.000000e-01 : f32
    %113 = vector.broadcast %cst_48 : f32 to vector<256x1xf32>
    %114 = arith.cmpf ogt, %110, %113 : vector<256x1xf32>
    %cst_49 = arith.constant 1.550000e+01 : f32
    %115 = vector.broadcast %cst_49 : f32 to vector<256x1xf32>
    %116 = arith.cmpf olt, %110, %115 : vector<256x1xf32>
    %117 = arith.andi %114, %116 : vector<256x1xi1>
    %cst_50 = arith.constant -5.000000e-01 : f32
    %118 = vector.broadcast %cst_50 : f32 to vector<256x1xf32>
    %119 = arith.cmpf ogt, %112, %118 : vector<256x1xf32>
    %120 = arith.andi %117, %119 : vector<256x1xi1>
    %cst_51 = arith.constant 1.550000e+01 : f32
    %121 = vector.broadcast %cst_51 : f32 to vector<256x1xf32>
    %122 = arith.cmpf olt, %112, %121 : vector<256x1xf32>
    %123 = arith.andi %120, %122 : vector<256x1xi1>
    %cst_52 = arith.constant 0.000000e+00 : f32
    %124 = vector.shape_cast %123 : vector<256x1xi1> to vector<256x1xi1>
    %125 = vector.broadcast %124 : vector<256x1xi1> to vector<256x8xi1>
    %126 = vector.broadcast %cst_52 : f32 to vector<256x8xf32>
    %127 = arith.select %125, %1, %126 : vector<256x8xi1>, vector<256x8xf32>
    %c4 = arith.constant 4 : index
    %c0_53 = arith.constant 0 : index
    %c0_54 = arith.constant 0 : index
    %128 = vector.load %arg2[%c4, %c0_53, %c0_54] : memref<9x8x128xf32, #tpu.memory_space<vmem>>, vector<1x8x128xf32>
    %129 = vector.shape_cast %128 : vector<1x8x128xf32> to vector<8x128xf32>
    %cst_55 = arith.constant dense<0.000000e+00> : vector<256x128xf32>
    %130 = tpu.matmul %127, %129, %cst_55 {dimension_numbers = #tpu.dot_dimension_numbers<[1], [0], [0], [1], [0, 0, 1, 1], [], []>} : vector<256x8xf32>, vector<8x128xf32>, vector<256x128xf32> -> vector<256x128xf32>
    %131 = arith.addf %108, %130 : vector<256x128xf32>
    %c255_i32 = arith.constant 255 : i32
    %132 = tpu.dynamic_rotate %1 by %c255_i32 dim 0 : vector<256x8xf32>, i32 -> vector<256x8xf32>
    %cst_56 = arith.constant 0.000000e+00 : f32
    %133 = vector.broadcast %cst_56 : f32 to vector<256x1xf32>
    %134 = arith.addf %8, %133 : vector<256x1xf32>
    %cst_57 = arith.constant 1.000000e+00 : f32
    %135 = vector.broadcast %cst_57 : f32 to vector<256x1xf32>
    %136 = arith.addf %11, %135 : vector<256x1xf32>
    %cst_58 = arith.constant -5.000000e-01 : f32
    %137 = vector.broadcast %cst_58 : f32 to vector<256x1xf32>
    %138 = arith.cmpf ogt, %134, %137 : vector<256x1xf32>
    %cst_59 = arith.constant 1.550000e+01 : f32
    %139 = vector.broadcast %cst_59 : f32 to vector<256x1xf32>
    %140 = arith.cmpf olt, %134, %139 : vector<256x1xf32>
    %141 = arith.andi %138, %140 : vector<256x1xi1>
    %cst_60 = arith.constant -5.000000e-01 : f32
    %142 = vector.broadcast %cst_60 : f32 to vector<256x1xf32>
    %143 = arith.cmpf ogt, %136, %142 : vector<256x1xf32>
    %144 = arith.andi %141, %143 : vector<256x1xi1>
    %cst_61 = arith.constant 1.550000e+01 : f32
    %145 = vector.broadcast %cst_61 : f32 to vector<256x1xf32>
    %146 = arith.cmpf olt, %136, %145 : vector<256x1xf32>
    %147 = arith.andi %144, %146 : vector<256x1xi1>
    %cst_62 = arith.constant 0.000000e+00 : f32
    %148 = vector.shape_cast %147 : vector<256x1xi1> to vector<256x1xi1>
    %149 = vector.broadcast %148 : vector<256x1xi1> to vector<256x8xi1>
    %150 = vector.broadcast %cst_62 : f32 to vector<256x8xf32>
    %151 = arith.select %149, %132, %150 : vector<256x8xi1>, vector<256x8xf32>
    %c5 = arith.constant 5 : index
    %c0_63 = arith.constant 0 : index
    %c0_64 = arith.constant 0 : index
    %152 = vector.load %arg2[%c5, %c0_63, %c0_64] : memref<9x8x128xf32, #tpu.memory_space<vmem>>, vector<1x8x128xf32>
    %153 = vector.shape_cast %152 : vector<1x8x128xf32> to vector<8x128xf32>
    %cst_65 = arith.constant dense<0.000000e+00> : vector<256x128xf32>
    %154 = tpu.matmul %151, %153, %cst_65 {dimension_numbers = #tpu.dot_dimension_numbers<[1], [0], [0], [1], [0, 0, 1, 1], [], []>} : vector<256x8xf32>, vector<8x128xf32>, vector<256x128xf32> -> vector<256x128xf32>
    %155 = arith.addf %131, %154 : vector<256x128xf32>
    %c241_i32 = arith.constant 241 : i32
    %156 = tpu.dynamic_rotate %1 by %c241_i32 dim 0 : vector<256x8xf32>, i32 -> vector<256x8xf32>
    %cst_66 = arith.constant 1.000000e+00 : f32
    %157 = vector.broadcast %cst_66 : f32 to vector<256x1xf32>
    %158 = arith.addf %8, %157 : vector<256x1xf32>
    %cst_67 = arith.constant -1.000000e+00 : f32
    %159 = vector.broadcast %cst_67 : f32 to vector<256x1xf32>
    %160 = arith.addf %11, %159 : vector<256x1xf32>
    %cst_68 = arith.constant -5.000000e-01 : f32
    %161 = vector.broadcast %cst_68 : f32 to vector<256x1xf32>
    %162 = arith.cmpf ogt, %158, %161 : vector<256x1xf32>
    %cst_69 = arith.constant 1.550000e+01 : f32
    %163 = vector.broadcast %cst_69 : f32 to vector<256x1xf32>
    %164 = arith.cmpf olt, %158, %163 : vector<256x1xf32>
    %165 = arith.andi %162, %164 : vector<256x1xi1>
    %cst_70 = arith.constant -5.000000e-01 : f32
    %166 = vector.broadcast %cst_70 : f32 to vector<256x1xf32>
    %167 = arith.cmpf ogt, %160, %166 : vector<256x1xf32>
    %168 = arith.andi %165, %167 : vector<256x1xi1>
    %cst_71 = arith.constant 1.550000e+01 : f32
    %169 = vector.broadcast %cst_71 : f32 to vector<256x1xf32>
    %170 = arith.cmpf olt, %160, %169 : vector<256x1xf32>
    %171 = arith.andi %168, %170 : vector<256x1xi1>
    %cst_72 = arith.constant 0.000000e+00 : f32
    %172 = vector.shape_cast %171 : vector<256x1xi1> to vector<256x1xi1>
    %173 = vector.broadcast %172 : vector<256x1xi1> to vector<256x8xi1>
    %174 = vector.broadcast %cst_72 : f32 to vector<256x8xf32>
    %175 = arith.select %173, %156, %174 : vector<256x8xi1>, vector<256x8xf32>
    %c6 = arith.constant 6 : index
    %c0_73 = arith.constant 0 : index
    %c0_74 = arith.constant 0 : index
    %176 = vector.load %arg2[%c6, %c0_73, %c0_74] : memref<9x8x128xf32, #tpu.memory_space<vmem>>, vector<1x8x128xf32>
    %177 = vector.shape_cast %176 : vector<1x8x128xf32> to vector<8x128xf32>
    %cst_75 = arith.constant dense<0.000000e+00> : vector<256x128xf32>
    %178 = tpu.matmul %175, %177, %cst_75 {dimension_numbers = #tpu.dot_dimension_numbers<[1], [0], [0], [1], [0, 0, 1, 1], [], []>} : vector<256x8xf32>, vector<8x128xf32>, vector<256x128xf32> -> vector<256x128xf32>
    %179 = arith.addf %155, %178 : vector<256x128xf32>
    %c240_i32 = arith.constant 240 : i32
    %180 = tpu.dynamic_rotate %1 by %c240_i32 dim 0 : vector<256x8xf32>, i32 -> vector<256x8xf32>
    %cst_76 = arith.constant 1.000000e+00 : f32
    %181 = vector.broadcast %cst_76 : f32 to vector<256x1xf32>
    %182 = arith.addf %8, %181 : vector<256x1xf32>
    %cst_77 = arith.constant 0.000000e+00 : f32
    %183 = vector.broadcast %cst_77 : f32 to vector<256x1xf32>
    %184 = arith.addf %11, %183 : vector<256x1xf32>
    %cst_78 = arith.constant -5.000000e-01 : f32
    %185 = vector.broadcast %cst_78 : f32 to vector<256x1xf32>
    %186 = arith.cmpf ogt, %182, %185 : vector<256x1xf32>
    %cst_79 = arith.constant 1.550000e+01 : f32
    %187 = vector.broadcast %cst_79 : f32 to vector<256x1xf32>
    %188 = arith.cmpf olt, %182, %187 : vector<256x1xf32>
    %189 = arith.andi %186, %188 : vector<256x1xi1>
    %cst_80 = arith.constant -5.000000e-01 : f32
    %190 = vector.broadcast %cst_80 : f32 to vector<256x1xf32>
    %191 = arith.cmpf ogt, %184, %190 : vector<256x1xf32>
    %192 = arith.andi %189, %191 : vector<256x1xi1>
    %cst_81 = arith.constant 1.550000e+01 : f32
    %193 = vector.broadcast %cst_81 : f32 to vector<256x1xf32>
    %194 = arith.cmpf olt, %184, %193 : vector<256x1xf32>
    %195 = arith.andi %192, %194 : vector<256x1xi1>
    %cst_82 = arith.constant 0.000000e+00 : f32
    %196 = vector.shape_cast %195 : vector<256x1xi1> to vector<256x1xi1>
    %197 = vector.broadcast %196 : vector<256x1xi1> to vector<256x8xi1>
    %198 = vector.broadcast %cst_82 : f32 to vector<256x8xf32>
    %199 = arith.select %197, %180, %198 : vector<256x8xi1>, vector<256x8xf32>
    %c7 = arith.constant 7 : index
    %c0_83 = arith.constant 0 : index
    %c0_84 = arith.constant 0 : index
    %200 = vector.load %arg2[%c7, %c0_83, %c0_84] : memref<9x8x128xf32, #tpu.memory_space<vmem>>, vector<1x8x128xf32>
    %201 = vector.shape_cast %200 : vector<1x8x128xf32> to vector<8x128xf32>
    %cst_85 = arith.constant dense<0.000000e+00> : vector<256x128xf32>
    %202 = tpu.matmul %199, %201, %cst_85 {dimension_numbers = #tpu.dot_dimension_numbers<[1], [0], [0], [1], [0, 0, 1, 1], [], []>} : vector<256x8xf32>, vector<8x128xf32>, vector<256x128xf32> -> vector<256x128xf32>
    %203 = arith.addf %179, %202 : vector<256x128xf32>
    %c239_i32 = arith.constant 239 : i32
    %204 = tpu.dynamic_rotate %1 by %c239_i32 dim 0 : vector<256x8xf32>, i32 -> vector<256x8xf32>
    %cst_86 = arith.constant 1.000000e+00 : f32
    %205 = vector.broadcast %cst_86 : f32 to vector<256x1xf32>
    %206 = arith.addf %8, %205 : vector<256x1xf32>
    %cst_87 = arith.constant 1.000000e+00 : f32
    %207 = vector.broadcast %cst_87 : f32 to vector<256x1xf32>
    %208 = arith.addf %11, %207 : vector<256x1xf32>
    %cst_88 = arith.constant -5.000000e-01 : f32
    %209 = vector.broadcast %cst_88 : f32 to vector<256x1xf32>
    %210 = arith.cmpf ogt, %206, %209 : vector<256x1xf32>
    %cst_89 = arith.constant 1.550000e+01 : f32
    %211 = vector.broadcast %cst_89 : f32 to vector<256x1xf32>
    %212 = arith.cmpf olt, %206, %211 : vector<256x1xf32>
    %213 = arith.andi %210, %212 : vector<256x1xi1>
    %cst_90 = arith.constant -5.000000e-01 : f32
    %214 = vector.broadcast %cst_90 : f32 to vector<256x1xf32>
    %215 = arith.cmpf ogt, %208, %214 : vector<256x1xf32>
    %216 = arith.andi %213, %215 : vector<256x1xi1>
    %cst_91 = arith.constant 1.550000e+01 : f32
    %217 = vector.broadcast %cst_91 : f32 to vector<256x1xf32>
    %218 = arith.cmpf olt, %208, %217 : vector<256x1xf32>
    %219 = arith.andi %216, %218 : vector<256x1xi1>
    %cst_92 = arith.constant 0.000000e+00 : f32
    %220 = vector.shape_cast %219 : vector<256x1xi1> to vector<256x1xi1>
    %221 = vector.broadcast %220 : vector<256x1xi1> to vector<256x8xi1>
    %222 = vector.broadcast %cst_92 : f32 to vector<256x8xf32>
    %223 = arith.select %221, %204, %222 : vector<256x8xi1>, vector<256x8xf32>
    %c8 = arith.constant 8 : index
    %c0_93 = arith.constant 0 : index
    %c0_94 = arith.constant 0 : index
    %224 = vector.load %arg2[%c8, %c0_93, %c0_94] : memref<9x8x128xf32, #tpu.memory_space<vmem>>, vector<1x8x128xf32>
    %225 = vector.shape_cast %224 : vector<1x8x128xf32> to vector<8x128xf32>
    %cst_95 = arith.constant dense<0.000000e+00> : vector<256x128xf32>
    %226 = tpu.matmul %223, %225, %cst_95 {dimension_numbers = #tpu.dot_dimension_numbers<[1], [0], [0], [1], [0, 0, 1, 1], [], []>} : vector<256x8xf32>, vector<8x128xf32>, vector<256x128xf32> -> vector<256x128xf32>
    %227 = arith.addf %203, %226 : vector<256x128xf32>
    %c0_96 = arith.constant 0 : index
    %c0_97 = arith.constant 0 : index
    %228 = vector.load %arg3[%c0_96, %c0_97] : memref<1x128xf32, #tpu.memory_space<vmem>>, vector<1x128xf32>
    %229 = vector.broadcast %228 : vector<1x128xf32> to vector<256x128xf32>
    %230 = arith.addf %227, %229 : vector<256x128xf32>
    %cst_98 = arith.constant 0.000000e+00 : f32
    %231 = vector.broadcast %cst_98 : f32 to vector<256x128xf32>
    %232 = arith.maximumf %230, %231 : vector<256x128xf32>
    %233 = arith.truncf %232 : vector<256x128xf32> to vector<256x128xbf16>
    %c0_99 = arith.constant 0 : index
    %c0_100 = arith.constant 0 : index
    %234 = vector.load %arg5[%c0_99, %c0_100] : memref<128x128xbf16, #tpu.memory_space<vmem>>, vector<128x128xbf16>
    %cst_101 = arith.constant dense<0.000000e+00> : vector<256x128xf32>
    %235 = tpu.matmul %233, %234, %cst_101 {dimension_numbers = #tpu.dot_dimension_numbers<[1], [0], [0], [1], [0, 0, 1, 1], [], []>} : vector<256x128xbf16>, vector<128x128xbf16>, vector<256x128xf32> -> vector<256x128xf32>
    %c0_102 = arith.constant 0 : index
    %c0_103 = arith.constant 0 : index
    %236 = vector.load %arg6[%c0_102, %c0_103] : memref<128x128xbf16, #tpu.memory_space<vmem>>, vector<128x128xbf16>
    %cst_104 = arith.constant dense<0.000000e+00> : vector<256x128xf32>
    %237 = tpu.matmul %233, %236, %cst_104 {dimension_numbers = #tpu.dot_dimension_numbers<[1], [0], [0], [1], [0, 0, 1, 1], [], []>} : vector<256x128xbf16>, vector<128x128xbf16>, vector<256x128xf32> -> vector<256x128xf32>
    %c0_105 = arith.constant 0 : index
    %c0_106 = arith.constant 0 : index
    %238 = vector.load %arg4[%c0_105, %c0_106] : memref<16x128xbf16, #tpu.memory_space<vmem>>, vector<16x128xbf16>
    %239 = arith.truncf %235 : vector<256x128xf32> to vector<256x128xbf16>
    %cst_107 = arith.constant dense<0.000000e+00> : vector<16x256xf32>
    %240 = tpu.matmul %238, %239, %cst_107 {dimension_numbers = #tpu.dot_dimension_numbers<[1], [1], [0], [0], [0, 0, 1, 0], [], []>} : vector<16x128xbf16>, vector<256x128xbf16>, vector<16x256xf32> -> vector<16x256xf32>
    %cst_108 = arith.constant dense<0xFF800000> : vector<16xf32>
    %241 = vector.multi_reduction <maximumf>, %240, %cst_108 [1] : vector<16x256xf32> to vector<16xf32>
    %242 = vector.shape_cast %241 : vector<16xf32> to vector<16x1xf32>
    %243 = vector.broadcast %242 : vector<16x1xf32> to vector<16x256xf32>
    %244 = arith.subf %240, %243 : vector<16x256xf32>
    %245 = math.exp %244 : vector<16x256xf32>
    %cst_109 = arith.constant dense<0.000000e+00> : vector<16xf32>
    %246 = vector.multi_reduction <add>, %245, %cst_109 [1] : vector<16x256xf32> to vector<16xf32>
    %247 = vector.shape_cast %246 : vector<16xf32> to vector<16x1xf32>
    %248 = tpu.reciprocal %247 {approx = true} : vector<16x1xf32> -> vector<16x1xf32>
    %249 = vector.broadcast %248 : vector<16x1xf32> to vector<16x256xf32>
    %250 = arith.mulf %245, %249 : vector<16x256xf32>
    %251 = arith.truncf %250 : vector<16x256xf32> to vector<16x256xbf16>
    %252 = arith.truncf %237 : vector<256x128xf32> to vector<256x128xbf16>
    %cst_110 = arith.constant dense<0.000000e+00> : vector<16x128xf32>
    %253 = tpu.matmul %251, %252, %cst_110 {dimension_numbers = #tpu.dot_dimension_numbers<[1], [0], [0], [1], [0, 0, 1, 1], [], []>} : vector<16x256xbf16>, vector<256x128xbf16>, vector<16x128xf32> -> vector<16x128xf32>
    %254 = arith.truncf %253 : vector<16x128xf32> to vector<16x128xbf16>
    %c0_111 = arith.constant 0 : index
    %c0_112 = arith.constant 0 : index
    %255 = vector.load %arg7[%c0_111, %c0_112] : memref<128x128xbf16, #tpu.memory_space<vmem>>, vector<128x128xbf16>
    %cst_113 = arith.constant dense<0.000000e+00> : vector<16x128xf32>
    %256 = tpu.matmul %254, %255, %cst_113 {dimension_numbers = #tpu.dot_dimension_numbers<[1], [0], [0], [1], [0, 0, 1, 1], [], []>} : vector<16x128xbf16>, vector<128x128xbf16>, vector<16x128xf32> -> vector<16x128xf32>
    %c0_114 = arith.constant 0 : index
    %c0_115 = arith.constant 0 : index
    %257 = vector.load %arg8[%c0_114, %c0_115] : memref<1x128xf32, #tpu.memory_space<vmem>>, vector<1x128xf32>
    %258 = vector.broadcast %257 : vector<1x128xf32> to vector<16x128xf32>
    %259 = arith.addf %256, %258 : vector<16x128xf32>
    %cst_116 = arith.constant 0.000000e+00 : f32
    %260 = vector.broadcast %cst_116 : f32 to vector<16x128xf32>
    %261 = arith.maximumf %259, %260 : vector<16x128xf32>
    %262 = arith.truncf %261 : vector<16x128xf32> to vector<16x128xbf16>
    %c0_117 = arith.constant 0 : index
    %c0_118 = arith.constant 0 : index
    %263 = vector.load %arg9[%c0_117, %c0_118] : memref<128x128xbf16, #tpu.memory_space<vmem>>, vector<128x128xbf16>
    %cst_119 = arith.constant dense<0.000000e+00> : vector<16x128xf32>
    %264 = tpu.matmul %262, %263, %cst_119 {dimension_numbers = #tpu.dot_dimension_numbers<[1], [0], [0], [1], [0, 0, 1, 1], [], []>} : vector<16x128xbf16>, vector<128x128xbf16>, vector<16x128xf32> -> vector<16x128xf32>
    %c0_120 = arith.constant 0 : index
    %c0_121 = arith.constant 0 : index
    %265 = vector.load %arg10[%c0_120, %c0_121] : memref<1x128xf32, #tpu.memory_space<vmem>>, vector<1x128xf32>
    %266 = vector.broadcast %265 : vector<1x128xf32> to vector<16x128xf32>
    %267 = arith.addf %264, %266 : vector<16x128xf32>
    %c0_122 = arith.constant 0 : index
    %c0_123 = arith.constant 0 : index
    %c0_124 = arith.constant 0 : index
    %268 = vector.load %arg11[%c0_122, %c0_123, %c0_124] : memref<1x16x128xf32, #tpu.memory_space<vmem>>, vector<1x16x128xf32>
    %269 = vector.shape_cast %268 : vector<1x16x128xf32> to vector<16x128xf32>
    %270 = vector.shape_cast %267 : vector<16x128xf32> to vector<1x16x128xf32>
    tpu.vector_store %arg11[%c0_122, %c0_123, %c0_124], %270 {strides = array<i32>} : memref<1x16x128xf32, #tpu.memory_space<vmem>>, vector<1x16x128xf32>,
    return
  }
  func.func @transform_0(%arg0: i32) -> (i32, i32, i32) {
    %c0_i32 = arith.constant 0 : i32
    %c0_i32_0 = arith.constant 0 : i32
    %c0_i32_1 = arith.constant 0 : i32
    return %arg0, %c0_i32, %c0_i32_0 : i32, i32, i32
  }
  func.func @transform_1(%arg0: i32) -> (i32, i32, i32) {
    %c0_i32 = arith.constant 0 : i32
    %c0_i32_0 = arith.constant 0 : i32
    %c0_i32_1 = arith.constant 0 : i32
    %c0_i32_2 = arith.constant 0 : i32
    return %c0_i32, %c0_i32_0, %c0_i32_1 : i32, i32, i32
  }
  func.func @transform_2(%arg0: i32) -> (i32, i32) {
    %c0_i32 = arith.constant 0 : i32
    %c0_i32_0 = arith.constant 0 : i32
    %c0_i32_1 = arith.constant 0 : i32
    return %c0_i32, %c0_i32_0 : i32, i32
  }
  func.func @transform_3(%arg0: i32) -> (i32, i32) {
    %c0_i32 = arith.constant 0 : i32
    %c0_i32_0 = arith.constant 0 : i32
    %c0_i32_1 = arith.constant 0 : i32
    return %c0_i32, %c0_i32_0 : i32, i32
  }
  func.func @transform_4(%arg0: i32) -> (i32, i32) {
    %c0_i32 = arith.constant 0 : i32
    %c0_i32_0 = arith.constant 0 : i32
    %c0_i32_1 = arith.constant 0 : i32
    return %c0_i32, %c0_i32_0 : i32, i32
  }
  func.func @transform_5(%arg0: i32) -> (i32, i32) {
    %c0_i32 = arith.constant 0 : i32
    %c0_i32_0 = arith.constant 0 : i32
    %c0_i32_1 = arith.constant 0 : i32
    return %c0_i32, %c0_i32_0 : i32, i32
  }
  func.func @transform_6(%arg0: i32) -> (i32, i32) {
    %c0_i32 = arith.constant 0 : i32
    %c0_i32_0 = arith.constant 0 : i32
    %c0_i32_1 = arith.constant 0 : i32
    return %c0_i32, %c0_i32_0 : i32, i32
  }
  func.func @transform_7(%arg0: i32) -> (i32, i32) {
    %c0_i32 = arith.constant 0 : i32
    %c0_i32_0 = arith.constant 0 : i32
    %c0_i32_1 = arith.constant 0 : i32
    return %c0_i32, %c0_i32_0 : i32, i32
  }
  func.func @transform_8(%arg0: i32) -> (i32, i32) {
    %c0_i32 = arith.constant 0 : i32
    %c0_i32_0 = arith.constant 0 : i32
    %c0_i32_1 = arith.constant 0 : i32
    return %c0_i32, %c0_i32_0 : i32, i32
  }
  func.func @transform_9(%arg0: i32) -> (i32, i32) {
    %c0_i32 = arith.constant 0 : i32
    %c0_i32_0 = arith.constant 0 : i32
    %c0_i32_1 = arith.constant 0 : i32
    return %c0_i32, %c0_i32_0 : i32, i32
  }
  func.func @transform_10(%arg0: i32) -> (i32, i32, i32) {
    %c0_i32 = arith.constant 0 : i32
    %c0_i32_0 = arith.constant 0 : i32
    %c0_i32_1 = arith.constant 0 : i32
    return %arg0, %c0_i32, %c0_i32_0 : i32, i32, i32
  }
}

</mosaic_0001>

<llo_original>
// kernel: simrel_rcnn_forward.1
$region0: #{simrel_rcnn_forward.1}
  #allocation0 [shape = 'u32[]', space=smem, size = 0x4, offset = 0x4, fixed_abs, tag = 'smem constant byte address 0x4 - core index']
  #allocation1 [shape = 'u32[72,128]{1,0:T(1,128)}', space=vmem, size = 0x9000, scoped, tag = 'internal scratch']
  %s0 = inlined_call_operand.vmem [shape: f32[2,256,8], index: 0, kind: input, shape index: {}]
  %s1 = inlined_call_operand.vmem [shape: f32[9,8,128], index: 1, kind: input, shape index: {}]
  %s2 = inlined_call_operand.vmem [shape: f32[1,128], index: 2, kind: input, shape index: {}]
  %s3 = inlined_call_operand.vmem [shape: bf16[16,128], index: 3, kind: input, shape index: {}]
  %s4 = inlined_call_operand.vmem [shape: bf16[128,128], index: 4, kind: input, shape index: {}]
  %s5 = inlined_call_operand.vmem [shape: bf16[128,128], index: 5, kind: input, shape index: {}]
  %s6 = inlined_call_operand.vmem [shape: bf16[128,128], index: 6, kind: input, shape index: {}]
  %s7 = inlined_call_operand.vmem [shape: f32[1,128], index: 7, kind: input, shape index: {}]
  %s8 = inlined_call_operand.vmem [shape: bf16[128,128], index: 8, kind: input, shape index: {}]
  %s9 = inlined_call_operand.vmem [shape: f32[1,128], index: 9, kind: input, shape index: {}]
  %s10 = inlined_call_operand.vmem [shape: f32[2,16,128], index: 10, kind: output, shape index: {}]
  %s11 = sld [smem:[#allocation0]]
  $region73: #{simrel_rcnn_forward.1} parent=0
    _
  %s13 = ssub.s32 1, %s11
  %s14 = scalar_select 0, %s13, %s11
  loop: start=0, step=1, limit=4
  $region2: #{simrel_rcnn_forward.1} parent=0 // loop_pre_header
    _
  $region3: #{simrel_rcnn_forward.1} parent=0 // loop_header
    %s16 = sphi 0, %s20
    %p17 = scmp.ge.s32.totalorder %s16, 4
    %s26 = sphi 0, %s28
    %s29 = sphi 0, %s26
    %s30 = sphi 0, %s29
    %s46 = sphi 0, %s30
    %s50 = sphi 0, %s50
    %s52 = sphi 0, %s50
    %s53 = sphi 0, %s52
    %s67 = sphi 0, %s53
    %s71 = sphi 0, %s71
    %s73 = sphi 0, %s71
    %s74 = sphi 0, %s73
    %s88 = sphi 0, %s74
    %s92 = sphi 0, %s92
    %s94 = sphi 0, %s92
    %s95 = sphi 0, %s94
    %s109 = sphi 0, %s95
    %s113 = sphi 0, %s113
    %s115 = sphi 0, %s113
    %s116 = sphi 0, %s115
    %s130 = sphi 0, %s116
    %s134 = sphi 0, %s134
    %s136 = sphi 0, %s134
    %s137 = sphi 0, %s136
    %s151 = sphi 0, %s137
    %s155 = sphi 0, %s155
    %s157 = sphi 0, %s155
    %s158 = sphi 0, %s157
    %s172 = sphi 0, %s158
    %s176 = sphi 0, %s176
    %s178 = sphi 0, %s176
    %s179 = sphi 0, %s178
    %s193 = sphi 0, %s179
    %s197 = sphi 0, %s197
    %s199 = sphi 0, %s197
    %s200 = sphi 0, %s199
    %s214 = sphi 0, %s200
    %s218 = sphi 0, %s218
    %s220 = sphi 0, %s218
    %s221 = sphi 0, %s220
    %s235 = sphi 0, %s221
    %s241 = sphi 0, %s243
    %s244 = sphi 0, %s241
    %s245 = sphi 0, %s244
    %s261 = sphi 0, %s245
  $region4: #{simrel_rcnn_forward.1} parent=0 // loop_header_branch
    %19 = sbr.rel (%p17) target = $region8
  $region5: #{simrel_rcnn_forward.1} parent=0 // loop_body
    %s21 = ssub.s32 %s16, 1
    %s22 = ssub.s32 %s16, 2
    %s23 = sadd.s32 %s16, 1
    %s24 = ssub.s32 %s16, %s23
    %p25 = scmp.eq.s32.totalorder %s24, 0
    %s27 = sadd.s32 %s26, 1
    %s28 = scalar_select %p25, %s26, %s27
    %p31 = pneg %p25
    %p32 = scmp.eq.s32.totalorder %s16, 1
    %p33 = por %p31, %p32
    %p34 = scmp.ne.s32.totalorder %s26, %s29
    %p35 = scmp.eq.s32.totalorder %s16, 0
    %p36 = por %p34, %p35
    %p37 = scmp.ne.s32.totalorder %s26, %s29
    %p38 = scmp.eq.s32.totalorder %s21, 1
    %p39 = por %p37, %p38
    %p40 = scmp.ne.s32.totalorder %s29, %s30
    %p41 = scmp.eq.s32.totalorder %s21, 0
    %p42 = por %p40, %p41
    %p43 = scmp.ne.s32.totalorder %s29, %s30
    %p44 = scmp.eq.s32.totalorder %s22, 1
    %p45 = por %p43, %p44
    %p47 = scmp.ne.s32.totalorder %s30, %s46
    %p48 = scmp.eq.s32.totalorder %s22, 0
    %p49 = por %p47, %p48
    %s51 = sadd.s32 %s50, 1
    %p54 = scmp.eq.s32.totalorder %s16, 1
    %p55 = scmp.ne.s32.totalorder %s50, %s52
    %p56 = scmp.eq.s32.totalorder %s16, 0
    %p57 = por %p55, %p56
    %p58 = scmp.ne.s32.totalorder %s50, %s52
    %p59 = scmp.eq.s32.totalorder %s21, 1
    %p60 = por %p58, %p59
    %p61 = scmp.ne.s32.totalorder %s52, %s53
    %p62 = scmp.eq.s32.totalorder %s21, 0
    %p63 = por %p61, %p62
    %p64 = scmp.ne.s32.totalorder %s52, %s53
    %p65 = scmp.eq.s32.totalorder %s22, 1
    %p66 = por %p64, %p65
    %p68 = scmp.ne.s32.totalorder %s53, %s67
    %p69 = scmp.eq.s32.totalorder %s22, 0
    %p70 = por %p68, %p69
    %s72 = sadd.s32 %s71, 1
    %p75 = scmp.eq.s32.totalorder %s16, 1
    %p76 = scmp.ne.s32.totalorder %s71, %s73
    %p77 = scmp.eq.s32.totalorder %s16, 0
    %p78 = por %p76, %p77
    %p79 = scmp.ne.s32.totalorder %s71, %s73
    %p80 = scmp.eq.s32.totalorder %s21, 1
    %p81 = por %p79, %p80
    %p82 = scmp.ne.s32.totalorder %s73, %s74
    %p83 = scmp.eq.s32.totalorder %s21, 0
    %p84 = por %p82, %p83
    %p85 = scmp.ne.s32.totalorder %s73, %s74
    %p86 = scmp.eq.s32.totalorder %s22, 1
    %p87 = por %p85, %p86
    %p89 = scmp.ne.s32.totalorder %s74, %s88
    %p90 = scmp.eq.s32.totalorder %s22, 0
    %p91 = por %p89, %p90
    %s93 = sadd.s32 %s92, 1
    %p96 = scmp.eq.s32.totalorder %s16, 1
    %p97 = scmp.ne.s32.totalorder %s92, %s94
    %p98 = scmp.eq.s32.totalorder %s16, 0
    %p99 = por %p97, %p98
    %p100 = scmp.ne.s32.totalorder %s92, %s94
    %p101 = scmp.eq.s32.totalorder %s21, 1
    %p102 = por %p100, %p101
    %p103 = scmp.ne.s32.totalorder %s94, %s95
    %p104 = scmp.eq.s32.totalorder %s21, 0
    %p105 = por %p103, %p104
    %p106 = scmp.ne.s32.totalorder %s94, %s95
    %p107 = scmp.eq.s32.totalorder %s22, 1
    %p108 = por %p106, %p107
    %p110 = scmp.ne.s32.totalorder %s95, %s109
    %p111 = scmp.eq.s32.totalorder %s22, 0
    %p112 = por %p110, %p111
    %s114 = sadd.s32 %s113, 1
    %p117 = scmp.eq.s32.totalorder %s16, 1
    %p118 = scmp.ne.s32.totalorder %s113, %s115
    %p119 = scmp.eq.s32.totalorder %s16, 0
    %p120 = por %p118, %p119
    %p121 = scmp.ne.s32.totalorder %s113, %s115
    %p122 = scmp.eq.s32.totalorder %s21, 1
    %p123 = por %p121, %p122
    %p124 = scmp.ne.s32.totalorder %s115, %s116
    %p125 = scmp.eq.s32.totalorder %s21, 0
    %p126 = por %p124, %p125
    %p127 = scmp.ne.s32.totalorder %s115, %s116
    %p128 = scmp.eq.s32.totalorder %s22, 1
    %p129 = por %p127, %p128
    %p131 = scmp.ne.s32.totalorder %s116, %s130
    %p132 = scmp.eq.s32.totalorder %s22, 0
    %p133 = por %p131, %p132
    %s135 = sadd.s32 %s134, 1
    %p138 = scmp.eq.s32.totalorder %s16, 1
    %p139 = scmp.ne.s32.totalorder %s134, %s136
    %p140 = scmp.eq.s32.totalorder %s16, 0
    %p141 = por %p139, %p140
    %p142 = scmp.ne.s32.totalorder %s134, %s136
    %p143 = scmp.eq.s32.totalorder %s21, 1
    %p144 = por %p142, %p143
    %p145 = scmp.ne.s32.totalorder %s136, %s137
    %p146 = scmp.eq.s32.totalorder %s21, 0
    %p147 = por %p145, %p146
    %p148 = scmp.ne.s32.totalorder %s136, %s137
    %p149 = scmp.eq.s32.totalorder %s22, 1
    %p150 = por %p148, %p149
    %p152 = scmp.ne.s32.totalorder %s137, %s151
    %p153 = scmp.eq.s32.totalorder %s22, 0
    %p154 = por %p152, %p153
    %s156 = sadd.s32 %s155, 1
    %p159 = scmp.eq.s32.totalorder %s16, 1
    %p160 = scmp.ne.s32.totalorder %s155, %s157
    %p161 = scmp.eq.s32.totalorder %s16, 0
    %p162 = por %p160, %p161
    %p163 = scmp.ne.s32.totalorder %s155, %s157
    %p164 = scmp.eq.s32.totalorder %s21, 1
    %p165 = por %p163, %p164
    %p166 = scmp.ne.s32.totalorder %s157, %s158
    %p167 = scmp.eq.s32.totalorder %s21, 0
    %p168 = por %p166, %p167
    %p169 = scmp.ne.s32.totalorder %s157, %s158
    %p170 = scmp.eq.s32.totalorder %s22, 1
    %p171 = por %p169, %p170
    %p173 = scmp.ne.s32.totalorder %s158, %s172
    %p174 = scmp.eq.s32.totalorder %s22, 0
    %p175 = por %p173, %p174
    %s177 = sadd.s32 %s176, 1
    %p180 = scmp.eq.s32.totalorder %s16, 1
    %p181 = scmp.ne.s32.totalorder %s176, %s178
    %p182 = scmp.eq.s32.totalorder %s16, 0
    %p183 = por %p181, %p182
    %p184 = scmp.ne.s32.totalorder %s176, %s178
    %p185 = scmp.eq.s32.totalorder %s21, 1
    %p186 = por %p184, %p185
    %p187 = scmp.ne.s32.totalorder %s178, %s179
    %p188 = scmp.eq.s32.totalorder %s21, 0
    %p189 = por %p187, %p188
    %p190 = scmp.ne.s32.totalorder %s178, %s179
    %p191 = scmp.eq.s32.totalorder %s22, 1
    %p192 = por %p190, %p191
    %p194 = scmp.ne.s32.totalorder %s179, %s193
    %p195 = scmp.eq.s32.totalorder %s22, 0
    %p196 = por %p194, %p195
    %s198 = sadd.s32 %s197, 1
    %p201 = scmp.eq.s32.totalorder %s16, 1
    %p202 = scmp.ne.s32.totalorder %s197, %s199
    %p203 = scmp.eq.s32.totalorder %s16, 0
    %p204 = por %p202, %p203
    %p205 = scmp.ne.s32.totalorder %s197, %s199
    %p206 = scmp.eq.s32.totalorder %s21, 1
    %p207 = por %p205, %p206
    %p208 = scmp.ne.s32.totalorder %s199, %s200
    %p209 = scmp.eq.s32.totalorder %s21, 0
    %p210 = por %p208, %p209
    %p211 = scmp.ne.s32.totalorder %s199, %s200
    %p212 = scmp.eq.s32.totalorder %s22, 1
    %p213 = por %p211, %p212
    %p215 = scmp.ne.s32.totalorder %s200, %s214
    %p216 = scmp.eq.s32.totalorder %s22, 0
    %p217 = por %p215, %p216
    %s219 = sadd.s32 %s218, 1
    %p222 = scmp.eq.s32.totalorder %s16, 1
    %p223 = scmp.ne.s32.totalorder %s218, %s220
    %p224 = scmp.eq.s32.totalorder %s16, 0
    %p225 = por %p223, %p224
    %p226 = scmp.ne.s32.totalorder %s218, %s220
    %p227 = scmp.eq.s32.totalorder %s21, 1
    %p228 = por %p226, %p227
    %p229 = scmp.ne.s32.totalorder %s220, %s221
    %p230 = scmp.eq.s32.totalorder %s21, 0
    %p231 = por %p229, %p230
    %p232 = scmp.ne.s32.totalorder %s220, %s221
    %p233 = scmp.eq.s32.totalorder %s22, 1
    %p234 = por %p232, %p233
    %p236 = scmp.ne.s32.totalorder %s221, %s235
    %p237 = scmp.eq.s32.totalorder %s22, 0
    %p238 = por %p236, %p237
    %s239 = ssub.s32 %s16, %s23
    %p240 = scmp.eq.s32.totalorder %s239, 0
    %s242 = sadd.s32 %s241, 1
    %s243 = scalar_select %p240, %s241, %s242
    %p246 = pneg %p240
    %p247 = scmp.eq.s32.totalorder %s16, 1
    %p248 = por %p246, %p247
    %p249 = scmp.ne.s32.totalorder %s241, %s244
    %p250 = scmp.eq.s32.totalorder %s16, 0
    %p251 = por %p249, %p250
    %p252 = scmp.ne.s32.totalorder %s241, %s244
    %p253 = scmp.eq.s32.totalorder %s21, 1
    %p254 = por %p252, %p253
    %p255 = scmp.ne.s32.totalorder %s244, %s245
    %p256 = scmp.eq.s32.totalorder %s21, 0
    %p257 = por %p255, %p256
    %p258 = scmp.ne.s32.totalorder %s244, %s245
    %p259 = scmp.eq.s32.totalorder %s22, 1
    %p260 = por %p258, %p259
    %p262 = scmp.ne.s32.totalorder %s245, %s261
    %p263 = scmp.eq.s32.totalorder %s22, 0
    %p264 = por %p262, %p263
    %p265 = scmp.le.s32.totalorder 1, %s16
    %p266 = scmp.lt.s32.totalorder %s16, 3
    %p267 = pnand %p265, %p266
    %p268 = pneg %p267
    // Predicated region
    $region9: #{simrel_rcnn_forward.1} parent=5 // pred_check
      _
    $region10: #{simrel_rcnn_forward.1} parent=5 // pred_check_branch
      %270 = sbr.rel (%p267) target = $region12
    $region11: #{simrel_rcnn_forward.1} parent=5 // pred_region
      %s271 = ssub.s32 %s16, 1
      // Predicated region
      $region13: #{simrel_rcnn_forward.1} parent=11 // pred_check
        %p272 = pneg %p63
      $region14: #{simrel_rcnn_forward.1} parent=11 // pred_check_branch
        %274 = sbr.rel (%p272) target = $region16
      $region15: #{simrel_rcnn_forward.1} parent=11 // pred_region
        _
      $region16: #{simrel_rcnn_forward.1} parent=11 // pred_fallthru
        _
      // Predicated region
      $region17: #{simrel_rcnn_forward.1} parent=11 // pred_check
        %p275 = pneg %p84
      $region18: #{simrel_rcnn_forward.1} parent=11 // pred_check_branch
        %277 = sbr.rel (%p275) target = $region20
      $region19: #{simrel_rcnn_forward.1} parent=11 // pred_region
        _
      $region20: #{simrel_rcnn_forward.1} parent=11 // pred_fallthru
        _
      // Predicated region
      $region21: #{simrel_rcnn_forward.1} parent=11 // pred_check
        %p278 = pneg %p105
      $region22: #{simrel_rcnn_forward.1} parent=11 // pred_check_branch
        %280 = sbr.rel (%p278) target = $region24
      $region23: #{simrel_rcnn_forward.1} parent=11 // pred_region
        _
      $region24: #{simrel_rcnn_forward.1} parent=11 // pred_fallthru
        _
      // Predicated region
      $region25: #{simrel_rcnn_forward.1} parent=11 // pred_check
        %p281 = pneg %p126
      $region26: #{simrel_rcnn_forward.1} parent=11 // pred_check_branch
        %283 = sbr.rel (%p281) target = $region28
      $region27: #{simrel_rcnn_forward.1} parent=11 // pred_region
        _
      $region28: #{simrel_rcnn_forward.1} parent=11 // pred_fallthru
        _
      // Predicated region
      $region29: #{simrel_rcnn_forward.1} parent=11 // pred_check
        %p284 = pneg %p147
      $region30: #{simrel_rcnn_forward.1} parent=11 // pred_check_branch
        %286 = sbr.rel (%p284) target = $region32
      $region31: #{simrel_rcnn_forward.1} parent=11 // pred_region
        _
      $region32: #{simrel_rcnn_forward.1} parent=11 // pred_fallthru
        _
      // Predicated region
      $region33: #{simrel_rcnn_forward.1} parent=11 // pred_check
        %p287 = pneg %p168
      $region34: #{simrel_rcnn_forward.1} parent=11 // pred_check_branch
        %289 = sbr.rel (%p287) target = $region36
      $region35: #{simrel_rcnn_forward.1} parent=11 // pred_region
        _
      $region36: #{simrel_rcnn_forward.1} parent=11 // pred_fallthru
        _
      // Predicated region
      $region37: #{simrel_rcnn_forward.1} parent=11 // pred_check
        %p290 = pneg %p189
      $region38: #{simrel_rcnn_forward.1} parent=11 // pred_check_branch
        %292 = sbr.rel (%p290) target = $region40
      $region39: #{simrel_rcnn_forward.1} parent=11 // pred_region
        _
      $region40: #{simrel_rcnn_forward.1} parent=11 // pred_fallthru
        _
      // Predicated region
      $region41: #{simrel_rcnn_forward.1} parent=11 // pred_check
        %p293 = pneg %p210
      $region42: #{simrel_rcnn_forward.1} parent=11 // pred_check_branch
        %295 = sbr.rel (%p293) target = $region44
      $region43: #{simrel_rcnn_forward.1} parent=11 // pred_region
        _
      $region44: #{simrel_rcnn_forward.1} parent=11 // pred_fallthru
        _
      // Predicated region
      $region45: #{simrel_rcnn_forward.1} parent=11 // pred_check
        %p296 = pneg %p231
      $region46: #{simrel_rcnn_forward.1} parent=11 // pred_check_branch
        %298 = sbr.rel (%p296) target = $region48
      $region47: #{simrel_rcnn_forward.1} parent=11 // pred_region
        _
      $region48: #{simrel_rcnn_forward.1} parent=11 // pred_fallthru
        _
    $region12: #{simrel_rcnn_forward.1} parent=5 // pred_fallthru
      _
    %p299 = scmp.lt.s32.totalorder %s16, 2
    // Predicated region
    $region49: #{simrel_rcnn_forward.1} parent=5 // pred_check
      %p300 = pneg %p299
    $region50: #{simrel_rcnn_forward.1} parent=5 // pred_check_branch
      %302 = sbr.rel (%p300) target = $region52
    $region51: #{simrel_rcnn_forward.1} parent=5 // pred_region
      // Predicated region
      $region53: #{simrel_rcnn_forward.1} parent=51 // pred_check
        %p303 = pneg %p36
      $region54: #{simrel_rcnn_forward.1} parent=51 // pred_check_branch
        %305 = sbr.rel (%p303) target = $region56
      $region55: #{simrel_rcnn_forward.1} parent=51 // pred_region
        %p306 = scmp.lt.s32.totalorder %s16, 1
        %s307 = scalar_select %p306, %s16, 1
        %s308 = smul.addr %s307, 32
        %s309 = smul.addr %s308, 8
        %s310 = scalar_lea.vmem %s0, %s309
      $region56: #{simrel_rcnn_forward.1} parent=51 // pred_fallthru
        _
    $region52: #{simrel_rcnn_forward.1} parent=5 // pred_fallthru
      _
    %p311 = scmp.le.s32.totalorder 1, %s16
    %p312 = scmp.lt.s32.totalorder %s16, 3
    %p313 = pnand %p311, %p312
    %p314 = pneg %p313
    // Predicated region
    $region57: #{simrel_rcnn_forward.1} parent=5 // pred_check
      _
    $region58: #{simrel_rcnn_forward.1} parent=5 // pred_check_branch
      %316 = sbr.rel (%p313) target = $region60
    $region59: #{simrel_rcnn_forward.1} parent=5 // pred_region
      %s317 = ssub.s32 %s16, 1
      %p318 = scmp.lt.s32.totalorder %s21, 1
      %s319 = scalar_select %p318, %s21, 1
      %s320 = smul.addr %s319, 32
      %s321 = smul.addr %s320, 8
      %s322 = scalar_lea.vmem %s0, %s321
      %p323 = pneg %p42
      %p324 = pneg %p39
      %p325 = pneg %p63
      %p326 = pneg %p60
      %p327 = pneg %p84
      %p328 = pneg %p81
      %p329 = pneg %p105
      %p330 = pneg %p102
      %p331 = pneg %p126
      %p332 = pneg %p123
      %p333 = pneg %p147
      %p334 = pneg %p144
      %p335 = pneg %p168
      %p336 = pneg %p165
      %p337 = pneg %p189
      %p338 = pneg %p186
      %p339 = pneg %p210
      %p340 = pneg %p207
      %p341 = pneg %p231
      %p342 = pneg %p228
      %p343 = pneg %p257
      %p344 = pneg %p254
      %p345 = scmp.lt.s32.totalorder %s21, 1
      %s346 = scalar_select %p345, %s21, 1
      %s347 = smul.addr %s346, 2
      %s348 = smul.addr %s347, 8
      %s349 = scalar_lea.vmem %s10, %s348
      %p350 = scmp.lt.s32.totalorder %s21, 1
      %s351 = scalar_select %p350, %s21, 1
      %s352 = smul.addr %s351, 32
      %s353 = smul.addr %s352, 8
      %s354 = scalar_lea.vmem %s0, %s353
      %p355 = scmp.lt.s32.totalorder %s21, 1
      %s356 = scalar_select %p355, %s21, 1
      %s357 = smul.addr %s356, 2
      %s358 = smul.addr %s357, 8
      %s359 = scalar_lea.vmem %s10, %s358
      %v360 = vld [vmem:[%s354] sm:$0xff]
      %v361 = vld [vmem:[%s354 + $0x8] sm:$0xff]
      %v362 = vld [vmem:[%s354 + $0x10] sm:$0xff]
      %v363 = vld [vmem:[%s354 + $0x18] sm:$0xff]
      %v364 = vld [vmem:[%s354 + $0x20] sm:$0xff]
      %v365 = vld [vmem:[%s354 + $0x28] sm:$0xff]
      %v366 = vld [vmem:[%s354 + $0x30] sm:$0xff]
      %v367 = vld [vmem:[%s354 + $0x38] sm:$0xff]
      %v368 = vld [vmem:[%s354 + $0x40] sm:$0xff]
      %v369 = vld [vmem:[%s354 + $0x48] sm:$0xff]
      %v370 = vld [vmem:[%s354 + $0x50] sm:$0xff]
      %v371 = vld [vmem:[%s354 + $0x58] sm:$0xff]
      %v372 = vld [vmem:[%s354 + $0x60] sm:$0xff]
      %v373 = vld [vmem:[%s354 + $0x68] sm:$0xff]
      %v374 = vld [vmem:[%s354 + $0x70] sm:$0xff]
      %v375 = vld [vmem:[%s354 + $0x78] sm:$0xff]
      %v376 = vld [vmem:[%s354 + $0x80] sm:$0xff]
      %v377 = vld [vmem:[%s354 + $0x88] sm:$0xff]
      %v378 = vld [vmem:[%s354 + $0x90] sm:$0xff]
      %v379 = vld [vmem:[%s354 + $0x98] sm:$0xff]
      %v380 = vld [vmem:[%s354 + $0xa0] sm:$0xff]
      %v381 = vld [vmem:[%s354 + $0xa8] sm:$0xff]
      %v382 = vld [vmem:[%s354 + $0xb0] sm:$0xff]
      %v383 = vld [vmem:[%s354 + $0xb8] sm:$0xff]
      %v384 = vld [vmem:[%s354 + $0xc0] sm:$0xff]
      %v385 = vld [vmem:[%s354 + $0xc8] sm:$0xff]
      %v386 = vld [vmem:[%s354 + $0xd0] sm:$0xff]
      %v387 = vld [vmem:[%s354 + $0xd8] sm:$0xff]
      %v388 = vld [vmem:[%s354 + $0xe0] sm:$0xff]
      %v389 = vld [vmem:[%s354 + $0xe8] sm:$0xff]
      %v390 = vld [vmem:[%s354 + $0xf0] sm:$0xff]
      %v391 = vld [vmem:[%s354 + $0xf8] sm:$0xff]
      %v392 = vlaneseq
      %v393 = vshrl.u32 %v392, 7
      %v394 = vadd.s32 %v393, 8
      %v395 = vadd.s32 %v393, 16
      %v396 = vadd.s32 %v393, 24
      %v397 = vadd.s32 %v393, 32
      %v398 = vadd.s32 %v393, 40
      %v399 = vadd.s32 %v393, 48
      %v400 = vadd.s32 %v393, 56
      %v401 = vadd.s32 %v393, 64
      %v402 = vadd.s32 %v393, 72
      %v403 = vadd.s32 %v393, 80
      %v404 = vadd.s32 %v393, 88
      %v405 = vadd.s32 %v393, 96
      %v406 = vadd.s32 %v393, 104
      %v407 = vadd.s32 %v393, 112
      %v408 = vadd.s32 %v393, 120
      %v409 = vadd.s32 %v393, 128
      %v410 = vadd.s32 %v393, 136
      %v411 = vadd.s32 %v393, 144
      %v412 = vadd.s32 %v393, 152
      %v413 = vadd.s32 %v393, 160
      %v414 = vadd.s32 %v393, 168
      %v415 = vadd.s32 %v393, 176
      %v416 = vadd.s32 %v393, 184
      %v417 = vadd.s32 %v393, 192
      %v418 = vadd.s32 %v393, 200
      %v419 = vadd.s32 %v393, 208
      %v420 = vadd.s32 %v393, 216
      %v421 = vadd.s32 %v393, 224
      %v422 = vadd.s32 %v393, 232
      %v423 = vadd.s32 %v393, 240
      %v424 = vadd.s32 %v393, 248
      %v425 = vcvt.s32.f32 %v393
      %v426 = vcvt.s32.f32 %v394
      %v427 = vcvt.s32.f32 %v395
      %v428 = vcvt.s32.f32 %v396
      %v429 = vcvt.s32.f32 %v397
      %v430 = vcvt.s32.f32 %v398
      %v431 = vcvt.s32.f32 %v399
      %v432 = vcvt.s32.f32 %v400
      %v433 = vcvt.s32.f32 %v401
      %v434 = vcvt.s32.f32 %v402
      %v435 = vcvt.s32.f32 %v403
      %v436 = vcvt.s32.f32 %v404
      %v437 = vcvt.s32.f32 %v405
      %v438 = vcvt.s32.f32 %v406
      %v439 = vcvt.s32.f32 %v407
      %v440 = vcvt.s32.f32 %v408
      %v441 = vcvt.s32.f32 %v409
      %v442 = vcvt.s32.f32 %v410
      %v443 = vcvt.s32.f32 %v411
      %v444 = vcvt.s32.f32 %v412
      %v445 = vcvt.s32.f32 %v413
      %v446 = vcvt.s32.f32 %v414
      %v447 = vcvt.s32.f32 %v415
      %v448 = vcvt.s32.f32 %v416
      %v449 = vcvt.s32.f32 %v417
      %v450 = vcvt.s32.f32 %v418
      %v451 = vcvt.s32.f32 %v419
      %v452 = vcvt.s32.f32 %v420
      %v453 = vcvt.s32.f32 %v421
      %v454 = vcvt.s32.f32 %v422
      %v455 = vcvt.s32.f32 %v423
      %v456 = vcvt.s32.f32 %v424
      %v457 = vadd.f32 %v425, 0.5
      %v458 = vadd.f32 %v426, 0.5
      %v459 = vadd.f32 %v427, 0.5
      %v460 = vadd.f32 %v428, 0.5
      %v461 = vadd.f32 %v429, 0.5
      %v462 = vadd.f32 %v430, 0.5
      %v463 = vadd.f32 %v431, 0.5
      %v464 = vadd.f32 %v432, 0.5
      %v465 = vadd.f32 %v433, 0.5
      %v466 = vadd.f32 %v434, 0.5
      %v467 = vadd.f32 %v435, 0.5
      %v468 = vadd.f32 %v436, 0.5
      %v469 = vadd.f32 %v437, 0.5
      %v470 = vadd.f32 %v438, 0.5
      %v471 = vadd.f32 %v439, 0.5
      %v472 = vadd.f32 %v440, 0.5
      %v473 = vadd.f32 %v441, 0.5
      %v474 = vadd.f32 %v442, 0.5
      %v475 = vadd.f32 %v443, 0.5
      %v476 = vadd.f32 %v444, 0.5
      %v477 = vadd.f32 %v445, 0.5
      %v478 = vadd.f32 %v446, 0.5
      %v479 = vadd.f32 %v447, 0.5
      %v480 = vadd.f32 %v448, 0.5
      %v481 = vadd.f32 %v449, 0.5
      %v482 = vadd.f32 %v450, 0.5
      %v483 = vadd.f32 %v451, 0.5
      %v484 = vadd.f32 %v452, 0.5
      %v485 = vadd.f32 %v453, 0.5
      %v486 = vadd.f32 %v454, 0.5
      %v487 = vadd.f32 %v455, 0.5
      %v488 = vadd.f32 %v456, 0.5
      %v489 = vmul.f32 %v457, 0.0625
      %v490 = vmul.f32 %v458, 0.0625
      %v491 = vmul.f32 %v459, 0.0625
      %v492 = vmul.f32 %v460, 0.0625
      %v493 = vmul.f32 %v461, 0.0625
      %v494 = vmul.f32 %v462, 0.0625
      %v495 = vmul.f32 %v463, 0.0625
      %v496 = vmul.f32 %v464, 0.0625
      %v497 = vmul.f32 %v465, 0.0625
      %v498 = vmul.f32 %v466, 0.0625
      %v499 = vmul.f32 %v467, 0.0625
      %v500 = vmul.f32 %v468, 0.0625
      %v501 = vmul.f32 %v469, 0.0625
      %v502 = vmul.f32 %v470, 0.0625
      %v503 = vmul.f32 %v471, 0.0625
      %v504 = vmul.f32 %v472, 0.0625
      %v505 = vmul.f32 %v473, 0.0625
      %v506 = vmul.f32 %v474, 0.0625
      %v507 = vmul.f32 %v475, 0.0625
      %v508 = vmul.f32 %v476, 0.0625
      %v509 = vmul.f32 %v477, 0.0625
      %v510 = vmul.f32 %v478, 0.0625
      %v511 = vmul.f32 %v479, 0.0625
      %v512 = vmul.f32 %v480, 0.0625
      %v513 = vmul.f32 %v481, 0.0625
      %v514 = vmul.f32 %v482, 0.0625
      %v515 = vmul.f32 %v483, 0.0625
      %v516 = vmul.f32 %v484, 0.0625
      %v517 = vmul.f32 %v485, 0.0625
      %v518 = vmul.f32 %v486, 0.0625
      %v519 = vmul.f32 %v487, 0.0625
      %v520 = vmul.f32 %v488, 0.0625
      %v521 = vfloor.f32 %v489
      %v522 = vfloor.f32 %v490
      %v523 = vfloor.f32 %v491
      %v524 = vfloor.f32 %v492
      %v525 = vfloor.f32 %v493
      %v526 = vfloor.f32 %v494
      %v527 = vfloor.f32 %v495
      %v528 = vfloor.f32 %v496
      %v529 = vfloor.f32 %v497
      %v530 = vfloor.f32 %v498
      %v531 = vfloor.f32 %v499
      %v532 = vfloor.f32 %v500
      %v533 = vfloor.f32 %v501
      %v534 = vfloor.f32 %v502
      %v535 = vfloor.f32 %v503
      %v536 = vfloor.f32 %v504
      %v537 = vfloor.f32 %v505
      %v538 = vfloor.f32 %v506
      %v539 = vfloor.f32 %v507
      %v540 = vfloor.f32 %v508
      %v541 = vfloor.f32 %v509
      %v542 = vfloor.f32 %v510
      %v543 = vfloor.f32 %v511
      %v544 = vfloor.f32 %v512
      %v545 = vfloor.f32 %v513
      %v546 = vfloor.f32 %v514
      %v547 = vfloor.f32 %v515
      %v548 = vfloor.f32 %v516
      %v549 = vfloor.f32 %v517
      %v550 = vfloor.f32 %v518
      %v551 = vfloor.f32 %v519
      %v552 = vfloor.f32 %v520
      %v553 = vmul.f32 %v521, 16.0
      %v554 = vmul.f32 %v522, 16.0
      %v555 = vmul.f32 %v523, 16.0
      %v556 = vmul.f32 %v524, 16.0
      %v557 = vmul.f32 %v525, 16.0
      %v558 = vmul.f32 %v526, 16.0
      %v559 = vmul.f32 %v527, 16.0
      %v560 = vmul.f32 %v528, 16.0
      %v561 = vmul.f32 %v529, 16.0
      %v562 = vmul.f32 %v530, 16.0
      %v563 = vmul.f32 %v531, 16.0
      %v564 = vmul.f32 %v532, 16.0
      %v565 = vmul.f32 %v533, 16.0
      %v566 = vmul.f32 %v534, 16.0
      %v567 = vmul.f32 %v535, 16.0
      %v568 = vmul.f32 %v536, 16.0
      %v569 = vmul.f32 %v537, 16.0
      %v570 = vmul.f32 %v538, 16.0
      %v571 = vmul.f32 %v539, 16.0
      %v572 = vmul.f32 %v540, 16.0
      %v573 = vmul.f32 %v541, 16.0
      %v574 = vmul.f32 %v542, 16.0
      %v575 = vmul.f32 %v543, 16.0
      %v576 = vmul.f32 %v544, 16.0
      %v577 = vmul.f32 %v545, 16.0
      %v578 = vmul.f32 %v546, 16.0
      %v579 = vmul.f32 %v547, 16.0
      %v580 = vmul.f32 %v548, 16.0
      %v581 = vmul.f32 %v549, 16.0
      %v582 = vmul.f32 %v550, 16.0
      %v583 = vmul.f32 %v551, 16.0
      %v584 = vmul.f32 %v552, 16.0
      %v585 = vsub.f32 %v425, %v553
      %v586 = vsub.f32 %v426, %v554
      %v587 = vsub.f32 %v427, %v555
      %v588 = vsub.f32 %v428, %v556
      %v589 = vsub.f32 %v429, %v557
      %v590 = vsub.f32 %v430, %v558
      %v591 = vsub.f32 %v431, %v559
      %v592 = vsub.f32 %v432, %v560
      %v593 = vsub.f32 %v433, %v561
      %v594 = vsub.f32 %v434, %v562
      %v595 = vsub.f32 %v435, %v563
      %v596 = vsub.f32 %v436, %v564
      %v597 = vsub.f32 %v437, %v565
      %v598 = vsub.f32 %v438, %v566
      %v599 = vsub.f32 %v439, %v567
      %v600 = vsub.f32 %v440, %v568
      %v601 = vsub.f32 %v441, %v569
      %v602 = vsub.f32 %v442, %v570
      %v603 = vsub.f32 %v443, %v571
      %v604 = vsub.f32 %v444, %v572
      %v605 = vsub.f32 %v445, %v573
      %v606 = vsub.f32 %v446, %v574
      %v607 = vsub.f32 %v447, %v575
      %v608 = vsub.f32 %v448, %v576
      %v609 = vsub.f32 %v449, %v577
      %v610 = vsub.f32 %v450, %v578
      %v611 = vsub.f32 %v451, %v579
      %v612 = vsub.f32 %v452, %v580
      %v613 = vsub.f32 %v453, %v581
      %v614 = vsub.f32 %v454, %v582
      %v615 = vsub.f32 %v455, %v583
      %v616 = vsub.f32 %v456, %v584
      %v617 = vrot.slane %v360, 7
      %v618 = vrot.slane %v361, 7
      %v619 = vrot.slane %v362, 7
      %v620 = vrot.slane %v363, 7
      %v621 = vrot.slane %v364, 7
      %v622 = vrot.slane %v365, 7
      %v623 = vrot.slane %v366, 7
      %v624 = vrot.slane %v367, 7
      %v625 = vrot.slane %v368, 7
      %v626 = vrot.slane %v369, 7
      %v627 = vrot.slane %v370, 7
      %v628 = vrot.slane %v371, 7
      %v629 = vrot.slane %v372, 7
      %v630 = vrot.slane %v373, 7
      %v631 = vrot.slane %v374, 7
      %v632 = vrot.slane %v375, 7
      %v633 = vrot.slane %v376, 7
      %v634 = vrot.slane %v377, 7
      %v635 = vrot.slane %v378, 7
      %v636 = vrot.slane %v379, 7
      %v637 = vrot.slane %v380, 7
      %v638 = vrot.slane %v381, 7
      %v639 = vrot.slane %v382, 7
      %v640 = vrot.slane %v383, 7
      %v641 = vrot.slane %v384, 7
      %v642 = vrot.slane %v385, 7
      %v643 = vrot.slane %v386, 7
      %v644 = vrot.slane %v387, 7
      %v645 = vrot.slane %v388, 7
      %v646 = vrot.slane %v389, 7
      %v647 = vrot.slane %v390, 7
      %v648 = vrot.slane %v391, 7
      %vm649 = vcmp.lt.s32.totalorder %v393, 1
      %v650 = vsel %vm649, %v647, %v648
      %v651 = vsel %vm649, %v646, %v647
      %v652 = vsel %vm649, %v645, %v646
      %v653 = vsel %vm649, %v644, %v645
      %v654 = vsel %vm649, %v643, %v644
      %v655 = vsel %vm649, %v642, %v643
      %v656 = vsel %vm649, %v641, %v642
      %v657 = vsel %vm649, %v640, %v641
      %v658 = vsel %vm649, %v639, %v640
      %v659 = vsel %vm649, %v638, %v639
      %v660 = vsel %vm649, %v637, %v638
      %v661 = vsel %vm649, %v636, %v637
      %v662 = vsel %vm649, %v635, %v636
      %v663 = vsel %vm649, %v634, %v635
      %v664 = vsel %vm649, %v633, %v634
      %v665 = vsel %vm649, %v632, %v633
      %v666 = vsel %vm649, %v631, %v632
      %v667 = vsel %vm649, %v630, %v631
      %v668 = vsel %vm649, %v629, %v630
      %v669 = vsel %vm649, %v628, %v629
      %v670 = vsel %vm649, %v627, %v628
      %v671 = vsel %vm649, %v626, %v627
      %v672 = vsel %vm649, %v625, %v626
      %v673 = vsel %vm649, %v624, %v625
      %v674 = vsel %vm649, %v623, %v624
      %v675 = vsel %vm649, %v622, %v623
      %v676 = vsel %vm649, %v621, %v622
      %v677 = vsel %vm649, %v620, %v621
      %v678 = vsel %vm649, %v619, %v620
      %v679 = vsel %vm649, %v618, %v619
      %v680 = vsel %vm649, %v617, %v618
      %v681 = vsel %vm649, %v648, %v617
      %v682 = vadd.f32 %v521, -1.0
      %v683 = vadd.f32 %v522, -1.0
      %v684 = vadd.f32 %v523, -1.0
      %v685 = vadd.f32 %v524, -1.0
      %v686 = vadd.f32 %v525, -1.0
      %v687 = vadd.f32 %v526, -1.0
      %v688 = vadd.f32 %v527, -1.0
      %v689 = vadd.f32 %v528, -1.0
      %v690 = vadd.f32 %v529, -1.0
      %v691 = vadd.f32 %v530, -1.0
      %v692 = vadd.f32 %v531, -1.0
      %v693 = vadd.f32 %v532, -1.0
      %v694 = vadd.f32 %v533, -1.0
      %v695 = vadd.f32 %v534, -1.0
      %v696 = vadd.f32 %v535, -1.0
      %v697 = vadd.f32 %v536, -1.0
      %v698 = vadd.f32 %v537, -1.0
      %v699 = vadd.f32 %v538, -1.0
      %v700 = vadd.f32 %v539, -1.0
      %v701 = vadd.f32 %v540, -1.0
      %v702 = vadd.f32 %v541, -1.0
      %v703 = vadd.f32 %v542, -1.0
      %v704 = vadd.f32 %v543, -1.0
      %v705 = vadd.f32 %v544, -1.0
      %v706 = vadd.f32 %v545, -1.0
      %v707 = vadd.f32 %v546, -1.0
      %v708 = vadd.f32 %v547, -1.0
      %v709 = vadd.f32 %v548, -1.0
      %v710 = vadd.f32 %v549, -1.0
      %v711 = vadd.f32 %v550, -1.0
      %v712 = vadd.f32 %v551, -1.0
      %v713 = vadd.f32 %v552, -1.0
      %v714 = vadd.f32 %v585, -1.0
      %v715 = vadd.f32 %v586, -1.0
      %v716 = vadd.f32 %v587, -1.0
      %v717 = vadd.f32 %v588, -1.0
      %v718 = vadd.f32 %v589, -1.0
      %v719 = vadd.f32 %v590, -1.0
      %v720 = vadd.f32 %v591, -1.0
      %v721 = vadd.f32 %v592, -1.0
      %v722 = vadd.f32 %v593, -1.0
      %v723 = vadd.f32 %v594, -1.0
      %v724 = vadd.f32 %v595, -1.0
      %v725 = vadd.f32 %v596, -1.0
      %v726 = vadd.f32 %v597, -1.0
      %v727 = vadd.f32 %v598, -1.0
      %v728 = vadd.f32 %v599, -1.0
      %v729 = vadd.f32 %v600, -1.0
      %v730 = vadd.f32 %v601, -1.0
      %v731 = vadd.f32 %v602, -1.0
      %v732 = vadd.f32 %v603, -1.0
      %v733 = vadd.f32 %v604, -1.0
      %v734 = vadd.f32 %v605, -1.0
      %v735 = vadd.f32 %v606, -1.0
      %v736 = vadd.f32 %v607, -1.0
      %v737 = vadd.f32 %v608, -1.0
      %v738 = vadd.f32 %v609, -1.0
      %v739 = vadd.f32 %v610, -1.0
      %v740 = vadd.f32 %v611, -1.0
      %v741 = vadd.f32 %v612, -1.0
      %v742 = vadd.f32 %v613, -1.0
      %v743 = vadd.f32 %v614, -1.0
      %v744 = vadd.f32 %v615, -1.0
      %v745 = vadd.f32 %v616, -1.0
      %vm746 = vcmp.gt.f32.partialorder %v682, -0.5
      %vm747 = vcmp.gt.f32.partialorder %v683, -0.5
      %vm748 = vcmp.gt.f32.partialorder %v684, -0.5
      %vm749 = vcmp.gt.f32.partialorder %v685, -0.5
      %vm750 = vcmp.gt.f32.partialorder %v686, -0.5
      %vm751 = vcmp.gt.f32.partialorder %v687, -0.5
      %vm752 = vcmp.gt.f32.partialorder %v688, -0.5
      %vm753 = vcmp.gt.f32.partialorder %v689, -0.5
      %vm754 = vcmp.gt.f32.partialorder %v690, -0.5
      %vm755 = vcmp.gt.f32.partialorder %v691, -0.5
      %vm756 = vcmp.gt.f32.partialorder %v692, -0.5
      %vm757 = vcmp.gt.f32.partialorder %v693, -0.5
      %vm758 = vcmp.gt.f32.partialorder %v694, -0.5
      %vm759 = vcmp.gt.f32.partialorder %v695, -0.5
      %vm760 = vcmp.gt.f32.partialorder %v696, -0.5
      %vm761 = vcmp.gt.f32.partialorder %v697, -0.5
      %vm762 = vcmp.gt.f32.partialorder %v698, -0.5
      %vm763 = vcmp.gt.f32.partialorder %v699, -0.5
      %vm764 = vcmp.gt.f32.partialorder %v700, -0.5
      %vm765 = vcmp.gt.f32.partialorder %v701, -0.5
      %vm766 = vcmp.gt.f32.partialorder %v702, -0.5
      %vm767 = vcmp.gt.f32.partialorder %v703, -0.5
      %vm768 = vcmp.gt.f32.partialorder %v704, -0.5
      %vm769 = vcmp.gt.f32.partialorder %v705, -0.5
      %vm770 = vcmp.gt.f32.partialorder %v706, -0.5
      %vm771 = vcmp.gt.f32.partialorder %v707, -0.5
      %vm772 = vcmp.gt.f32.partialorder %v708, -0.5
      %vm773 = vcmp.gt.f32.partialorder %v709, -0.5
      %vm774 = vcmp.gt.f32.partialorder %v710, -0.5
      %vm775 = vcmp.gt.f32.partialorder %v711, -0.5
      %vm776 = vcmp.gt.f32.partialorder %v712, -0.5
      %vm777 = vcmp.gt.f32.partialorder %v713, -0.5
      %vm778 = vcmp.lt.f32.partialorder %v682, 15.5
      %vm779 = vcmp.lt.f32.partialorder %v683, 15.5
      %vm780 = vcmp.lt.f32.partialorder %v684, 15.5
      %vm781 = vcmp.lt.f32.partialorder %v685, 15.5
      %vm782 = vcmp.lt.f32.partialorder %v686, 15.5
      %vm783 = vcmp.lt.f32.partialorder %v687, 15.5
      %vm784 = vcmp.lt.f32.partialorder %v688, 15.5
      %vm785 = vcmp.lt.f32.partialorder %v689, 15.5
      %vm786 = vcmp.lt.f32.partialorder %v690, 15.5
      %vm787 = vcmp.lt.f32.partialorder %v691, 15.5
      %vm788 = vcmp.lt.f32.partialorder %v692, 15.5
      %vm789 = vcmp.lt.f32.partialorder %v693, 15.5
      %vm790 = vcmp.lt.f32.partialorder %v694, 15.5
      %vm791 = vcmp.lt.f32.partialorder %v695, 15.5
      %vm792 = vcmp.lt.f32.partialorder %v696, 15.5
      %vm793 = vcmp.lt.f32.partialorder %v697, 15.5
      %vm794 = vcmp.lt.f32.partialorder %v698, 15.5
      %vm795 = vcmp.lt.f32.partialorder %v699, 15.5
      %vm796 = vcmp.lt.f32.partialorder %v700, 15.5
      %vm797 = vcmp.lt.f32.partialorder %v701, 15.5
      %vm798 = vcmp.lt.f32.partialorder %v702, 15.5
      %vm799 = vcmp.lt.f32.partialorder %v703, 15.5
      %vm800 = vcmp.lt.f32.partialorder %v704, 15.5
      %vm801 = vcmp.lt.f32.partialorder %v705, 15.5
      %vm802 = vcmp.lt.f32.partialorder %v706, 15.5
      %vm803 = vcmp.lt.f32.partialorder %v707, 15.5
      %vm804 = vcmp.lt.f32.partialorder %v708, 15.5
      %vm805 = vcmp.lt.f32.partialorder %v709, 15.5
      %vm806 = vcmp.lt.f32.partialorder %v710, 15.5
      %vm807 = vcmp.lt.f32.partialorder %v711, 15.5
      %vm808 = vcmp.lt.f32.partialorder %v712, 15.5
      %vm809 = vcmp.lt.f32.partialorder %v713, 15.5
      %vm810 = vmand %vm746, %vm778
      %vm811 = vmand %vm747, %vm779
      %vm812 = vmand %vm748, %vm780
      %vm813 = vmand %vm749, %vm781
      %vm814 = vmand %vm750, %vm782
      %vm815 = vmand %vm751, %vm783
      %vm816 = vmand %vm752, %vm784
      %vm817 = vmand %vm753, %vm785
      %vm818 = vmand %vm754, %vm786
      %vm819 = vmand %vm755, %vm787
      %vm820 = vmand %vm756, %vm788
      %vm821 = vmand %vm757, %vm789
      %vm822 = vmand %vm758, %vm790
      %vm823 = vmand %vm759, %vm791
      %vm824 = vmand %vm760, %vm792
      %vm825 = vmand %vm761, %vm793
      %vm826 = vmand %vm762, %vm794
      %vm827 = vmand %vm763, %vm795
      %vm828 = vmand %vm764, %vm796
      %vm829 = vmand %vm765, %vm797
      %vm830 = vmand %vm766, %vm798
      %vm831 = vmand %vm767, %vm799
      %vm832 = vmand %vm768, %vm800
      %vm833 = vmand %vm769, %vm801
      %vm834 = vmand %vm770, %vm802
      %vm835 = vmand %vm771, %vm803
      %vm836 = vmand %vm772, %vm804
      %vm837 = vmand %vm773, %vm805
      %vm838 = vmand %vm774, %vm806
      %vm839 = vmand %vm775, %vm807
      %vm840 = vmand %vm776, %vm808
      %vm841 = vmand %vm777, %vm809
      %vm842 = vcmp.gt.f32.partialorder %v714, -0.5
      %vm843 = vcmp.gt.f32.partialorder %v715, -0.5
      %vm844 = vcmp.gt.f32.partialorder %v716, -0.5
      %vm845 = vcmp.gt.f32.partialorder %v717, -0.5
      %vm846 = vcmp.gt.f32.partialorder %v718, -0.5
      %vm847 = vcmp.gt.f32.partialorder %v719, -0.5
      %vm848 = vcmp.gt.f32.partialorder %v720, -0.5
      %vm849 = vcmp.gt.f32.partialorder %v721, -0.5
      %vm850 = vcmp.gt.f32.partialorder %v722, -0.5
      %vm851 = vcmp.gt.f32.partialorder %v723, -0.5
      %vm852 = vcmp.gt.f32.partialorder %v724, -0.5
      %vm853 = vcmp.gt.f32.partialorder %v725, -0.5
      %vm854 = vcmp.gt.f32.partialorder %v726, -0.5
      %vm855 = vcmp.gt.f32.partialorder %v727, -0.5
      %vm856 = vcmp.gt.f32.partialorder %v728, -0.5
      %vm857 = vcmp.gt.f32.partialorder %v729, -0.5
      %vm858 = vcmp.gt.f32.partialorder %v730, -0.5
      %vm859 = vcmp.gt.f32.partialorder %v731, -0.5
      %vm860 = vcmp.gt.f32.partialorder %v732, -0.5
      %vm861 = vcmp.gt.f32.partialorder %v733, -0.5
      %vm862 = vcmp.gt.f32.partialorder %v734, -0.5
      %vm863 = vcmp.gt.f32.partialorder %v735, -0.5
      %vm864 = vcmp.gt.f32.partialorder %v736, -0.5
      %vm865 = vcmp.gt.f32.partialorder %v737, -0.5
      %vm866 = vcmp.gt.f32.partialorder %v738, -0.5
      %vm867 = vcmp.gt.f32.partialorder %v739, -0.5
      %vm868 = vcmp.gt.f32.partialorder %v740, -0.5
      %vm869 = vcmp.gt.f32.partialorder %v741, -0.5
      %vm870 = vcmp.gt.f32.partialorder %v742, -0.5
      %vm871 = vcmp.gt.f32.partialorder %v743, -0.5
      %vm872 = vcmp.gt.f32.partialorder %v744, -0.5
      %vm873 = vcmp.gt.f32.partialorder %v745, -0.5
      %vm874 = vmand %vm810, %vm842
      %vm875 = vmand %vm811, %vm843
      %vm876 = vmand %vm812, %vm844
      %vm877 = vmand %vm813, %vm845
      %vm878 = vmand %vm814, %vm846
      %vm879 = vmand %vm815, %vm847
      %vm880 = vmand %vm816, %vm848
      %vm881 = vmand %vm817, %vm849
      %vm882 = vmand %vm818, %vm850
      %vm883 = vmand %vm819, %vm851
      %vm884 = vmand %vm820, %vm852
      %vm885 = vmand %vm821, %vm853
      %vm886 = vmand %vm822, %vm854
      %vm887 = vmand %vm823, %vm855
      %vm888 = vmand %vm824, %vm856
      %vm889 = vmand %vm825, %vm857
      %vm890 = vmand %vm826, %vm858
      %vm891 = vmand %vm827, %vm859
      %vm892 = vmand %vm828, %vm860
      %vm893 = vmand %vm829, %vm861
      %vm894 = vmand %vm830, %vm862
      %vm895 = vmand %vm831, %vm863
      %vm896 = vmand %vm832, %vm864
      %vm897 = vmand %vm833, %vm865
      %vm898 = vmand %vm834, %vm866
      %vm899 = vmand %vm835, %vm867
      %vm900 = vmand %vm836, %vm868
      %vm901 = vmand %vm837, %vm869
      %vm902 = vmand %vm838, %vm870
      %vm903 = vmand %vm839, %vm871
      %vm904 = vmand %vm840, %vm872
      %vm905 = vmand %vm841, %vm873
      %vm906 = vcmp.lt.f32.partialorder %v714, 15.5
      %vm907 = vcmp.lt.f32.partialorder %v715, 15.5
      %vm908 = vcmp.lt.f32.partialorder %v716, 15.5
      %vm909 = vcmp.lt.f32.partialorder %v717, 15.5
      %vm910 = vcmp.lt.f32.partialorder %v718, 15.5
      %vm911 = vcmp.lt.f32.partialorder %v719, 15.5
      %vm912 = vcmp.lt.f32.partialorder %v720, 15.5
      %vm913 = vcmp.lt.f32.partialorder %v721, 15.5
      %vm914 = vcmp.lt.f32.partialorder %v722, 15.5
      %vm915 = vcmp.lt.f32.partialorder %v723, 15.5
      %vm916 = vcmp.lt.f32.partialorder %v724, 15.5
      %vm917 = vcmp.lt.f32.partialorder %v725, 15.5
      %vm918 = vcmp.lt.f32.partialorder %v726, 15.5
      %vm919 = vcmp.lt.f32.partialorder %v727, 15.5
      %vm920 = vcmp.lt.f32.partialorder %v728, 15.5
      %vm921 = vcmp.lt.f32.partialorder %v729, 15.5
      %vm922 = vcmp.lt.f32.partialorder %v730, 15.5
      %vm923 = vcmp.lt.f32.partialorder %v731, 15.5
      %vm924 = vcmp.lt.f32.partialorder %v732, 15.5
      %vm925 = vcmp.lt.f32.partialorder %v733, 15.5
      %vm926 = vcmp.lt.f32.partialorder %v734, 15.5
      %vm927 = vcmp.lt.f32.partialorder %v735, 15.5
      %vm928 = vcmp.lt.f32.partialorder %v736, 15.5
      %vm929 = vcmp.lt.f32.partialorder %v737, 15.5
      %vm930 = vcmp.lt.f32.partialorder %v738, 15.5
      %vm931 = vcmp.lt.f32.partialorder %v739, 15.5
      %vm932 = vcmp.lt.f32.partialorder %v740, 15.5
      %vm933 = vcmp.lt.f32.partialorder %v741, 15.5
      %vm934 = vcmp.lt.f32.partialorder %v742, 15.5
      %vm935 = vcmp.lt.f32.partialorder %v743, 15.5
      %vm936 = vcmp.lt.f32.partialorder %v744, 15.5
      %vm937 = vcmp.lt.f32.partialorder %v745, 15.5
      %vm938 = vmand %vm874, %vm906
      %vm939 = vmand %vm875, %vm907
      %vm940 = vmand %vm876, %vm908
      %vm941 = vmand %vm877, %vm909
      %vm942 = vmand %vm878, %vm910
      %vm943 = vmand %vm879, %vm911
      %vm944 = vmand %vm880, %vm912
      %vm945 = vmand %vm881, %vm913
      %vm946 = vmand %vm882, %vm914
      %vm947 = vmand %vm883, %vm915
      %vm948 = vmand %vm884, %vm916
      %vm949 = vmand %vm885, %vm917
      %vm950 = vmand %vm886, %vm918
      %vm951 = vmand %vm887, %vm919
      %vm952 = vmand %vm888, %vm920
      %vm953 = vmand %vm889, %vm921
      %vm954 = vmand %vm890, %vm922
      %vm955 = vmand %vm891, %vm923
      %vm956 = vmand %vm892, %vm924
      %vm957 = vmand %vm893, %vm925
      %vm958 = vmand %vm894, %vm926
      %vm959 = vmand %vm895, %vm927
      %vm960 = vmand %vm896, %vm928
      %vm961 = vmand %vm897, %vm929
      %vm962 = vmand %vm898, %vm930
      %vm963 = vmand %vm899, %vm931
      %vm964 = vmand %vm900, %vm932
      %vm965 = vmand %vm901, %vm933
      %vm966 = vmand %vm902, %vm934
      %vm967 = vmand %vm903, %vm935
      %vm968 = vmand %vm904, %vm936
      %vm969 = vmand %vm905, %vm937
      %v970 = vsel %vm938, 1, 0
      %v971 = vsel %vm939, 1, 0
      %v972 = vsel %vm940, 1, 0
      %v973 = vsel %vm941, 1, 0
      %v974 = vsel %vm942, 1, 0
      %v975 = vsel %vm943, 1, 0
      %v976 = vsel %vm944, 1, 0
      %v977 = vsel %vm945, 1, 0
      %v978 = vsel %vm946, 1, 0
      %v979 = vsel %vm947, 1, 0
      %v980 = vsel %vm948, 1, 0
      %v981 = vsel %vm949, 1, 0
      %v982 = vsel %vm950, 1, 0
      %v983 = vsel %vm951, 1, 0
      %v984 = vsel %vm952, 1, 0
      %v985 = vsel %vm953, 1, 0
      %v986 = vsel %vm954, 1, 0
      %v987 = vsel %vm955, 1, 0
      %v988 = vsel %vm956, 1, 0
      %v989 = vsel %vm957, 1, 0
      %v990 = vsel %vm958, 1, 0
      %v991 = vsel %vm959, 1, 0
      %v992 = vsel %vm960, 1, 0
      %v993 = vsel %vm961, 1, 0
      %v994 = vsel %vm962, 1, 0
      %v995 = vsel %vm963, 1, 0
      %v996 = vsel %vm964, 1, 0
      %v997 = vsel %vm965, 1, 0
      %v998 = vsel %vm966, 1, 0
      %v999 = vsel %vm967, 1, 0
      %v1000 = vsel %vm968, 1, 0
      %v1001 = vsel %vm969, 1, 0
      %vm1002 = vcmp.eq.s32.totalorder %v970, 1
      %vm1003 = vcmp.eq.s32.totalorder %v971, 1
      %vm1004 = vcmp.eq.s32.totalorder %v972, 1
      %vm1005 = vcmp.eq.s32.totalorder %v973, 1
      %vm1006 = vcmp.eq.s32.totalorder %v974, 1
      %vm1007 = vcmp.eq.s32.totalorder %v975, 1
      %vm1008 = vcmp.eq.s32.totalorder %v976, 1
      %vm1009 = vcmp.eq.s32.totalorder %v977, 1
      %vm1010 = vcmp.eq.s32.totalorder %v978, 1
      %vm1011 = vcmp.eq.s32.totalorder %v979, 1
      %vm1012 = vcmp.eq.s32.totalorder %v980, 1
      %vm1013 = vcmp.eq.s32.totalorder %v981, 1
      %vm1014 = vcmp.eq.s32.totalorder %v982, 1
      %vm1015 = vcmp.eq.s32.totalorder %v983, 1
      %vm1016 = vcmp.eq.s32.totalorder %v984, 1
      %vm1017 = vcmp.eq.s32.totalorder %v985, 1
      %vm1018 = vcmp.eq.s32.totalorder %v986, 1
      %vm1019 = vcmp.eq.s32.totalorder %v987, 1
      %vm1020 = vcmp.eq.s32.totalorder %v988, 1
      %vm1021 = vcmp.eq.s32.totalorder %v989, 1
      %vm1022 = vcmp.eq.s32.totalorder %v990, 1
      %vm1023 = vcmp.eq.s32.totalorder %v991, 1
      %vm1024 = vcmp.eq.s32.totalorder %v992, 1
      %vm1025 = vcmp.eq.s32.totalorder %v993, 1
      %vm1026 = vcmp.eq.s32.totalorder %v994, 1
      %vm1027 = vcmp.eq.s32.totalorder %v995, 1
      %vm1028 = vcmp.eq.s32.totalorder %v996, 1
      %vm1029 = vcmp.eq.s32.totalorder %v997, 1
      %vm1030 = vcmp.eq.s32.totalorder %v998, 1
      %vm1031 = vcmp.eq.s32.totalorder %v999, 1
      %vm1032 = vcmp.eq.s32.totalorder %v1000, 1
      %vm1033 = vcmp.eq.s32.totalorder %v1001, 1
      %v1034 = vsel %vm1002, %v651, 0.0
      %v1035 = vsel %vm1003, %v650, 0.0
      %v1036 = vsel %vm1004, %v681, 0.0
      %v1037 = vsel %vm1005, %v680, 0.0
      %v1038 = vsel %vm1006, %v679, 0.0
      %v1039 = vsel %vm1007, %v678, 0.0
      %v1040 = vsel %vm1008, %v677, 0.0
      %v1041 = vsel %vm1009, %v676, 0.0
      %v1042 = vsel %vm1010, %v675, 0.0
      %v1043 = vsel %vm1011, %v674, 0.0
      %v1044 = vsel %vm1012, %v673, 0.0
      %v1045 = vsel %vm1013, %v672, 0.0
      %v1046 = vsel %vm1014, %v671, 0.0
      %v1047 = vsel %vm1015, %v670, 0.0
      %v1048 = vsel %vm1016, %v669, 0.0
      %v1049 = vsel %vm1017, %v668, 0.0
      %v1050 = vsel %vm1018, %v667, 0.0
      %v1051 = vsel %vm1019, %v666, 0.0
      %v1052 = vsel %vm1020, %v665, 0.0
      %v1053 = vsel %vm1021, %v664, 0.0
      %v1054 = vsel %vm1022, %v663, 0.0
      %v1055 = vsel %vm1023, %v662, 0.0
      %v1056 = vsel %vm1024, %v661, 0.0
      %v1057 = vsel %vm1025, %v660, 0.0
      %v1058 = vsel %vm1026, %v659, 0.0
      %v1059 = vsel %vm1027, %v658, 0.0
      %v1060 = vsel %vm1028, %v657, 0.0
      %v1061 = vsel %vm1029, %v656, 0.0
      %v1062 = vsel %vm1030, %v655, 0.0
      %v1063 = vsel %vm1031, %v654, 0.0
      %v1064 = vsel %vm1032, %v653, 0.0
      %v1065 = vsel %vm1033, %v652, 0.0
      %v1066 = vld [vmem:[%s1] sm:$0xff]
      %v1067 = vadd.f32 %v585, 0.0
      %v1068 = vadd.f32 %v586, 0.0
      %v1069 = vadd.f32 %v587, 0.0
      %v1070 = vadd.f32 %v588, 0.0
      %v1071 = vadd.f32 %v589, 0.0
      %v1072 = vadd.f32 %v590, 0.0
      %v1073 = vadd.f32 %v591, 0.0
      %v1074 = vadd.f32 %v592, 0.0
      %v1075 = vadd.f32 %v593, 0.0
      %v1076 = vadd.f32 %v594, 0.0
      %v1077 = vadd.f32 %v595, 0.0
      %v1078 = vadd.f32 %v596, 0.0
      %v1079 = vadd.f32 %v597, 0.0
      %v1080 = vadd.f32 %v598, 0.0
      %v1081 = vadd.f32 %v599, 0.0
      %v1082 = vadd.f32 %v600, 0.0
      %v1083 = vadd.f32 %v601, 0.0
      %v1084 = vadd.f32 %v602, 0.0
      %v1085 = vadd.f32 %v603, 0.0
      %v1086 = vadd.f32 %v604, 0.0
      %v1087 = vadd.f32 %v605, 0.0
      %v1088 = vadd.f32 %v606, 0.0
      %v1089 = vadd.f32 %v607, 0.0
      %v1090 = vadd.f32 %v608, 0.0
      %v1091 = vadd.f32 %v609, 0.0
      %v1092 = vadd.f32 %v610, 0.0
      %v1093 = vadd.f32 %v611, 0.0
      %v1094 = vadd.f32 %v612, 0.0
      %v1095 = vadd.f32 %v613, 0.0
      %v1096 = vadd.f32 %v614, 0.0
      %v1097 = vadd.f32 %v615, 0.0
      %v1098 = vadd.f32 %v616, 0.0
      %vm1099 = vcmp.gt.f32.partialorder %v1067, -0.5
      %vm1100 = vcmp.gt.f32.partialorder %v1068, -0.5
      %vm1101 = vcmp.gt.f32.partialorder %v1069, -0.5
      %vm1102 = vcmp.gt.f32.partialorder %v1070, -0.5
      %vm1103 = vcmp.gt.f32.partialorder %v1071, -0.5
      %vm1104 = vcmp.gt.f32.partialorder %v1072, -0.5
      %vm1105 = vcmp.gt.f32.partialorder %v1073, -0.5
      %vm1106 = vcmp.gt.f32.partialorder %v1074, -0.5
      %vm1107 = vcmp.gt.f32.partialorder %v1075, -0.5
      %vm1108 = vcmp.gt.f32.partialorder %v1076, -0.5
      %vm1109 = vcmp.gt.f32.partialorder %v1077, -0.5
      %vm1110 = vcmp.gt.f32.partialorder %v1078, -0.5
      %vm1111 = vcmp.gt.f32.partialorder %v1079, -0.5
      %vm1112 = vcmp.gt.f32.partialorder %v1080, -0.5
      %vm1113 = vcmp.gt.f32.partialorder %v1081, -0.5
      %vm1114 = vcmp.gt.f32.partialorder %v1082, -0.5
      %vm1115 = vcmp.gt.f32.partialorder %v1083, -0.5
      %vm1116 = vcmp.gt.f32.partialorder %v1084, -0.5
      %vm1117 = vcmp.gt.f32.partialorder %v1085, -0.5
      %vm1118 = vcmp.gt.f32.partialorder %v1086, -0.5
      %vm1119 = vcmp.gt.f32.partialorder %v1087, -0.5
      %vm1120 = vcmp.gt.f32.partialorder %v1088, -0.5
      %vm1121 = vcmp.gt.f32.partialorder %v1089, -0.5
      %vm1122 = vcmp.gt.f32.partialorder %v1090, -0.5
      %vm1123 = vcmp.gt.f32.partialorder %v1091, -0.5
      %vm1124 = vcmp.gt.f32.partialorder %v1092, -0.5
      %vm1125 = vcmp.gt.f32.partialorder %v1093, -0.5
      %vm1126 = vcmp.gt.f32.partialorder %v1094, -0.5
      %vm1127 = vcmp.gt.f32.partialorder %v1095, -0.5
      %vm1128 = vcmp.gt.f32.partialorder %v1096, -0.5
      %vm1129 = vcmp.gt.f32.partialorder %v1097, -0.5
      %vm1130 = vcmp.gt.f32.partialorder %v1098, -0.5
      %vm1131 = vmand %vm810, %vm1099
      %vm1132 = vmand %vm811, %vm1100
      %vm1133 = vmand %vm812, %vm1101
      %vm1134 = vmand %vm813, %vm1102
      %vm1135 = vmand %vm814, %vm1103
      %vm1136 = vmand %vm815, %vm1104
      %vm1137 = vmand %vm816, %vm1105
      %vm1138 = vmand %vm817, %vm1106
      %vm1139 = vmand %vm818, %vm1107
      %vm1140 = vmand %vm819, %vm1108
      %vm1141 = vmand %vm820, %vm1109
      %vm1142 = vmand %vm821, %vm1110
      %vm1143 = vmand %vm822, %vm1111
      %vm1144 = vmand %vm823, %vm1112
      %vm1145 = vmand %vm824, %vm1113
      %vm1146 = vmand %vm825, %vm1114
      %vm1147 = vmand %vm826, %vm1115
      %vm1148 = vmand %vm827, %vm1116
      %vm1149 = vmand %vm828, %vm1117
      %vm1150 = vmand %vm829, %vm1118
      %vm1151 = vmand %vm830, %vm1119
      %vm1152 = vmand %vm831, %vm1120
      %vm1153 = vmand %vm832, %vm1121
      %vm1154 = vmand %vm833, %vm1122
      %vm1155 = vmand %vm834, %vm1123
      %vm1156 = vmand %vm835, %vm1124
      %vm1157 = vmand %vm836, %vm1125
      %vm1158 = vmand %vm837, %vm1126
      %vm1159 = vmand %vm838, %vm1127
      %vm1160 = vmand %vm839, %vm1128
      %vm1161 = vmand %vm840, %vm1129
      %vm1162 = vmand %vm841, %vm1130
      %vm1163 = vcmp.lt.f32.partialorder %v1067, 15.5
      %vm1164 = vcmp.lt.f32.partialorder %v1068, 15.5
      %vm1165 = vcmp.lt.f32.partialorder %v1069, 15.5
      %vm1166 = vcmp.lt.f32.partialorder %v1070, 15.5
      %vm1167 = vcmp.lt.f32.partialorder %v1071, 15.5
      %vm1168 = vcmp.lt.f32.partialorder %v1072, 15.5
      %vm1169 = vcmp.lt.f32.partialorder %v1073, 15.5
      %vm1170 = vcmp.lt.f32.partialorder %v1074, 15.5
      %vm1171 = vcmp.lt.f32.partialorder %v1075, 15.5
      %vm1172 = vcmp.lt.f32.partialorder %v1076, 15.5
      %vm1173 = vcmp.lt.f32.partialorder %v1077, 15.5
      %vm1174 = vcmp.lt.f32.partialorder %v1078, 15.5
      %vm1175 = vcmp.lt.f32.partialorder %v1079, 15.5
      %vm1176 = vcmp.lt.f32.partialorder %v1080, 15.5
      %vm1177 = vcmp.lt.f32.partialorder %v1081, 15.5
      %vm1178 = vcmp.lt.f32.partialorder %v1082, 15.5
      %vm1179 = vcmp.lt.f32.partialorder %v1083, 15.5
      %vm1180 = vcmp.lt.f32.partialorder %v1084, 15.5
      %vm1181 = vcmp.lt.f32.partialorder %v1085, 15.5
      %vm1182 = vcmp.lt.f32.partialorder %v1086, 15.5
      %vm1183 = vcmp.lt.f32.partialorder %v1087, 15.5
      %vm1184 = vcmp.lt.f32.partialorder %v1088, 15.5
      %vm1185 = vcmp.lt.f32.partialorder %v1089, 15.5
      %vm1186 = vcmp.lt.f32.partialorder %v1090, 15.5
      %vm1187 = vcmp.lt.f32.partialorder %v1091, 15.5
      %vm1188 = vcmp.lt.f32.partialorder %v1092, 15.5
      %vm1189 = vcmp.lt.f32.partialorder %v1093, 15.5
      %vm1190 = vcmp.lt.f32.partialorder %v1094, 15.5
      %vm1191 = vcmp.lt.f32.partialorder %v1095, 15.5
      %vm1192 = vcmp.lt.f32.partialorder %v1096, 15.5
      %vm1193 = vcmp.lt.f32.partialorder %v1097, 15.5
      %vm1194 = vcmp.lt.f32.partialorder %v1098, 15.5
      %vm1195 = vmand %vm1131, %vm1163
      %vm1196 = vmand %vm1132, %vm1164
      %vm1197 = vmand %vm1133, %vm1165
      %vm1198 = vmand %vm1134, %vm1166
      %vm1199 = vmand %vm1135, %vm1167
      %vm1200 = vmand %vm1136, %vm1168
      %vm1201 = vmand %vm1137, %vm1169
      %vm1202 = vmand %vm1138, %vm1170
      %vm1203 = vmand %vm1139, %vm1171
      %vm1204 = vmand %vm1140, %vm1172
      %vm1205 = vmand %vm1141, %vm1173
      %vm1206 = vmand %vm1142, %vm1174
      %vm1207 = vmand %vm1143, %vm1175
      %vm1208 = vmand %vm1144, %vm1176
      %vm1209 = vmand %vm1145, %vm1177
      %vm1210 = vmand %vm1146, %vm1178
      %vm1211 = vmand %vm1147, %vm1179
      %vm1212 = vmand %vm1148, %vm1180
      %vm1213 = vmand %vm1149, %vm1181
      %vm1214 = vmand %vm1150, %vm1182
      %vm1215 = vmand %vm1151, %vm1183
      %vm1216 = vmand %vm1152, %vm1184
      %vm1217 = vmand %vm1153, %vm1185
      %vm1218 = vmand %vm1154, %vm1186
      %vm1219 = vmand %vm1155, %vm1187
      %vm1220 = vmand %vm1156, %vm1188
      %vm1221 = vmand %vm1157, %vm1189
      %vm1222 = vmand %vm1158, %vm1190
      %vm1223 = vmand %vm1159, %vm1191
      %vm1224 = vmand %vm1160, %vm1192
      %vm1225 = vmand %vm1161, %vm1193
      %vm1226 = vmand %vm1162, %vm1194
      %v1227 = vsel %vm1195, 1, 0
      %v1228 = vsel %vm1196, 1, 0
      %v1229 = vsel %vm1197, 1, 0
      %v1230 = vsel %vm1198, 1, 0
      %v1231 = vsel %vm1199, 1, 0
      %v1232 = vsel %vm1200, 1, 0
      %v1233 = vsel %vm1201, 1, 0
      %v1234 = vsel %vm1202, 1, 0
      %v1235 = vsel %vm1203, 1, 0
      %v1236 = vsel %vm1204, 1, 0
      %v1237 = vsel %vm1205, 1, 0
      %v1238 = vsel %vm1206, 1, 0
      %v1239 = vsel %vm1207, 1, 0
      %v1240 = vsel %vm1208, 1, 0
      %v1241 = vsel %vm1209, 1, 0
      %v1242 = vsel %vm1210, 1, 0
      %v1243 = vsel %vm1211, 1, 0
      %v1244 = vsel %vm1212, 1, 0
      %v1245 = vsel %vm1213, 1, 0
      %v1246 = vsel %vm1214, 1, 0
      %v1247 = vsel %vm1215, 1, 0
      %v1248 = vsel %vm1216, 1, 0
      %v1249 = vsel %vm1217, 1, 0
      %v1250 = vsel %vm1218, 1, 0
      %v1251 = vsel %vm1219, 1, 0
      %v1252 = vsel %vm1220, 1, 0
      %v1253 = vsel %vm1221, 1, 0
      %v1254 = vsel %vm1222, 1, 0
      %v1255 = vsel %vm1223, 1, 0
      %v1256 = vsel %vm1224, 1, 0
      %v1257 = vsel %vm1225, 1, 0
      %v1258 = vsel %vm1226, 1, 0
      %vm1259 = vcmp.eq.s32.totalorder %v1227, 1
      %vm1260 = vcmp.eq.s32.totalorder %v1228, 1
      %vm1261 = vcmp.eq.s32.totalorder %v1229, 1
      %vm1262 = vcmp.eq.s32.totalorder %v1230, 1
      %vm1263 = vcmp.eq.s32.totalorder %v1231, 1
      %vm1264 = vcmp.eq.s32.totalorder %v1232, 1
      %vm1265 = vcmp.eq.s32.totalorder %v1233, 1
      %vm1266 = vcmp.eq.s32.totalorder %v1234, 1
      %vm1267 = vcmp.eq.s32.totalorder %v1235, 1
      %vm1268 = vcmp.eq.s32.totalorder %v1236, 1
      %vm1269 = vcmp.eq.s32.totalorder %v1237, 1
      %vm1270 = vcmp.eq.s32.totalorder %v1238, 1
      %vm1271 = vcmp.eq.s32.totalorder %v1239, 1
      %vm1272 = vcmp.eq.s32.totalorder %v1240, 1
      %vm1273 = vcmp.eq.s32.totalorder %v1241, 1
      %vm1274 = vcmp.eq.s32.totalorder %v1242, 1
      %vm1275 = vcmp.eq.s32.totalorder %v1243, 1
      %vm1276 = vcmp.eq.s32.totalorder %v1244, 1
      %vm1277 = vcmp.eq.s32.totalorder %v1245, 1
      %vm1278 = vcmp.eq.s32.totalorder %v1246, 1
      %vm1279 = vcmp.eq.s32.totalorder %v1247, 1
      %vm1280 = vcmp.eq.s32.totalorder %v1248, 1
      %vm1281 = vcmp.eq.s32.totalorder %v1249, 1
      %vm1282 = vcmp.eq.s32.totalorder %v1250, 1
      %vm1283 = vcmp.eq.s32.totalorder %v1251, 1
      %vm1284 = vcmp.eq.s32.totalorder %v1252, 1
      %vm1285 = vcmp.eq.s32.totalorder %v1253, 1
      %vm1286 = vcmp.eq.s32.totalorder %v1254, 1
      %vm1287 = vcmp.eq.s32.totalorder %v1255, 1
      %vm1288 = vcmp.eq.s32.totalorder %v1256, 1
      %vm1289 = vcmp.eq.s32.totalorder %v1257, 1
      %vm1290 = vcmp.eq.s32.totalorder %v1258, 1
      %v1291 = vsel %vm1259, %v390, 0.0
      %v1292 = vsel %vm1260, %v391, 0.0
      %v1293 = vsel %vm1261, %v360, 0.0
      %v1294 = vsel %vm1262, %v361, 0.0
      %v1295 = vsel %vm1263, %v362, 0.0
      %v1296 = vsel %vm1264, %v363, 0.0
      %v1297 = vsel %vm1265, %v364, 0.0
      %v1298 = vsel %vm1266, %v365, 0.0
      %v1299 = vsel %vm1267, %v366, 0.0
      %v1300 = vsel %vm1268, %v367, 0.0
      %v1301 = vsel %vm1269, %v368, 0.0
      %v1302 = vsel %vm1270, %v369, 0.0
      %v1303 = vsel %vm1271, %v370, 0.0
      %v1304 = vsel %vm1272, %v371, 0.0
      %v1305 = vsel %vm1273, %v372, 0.0
      %v1306 = vsel %vm1274, %v373, 0.0
      %v1307 = vsel %vm1275, %v374, 0.0
      %v1308 = vsel %vm1276, %v375, 0.0
      %v1309 = vsel %vm1277, %v376, 0.0
      %v1310 = vsel %vm1278, %v377, 0.0
      %v1311 = vsel %vm1279, %v378, 0.0
      %v1312 = vsel %vm1280, %v379, 0.0
      %v1313 = vsel %vm1281, %v380, 0.0
      %v1314 = vsel %vm1282, %v381, 0.0
      %v1315 = vsel %vm1283, %v382, 0.0
      %v1316 = vsel %vm1284, %v383, 0.0
      %v1317 = vsel %vm1285, %v384, 0.0
      %v1318 = vsel %vm1286, %v385, 0.0
      %v1319 = vsel %vm1287, %v386, 0.0
      %v1320 = vsel %vm1288, %v387, 0.0
      %v1321 = vsel %vm1289, %v388, 0.0
      %v1322 = vsel %vm1290, %v389, 0.0
      %s1323 = scalar_lea.vmem %s1, 8
      %v1324 = vld [vmem:[%s1323] sm:$0xff]
      %vm1325 = vcmask 64512
      %v1327 = vsel %vm1325, %v1291, 0
      %v1330 = vsel %vm1325, %v1292, 0
      %v1333 = vsel %vm1325, %v1293, 0
      %v1336 = vsel %vm1325, %v1294, 0
      %v1339 = vsel %vm1325, %v1295, 0
      %v1342 = vsel %vm1325, %v1296, 0
      %v1345 = vsel %vm1325, %v1297, 0
      %v1348 = vsel %vm1325, %v1298, 0
      %v1351 = vsel %vm1325, %v1299, 0
      %v1354 = vsel %vm1325, %v1300, 0
      %v1357 = vsel %vm1325, %v1301, 0
      %v1360 = vsel %vm1325, %v1302, 0
      %v1363 = vsel %vm1325, %v1303, 0
      %v1366 = vsel %vm1325, %v1304, 0
      %v1369 = vsel %vm1325, %v1305, 0
      %v1372 = vsel %vm1325, %v1306, 0
      %v1375 = vsel %vm1325, %v1307, 0
      %v1378 = vsel %vm1325, %v1308, 0
      %v1381 = vsel %vm1325, %v1309, 0
      %v1384 = vsel %vm1325, %v1310, 0
      %v1387 = vsel %vm1325, %v1311, 0
      %v1390 = vsel %vm1325, %v1312, 0
      %v1393 = vsel %vm1325, %v1313, 0
      %v1396 = vsel %vm1325, %v1314, 0
      %v1399 = vsel %vm1325, %v1315, 0
      %v1402 = vsel %vm1325, %v1316, 0
      %v1405 = vsel %vm1325, %v1317, 0
      %v1408 = vsel %vm1325, %v1318, 0
      %v1411 = vsel %vm1325, %v1319, 0
      %v1414 = vsel %vm1325, %v1320, 0
      %v1417 = vsel %vm1325, %v1321, 0
      %v1420 = vsel %vm1325, %v1322, 0
      %1422 = vmatpush.msra.mxu0 0.0
      %1423 = vmatpush.msra.mxu0 0.0
      %1424 = vmatpush.msra.mxu0 0.0
      %1425 = vmatpush.msra.mxu0 0.0
      %1426 = vmatpush.msra.mxu0 0.0
      %1427 = vmatpush.msra.mxu0 0.0
      %1428 = vmatpush.msra.mxu0 0.0
      %1429 = vmatpush.msra.mxu0 0.0
      %1430 = vmatpush.msra.mxu0 0.0
      %1431 = vmatpush.msra.mxu0 0.0
      %1432 = vmatpush.msra.mxu0 0.0
      %1433 = vmatpush.msra.mxu0 0.0
      %1434 = vmatpush.msra.mxu0 0.0
      %1435 = vmatpush.msra.mxu0 0.0
      %1436 = vmatpush.msra.mxu0 0.0
      %1437 = vmatpush.msra.mxu0 %v1324
      %1438 = vmatmul.f32.gmra.mxu0 %v1327
      %v1439 = vpop.f32.mrf.mxu0
      %v1440 = vadd.f32 0.0, %v1439
      %1441 = vmatmul.f32.gmra.mxu0 %v1330
      %v1442 = vpop.f32.mrf.mxu0
      %v1443 = vadd.f32 0.0, %v1442
      %1444 = vmatmul.f32.gmra.mxu0 %v1333
      %v1445 = vpop.f32.mrf.mxu0
      %v1446 = vadd.f32 0.0, %v1445
      %1447 = vmatmul.f32.gmra.mxu0 %v1336
      %v1448 = vpop.f32.mrf.mxu0
      %v1449 = vadd.f32 0.0, %v1448
      %1450 = vmatmul.f32.gmra.mxu0 %v1339
      %v1451 = vpop.f32.mrf.mxu0
      %v1452 = vadd.f32 0.0, %v1451
      %1453 = vmatmul.f32.gmra.mxu0 %v1342
      %v1454 = vpop.f32.mrf.mxu0
      %v1455 = vadd.f32 0.0, %v1454
      %1456 = vmatmul.f32.gmra.mxu0 %v1345
      %v1457 = vpop.f32.mrf.mxu0
      %v1458 = vadd.f32 0.0, %v1457
      %1459 = vmatmul.f32.gmra.mxu0 %v1348
      %v1460 = vpop.f32.mrf.mxu0
      %v1461 = vadd.f32 0.0, %v1460
      %1462 = vmatmul.f32.gmra.mxu0 %v1351
      %v1463 = vpop.f32.mrf.mxu0
      %v1464 = vadd.f32 0.0, %v1463
      %1465 = vmatmul.f32.gmra.mxu0 %v1354
      %v1466 = vpop.f32.mrf.mxu0
      %v1467 = vadd.f32 0.0, %v1466
      %1468 = vmatmul.f32.gmra.mxu0 %v1357
      %v1469 = vpop.f32.mrf.mxu0
      %v1470 = vadd.f32 0.0, %v1469
      %1471 = vmatmul.f32.gmra.mxu0 %v1360
      %v1472 = vpop.f32.mrf.mxu0
      %v1473 = vadd.f32 0.0, %v1472
      %1474 = vmatmul.f32.gmra.mxu0 %v1363
      %v1475 = vpop.f32.mrf.mxu0
      %v1476 = vadd.f32 0.0, %v1475
      %1477 = vmatmul.f32.gmra.mxu0 %v1366
      %v1478 = vpop.f32.mrf.mxu0
      %v1479 = vadd.f32 0.0, %v1478
      %1480 = vmatmul.f32.gmra.mxu0 %v1369
      %v1481 = vpop.f32.mrf.mxu0
      %v1482 = vadd.f32 0.0, %v1481
      %1483 = vmatmul.f32.gmra.mxu0 %v1372
      %v1484 = vpop.f32.mrf.mxu0
      %v1485 = vadd.f32 0.0, %v1484
      %1486 = vmatmul.f32.gmra.mxu0 %v1375
      %v1487 = vpop.f32.mrf.mxu0
      %v1488 = vadd.f32 0.0, %v1487
      %1489 = vmatmul.f32.gmra.mxu0 %v1378
      %v1490 = vpop.f32.mrf.mxu0
      %v1491 = vadd.f32 0.0, %v1490
      %1492 = vmatmul.f32.gmra.mxu0 %v1381
      %v1493 = vpop.f32.mrf.mxu0
      %v1494 = vadd.f32 0.0, %v1493
      %1495 = vmatmul.f32.gmra.mxu0 %v1384
      %v1496 = vpop.f32.mrf.mxu0
      %v1497 = vadd.f32 0.0, %v1496
      %1498 = vmatmul.f32.gmra.mxu0 %v1387
      %v1499 = vpop.f32.mrf.mxu0
      %v1500 = vadd.f32 0.0, %v1499
      %1501 = vmatmul.f32.gmra.mxu0 %v1390
      %v1502 = vpop.f32.mrf.mxu0
      %v1503 = vadd.f32 0.0, %v1502
      %1504 = vmatmul.f32.gmra.mxu0 %v1393
      %v1505 = vpop.f32.mrf.mxu0
      %v1506 = vadd.f32 0.0, %v1505
      %1507 = vmatmul.f32.gmra.mxu0 %v1396
      %v1508 = vpop.f32.mrf.mxu0
      %v1509 = vadd.f32 0.0, %v1508
      %1510 = vmatmul.f32.gmra.mxu0 %v1399
      %v1511 = vpop.f32.mrf.mxu0
      %v1512 = vadd.f32 0.0, %v1511
      %1513 = vmatmul.f32.gmra.mxu0 %v1402
      %v1514 = vpop.f32.mrf.mxu0
      %v1515 = vadd.f32 0.0, %v1514
      %1516 = vmatmul.f32.gmra.mxu0 %v1405
      %v1517 = vpop.f32.mrf.mxu0
      %v1518 = vadd.f32 0.0, %v1517
      %1519 = vmatmul.f32.gmra.mxu0 %v1408
      %v1520 = vpop.f32.mrf.mxu0
      %v1521 = vadd.f32 0.0, %v1520
      %1522 = vmatmul.f32.gmra.mxu0 %v1411
      %v1523 = vpop.f32.mrf.mxu0
      %v1524 = vadd.f32 0.0, %v1523
      %1525 = vmatmul.f32.gmra.mxu0 %v1414
      %v1526 = vpop.f32.mrf.mxu0
      %v1527 = vadd.f32 0.0, %v1526
      %1528 = vmatmul.f32.gmra.mxu0 %v1417
      %v1529 = vpop.f32.mrf.mxu0
      %v1530 = vadd.f32 0.0, %v1529
      %1531 = vmatmul.f32.gmra.mxu0 %v1420
      %v1532 = vpop.f32.mrf.mxu0
      %v1533 = vadd.f32 0.0, %v1532
      %1534 = vdwg.mxu0
      %v1536 = vsel %vm1325, %v1034, 0
      %v1539 = vsel %vm1325, %v1035, 0
      %v1542 = vsel %vm1325, %v1036, 0
      %v1545 = vsel %vm1325, %v1037, 0
      %v1548 = vsel %vm1325, %v1038, 0
      %v1551 = vsel %vm1325, %v1039, 0
      %v1554 = vsel %vm1325, %v1040, 0
      %v1557 = vsel %vm1325, %v1041, 0
      %v1560 = vsel %vm1325, %v1042, 0
      %v1563 = vsel %vm1325, %v1043, 0
      %v1566 = vsel %vm1325, %v1044, 0
      %v1569 = vsel %vm1325, %v1045, 0
      %v1572 = vsel %vm1325, %v1046, 0
      %v1575 = vsel %vm1325, %v1047, 0
      %v1578 = vsel %vm1325, %v1048, 0
      %v1581 = vsel %vm1325, %v1049, 0
      %v1584 = vsel %vm1325, %v1050, 0
      %v1587 = vsel %vm1325, %v1051, 0
      %v1590 = vsel %vm1325, %v1052, 0
      %v1593 = vsel %vm1325, %v1053, 0
      %v1596 = vsel %vm1325, %v1054, 0
      %v1599 = vsel %vm1325, %v1055, 0
      %v1602 = vsel %vm1325, %v1056, 0
      %v1605 = vsel %vm1325, %v1057, 0
      %v1608 = vsel %vm1325, %v1058, 0
      %v1611 = vsel %vm1325, %v1059, 0
      %v1614 = vsel %vm1325, %v1060, 0
      %v1617 = vsel %vm1325, %v1061, 0
      %v1620 = vsel %vm1325, %v1062, 0
      %v1623 = vsel %vm1325, %v1063, 0
      %v1626 = vsel %vm1325, %v1064, 0
      %v1629 = vsel %vm1325, %v1065, 0
      %1631 = vmatpush.msra.mxu0 0.0
      %1632 = vmatpush.msra.mxu0 0.0
      %1633 = vmatpush.msra.mxu0 0.0
      %1634 = vmatpush.msra.mxu0 0.0
      %1635 = vmatpush.msra.mxu0 0.0
      %1636 = vmatpush.msra.mxu0 0.0
      %1637 = vmatpush.msra.mxu0 0.0
      %1638 = vmatpush.msra.mxu0 0.0
      %1639 = vmatpush.msra.mxu0 0.0
      %1640 = vmatpush.msra.mxu0 0.0
      %1641 = vmatpush.msra.mxu0 0.0
      %1642 = vmatpush.msra.mxu0 0.0
      %1643 = vmatpush.msra.mxu0 0.0
      %1644 = vmatpush.msra.mxu0 0.0
      %1645 = vmatpush.msra.mxu0 0.0
      %1646 = vmatpush.msra.mxu0 %v1066
      %1647 = vmatmul.f32.gmra.mxu0 %v1536
      %v1648 = vpop.f32.mrf.mxu0
      %v1649 = vadd.f32 %v1440, %v1648
      %1650 = vmatmul.f32.gmra.mxu0 %v1539
      %v1651 = vpop.f32.mrf.mxu0
      %v1652 = vadd.f32 %v1443, %v1651
      %1653 = vmatmul.f32.gmra.mxu0 %v1542
      %v1654 = vpop.f32.mrf.mxu0
      %v1655 = vadd.f32 %v1446, %v1654
      %1656 = vmatmul.f32.gmra.mxu0 %v1545
      %v1657 = vpop.f32.mrf.mxu0
      %v1658 = vadd.f32 %v1449, %v1657
      %1659 = vmatmul.f32.gmra.mxu0 %v1548
      %v1660 = vpop.f32.mrf.mxu0
      %v1661 = vadd.f32 %v1452, %v1660
      %1662 = vmatmul.f32.gmra.mxu0 %v1551
      %v1663 = vpop.f32.mrf.mxu0
      %v1664 = vadd.f32 %v1455, %v1663
      %1665 = vmatmul.f32.gmra.mxu0 %v1554
      %v1666 = vpop.f32.mrf.mxu0
      %v1667 = vadd.f32 %v1458, %v1666
      %1668 = vmatmul.f32.gmra.mxu0 %v1557
      %v1669 = vpop.f32.mrf.mxu0
      %v1670 = vadd.f32 %v1461, %v1669
      %1671 = vmatmul.f32.gmra.mxu0 %v1560
      %v1672 = vpop.f32.mrf.mxu0
      %v1673 = vadd.f32 %v1464, %v1672
      %1674 = vmatmul.f32.gmra.mxu0 %v1563
      %v1675 = vpop.f32.mrf.mxu0
      %v1676 = vadd.f32 %v1467, %v1675
      %1677 = vmatmul.f32.gmra.mxu0 %v1566
      %v1678 = vpop.f32.mrf.mxu0
      %v1679 = vadd.f32 %v1470, %v1678
      %1680 = vmatmul.f32.gmra.mxu0 %v1569
      %v1681 = vpop.f32.mrf.mxu0
      %v1682 = vadd.f32 %v1473, %v1681
      %1683 = vmatmul.f32.gmra.mxu0 %v1572
      %v1684 = vpop.f32.mrf.mxu0
      %v1685 = vadd.f32 %v1476, %v1684
      %1686 = vmatmul.f32.gmra.mxu0 %v1575
      %v1687 = vpop.f32.mrf.mxu0
      %v1688 = vadd.f32 %v1479, %v1687
      %1689 = vmatmul.f32.gmra.mxu0 %v1578
      %v1690 = vpop.f32.mrf.mxu0
      %v1691 = vadd.f32 %v1482, %v1690
      %1692 = vmatmul.f32.gmra.mxu0 %v1581
      %v1693 = vpop.f32.mrf.mxu0
      %v1694 = vadd.f32 %v1485, %v1693
      %1695 = vmatmul.f32.gmra.mxu0 %v1584
      %v1696 = vpop.f32.mrf.mxu0
      %v1697 = vadd.f32 %v1488, %v1696
      %1698 = vmatmul.f32.gmra.mxu0 %v1587
      %v1699 = vpop.f32.mrf.mxu0
      %v1700 = vadd.f32 %v1491, %v1699
      %1701 = vmatmul.f32.gmra.mxu0 %v1590
      %v1702 = vpop.f32.mrf.mxu0
      %v1703 = vadd.f32 %v1494, %v1702
      %1704 = vmatmul.f32.gmra.mxu0 %v1593
      %v1705 = vpop.f32.mrf.mxu0
      %v1706 = vadd.f32 %v1497, %v1705
      %1707 = vmatmul.f32.gmra.mxu0 %v1596
      %v1708 = vpop.f32.mrf.mxu0
      %v1709 = vadd.f32 %v1500, %v1708
      %1710 = vmatmul.f32.gmra.mxu0 %v1599
      %v1711 = vpop.f32.mrf.mxu0
      %v1712 = vadd.f32 %v1503, %v1711
      %1713 = vmatmul.f32.gmra.mxu0 %v1602
      %v1714 = vpop.f32.mrf.mxu0
      %v1715 = vadd.f32 %v1506, %v1714
      %1716 = vmatmul.f32.gmra.mxu0 %v1605
      %v1717 = vpop.f32.mrf.mxu0
      %v1718 = vadd.f32 %v1509, %v1717
      %1719 = vmatmul.f32.gmra.mxu0 %v1608
      %v1720 = vpop.f32.mrf.mxu0
      %v1721 = vadd.f32 %v1512, %v1720
      %1722 = vmatmul.f32.gmra.mxu0 %v1611
      %v1723 = vpop.f32.mrf.mxu0
      %v1724 = vadd.f32 %v1515, %v1723
      %1725 = vmatmul.f32.gmra.mxu0 %v1614
      %v1726 = vpop.f32.mrf.mxu0
      %v1727 = vadd.f32 %v1518, %v1726
      %1728 = vmatmul.f32.gmra.mxu0 %v1617
      %v1729 = vpop.f32.mrf.mxu0
      %v1730 = vadd.f32 %v1521, %v1729
      %1731 = vmatmul.f32.gmra.mxu0 %v1620
      %v1732 = vpop.f32.mrf.mxu0
      %v1733 = vadd.f32 %v1524, %v1732
      %1734 = vmatmul.f32.gmra.mxu0 %v1623
      %v1735 = vpop.f32.mrf.mxu0
      %v1736 = vadd.f32 %v1527, %v1735
      %1737 = vmatmul.f32.gmra.mxu0 %v1626
      %v1738 = vpop.f32.mrf.mxu0
      %v1739 = vadd.f32 %v1530, %v1738
      %1740 = vmatmul.f32.gmra.mxu0 %v1629
      %v1741 = vpop.f32.mrf.mxu0
      %v1742 = vadd.f32 %v1533, %v1741
      %1743 = vdwg.mxu0
      %v1744 = vrot.slane %v360, 1
      %v1745 = vrot.slane %v361, 1
      %v1746 = vrot.slane %v362, 1
      %v1747 = vrot.slane %v363, 1
      %v1748 = vrot.slane %v364, 1
      %v1749 = vrot.slane %v365, 1
      %v1750 = vrot.slane %v366, 1
      %v1751 = vrot.slane %v367, 1
      %v1752 = vrot.slane %v368, 1
      %v1753 = vrot.slane %v369, 1
      %v1754 = vrot.slane %v370, 1
      %v1755 = vrot.slane %v371, 1
      %v1756 = vrot.slane %v372, 1
      %v1757 = vrot.slane %v373, 1
      %v1758 = vrot.slane %v374, 1
      %v1759 = vrot.slane %v375, 1
      %v1760 = vrot.slane %v376, 1
      %v1761 = vrot.slane %v377, 1
      %v1762 = vrot.slane %v378, 1
      %v1763 = vrot.slane %v379, 1
      %v1764 = vrot.slane %v380, 1
      %v1765 = vrot.slane %v381, 1
      %v1766 = vrot.slane %v382, 1
      %v1767 = vrot.slane %v383, 1
      %v1768 = vrot.slane %v384, 1
      %v1769 = vrot.slane %v385, 1
      %v1770 = vrot.slane %v386, 1
      %v1771 = vrot.slane %v387, 1
      %v1772 = vrot.slane %v388, 1
      %v1773 = vrot.slane %v389, 1
      %v1774 = vrot.slane %v390, 1
      %v1775 = vrot.slane %v391, 1
      %vm1776 = vcmp.lt.s32.totalorder %v393, 7
      %v1777 = vsel %vm1776, %v1774, %v1775
      %v1778 = vsel %vm1776, %v1773, %v1774
      %v1779 = vsel %vm1776, %v1772, %v1773
      %v1780 = vsel %vm1776, %v1771, %v1772
      %v1781 = vsel %vm1776, %v1770, %v1771
      %v1782 = vsel %vm1776, %v1769, %v1770
      %v1783 = vsel %vm1776, %v1768, %v1769
      %v1784 = vsel %vm1776, %v1767, %v1768
      %v1785 = vsel %vm1776, %v1766, %v1767
      %v1786 = vsel %vm1776, %v1765, %v1766
      %v1787 = vsel %vm1776, %v1764, %v1765
      %v1788 = vsel %vm1776, %v1763, %v1764
      %v1789 = vsel %vm1776, %v1762, %v1763
      %v1790 = vsel %vm1776, %v1761, %v1762
      %v1791 = vsel %vm1776, %v1760, %v1761
      %v1792 = vsel %vm1776, %v1759, %v1760
      %v1793 = vsel %vm1776, %v1758, %v1759
      %v1794 = vsel %vm1776, %v1757, %v1758
      %v1795 = vsel %vm1776, %v1756, %v1757
      %v1796 = vsel %vm1776, %v1755, %v1756
      %v1797 = vsel %vm1776, %v1754, %v1755
      %v1798 = vsel %vm1776, %v1753, %v1754
      %v1799 = vsel %vm1776, %v1752, %v1753
      %v1800 = vsel %vm1776, %v1751, %v1752
      %v1801 = vsel %vm1776, %v1750, %v1751
      %v1802 = vsel %vm1776, %v1749, %v1750
      %v1803 = vsel %vm1776, %v1748, %v1749
      %v1804 = vsel %vm1776, %v1747, %v1748
      %v1805 = vsel %vm1776, %v1746, %v1747
      %v1806 = vsel %vm1776, %v1745, %v1746
      %v1807 = vsel %vm1776, %v1744, %v1745
      %v1808 = vsel %vm1776, %v1775, %v1744
      %v1809 = vadd.f32 %v585, 1.0
      %v1810 = vadd.f32 %v586, 1.0
      %v1811 = vadd.f32 %v587, 1.0
      %v1812 = vadd.f32 %v588, 1.0
      %v1813 = vadd.f32 %v589, 1.0
      %v1814 = vadd.f32 %v590, 1.0
      %v1815 = vadd.f32 %v591, 1.0
      %v1816 = vadd.f32 %v592, 1.0
      %v1817 = vadd.f32 %v593, 1.0
      %v1818 = vadd.f32 %v594, 1.0
      %v1819 = vadd.f32 %v595, 1.0
      %v1820 = vadd.f32 %v596, 1.0
      %v1821 = vadd.f32 %v597, 1.0
      %v1822 = vadd.f32 %v598, 1.0
      %v1823 = vadd.f32 %v599, 1.0
      %v1824 = vadd.f32 %v600, 1.0
      %v1825 = vadd.f32 %v601, 1.0
      %v1826 = vadd.f32 %v602, 1.0
      %v1827 = vadd.f32 %v603, 1.0
      %v1828 = vadd.f32 %v604, 1.0
      %v1829 = vadd.f32 %v605, 1.0
      %v1830 = vadd.f32 %v606, 1.0
      %v1831 = vadd.f32 %v607, 1.0
      %v1832 = vadd.f32 %v608, 1.0
      %v1833 = vadd.f32 %v609, 1.0
      %v1834 = vadd.f32 %v610, 1.0
      %v1835 = vadd.f32 %v611, 1.0
      %v1836 = vadd.f32 %v612, 1.0
      %v1837 = vadd.f32 %v613, 1.0
      %v1838 = vadd.f32 %v614, 1.0
      %v1839 = vadd.f32 %v615, 1.0
      %v1840 = vadd.f32 %v616, 1.0
      %vm1841 = vcmp.gt.f32.partialorder %v1809, -0.5
      %vm1842 = vcmp.gt.f32.partialorder %v1810, -0.5
      %vm1843 = vcmp.gt.f32.partialorder %v1811, -0.5
      %vm1844 = vcmp.gt.f32.partialorder %v1812, -0.5
      %vm1845 = vcmp.gt.f32.partialorder %v1813, -0.5
      %vm1846 = vcmp.gt.f32.partialorder %v1814, -0.5
      %vm1847 = vcmp.gt.f32.partialorder %v1815, -0.5
      %vm1848 = vcmp.gt.f32.partialorder %v1816, -0.5
      %vm1849 = vcmp.gt.f32.partialorder %v1817, -0.5
      %vm1850 = vcmp.gt.f32.partialorder %v1818, -0.5
      %vm1851 = vcmp.gt.f32.partialorder %v1819, -0.5
      %vm1852 = vcmp.gt.f32.partialorder %v1820, -0.5
      %vm1853 = vcmp.gt.f32.partialorder %v1821, -0.5
      %vm1854 = vcmp.gt.f32.partialorder %v1822, -0.5
      %vm1855 = vcmp.gt.f32.partialorder %v1823, -0.5
      %vm1856 = vcmp.gt.f32.partialorder %v1824, -0.5
      %vm1857 = vcmp.gt.f32.partialorder %v1825, -0.5
      %vm1858 = vcmp.gt.f32.partialorder %v1826, -0.5
      %vm1859 = vcmp.gt.f32.partialorder %v1827, -0.5
      %vm1860 = vcmp.gt.f32.partialorder %v1828, -0.5
      %vm1861 = vcmp.gt.f32.partialorder %v1829, -0.5
      %vm1862 = vcmp.gt.f32.partialorder %v1830, -0.5
      %vm1863 = vcmp.gt.f32.partialorder %v1831, -0.5
      %vm1864 = vcmp.gt.f32.partialorder %v1832, -0.5
      %vm1865 = vcmp.gt.f32.partialorder %v1833, -0.5
      %vm1866 = vcmp.gt.f32.partialorder %v1834, -0.5
      %vm1867 = vcmp.gt.f32.partialorder %v1835, -0.5
      %vm1868 = vcmp.gt.f32.partialorder %v1836, -0.5
      %vm1869 = vcmp.gt.f32.partialorder %v1837, -0.5
      %vm1870 = vcmp.gt.f32.partialorder %v1838, -0.5
      %vm1871 = vcmp.gt.f32.partialorder %v1839, -0.5
      %vm1872 = vcmp.gt.f32.partialorder %v1840, -0.5
      %vm1873 = vmand %vm810, %vm1841
      %vm1874 = vmand %vm811, %vm1842
      %vm1875 = vmand %vm812, %vm1843
      %vm1876 = vmand %vm813, %vm1844
      %vm1877 = vmand %vm814, %vm1845
      %vm1878 = vmand %vm815, %vm1846
      %vm1879 = vmand %vm816, %vm1847
      %vm1880 = vmand %vm817, %vm1848
      %vm1881 = vmand %vm818, %vm1849
      %vm1882 = vmand %vm819, %vm1850
      %vm1883 = vmand %vm820, %vm1851
      %vm1884 = vmand %vm821, %vm1852
      %vm1885 = vmand %vm822, %vm1853
      %vm1886 = vmand %vm823, %vm1854
      %vm1887 = vmand %vm824, %vm1855
      %vm1888 = vmand %vm825, %vm1856
      %vm1889 = vmand %vm826, %vm1857
      %vm1890 = vmand %vm827, %vm1858
      %vm1891 = vmand %vm828, %vm1859
      %vm1892 = vmand %vm829, %vm1860
      %vm1893 = vmand %vm830, %vm1861
      %vm1894 = vmand %vm831, %vm1862
      %vm1895 = vmand %vm832, %vm1863
      %vm1896 = vmand %vm833, %vm1864
      %vm1897 = vmand %vm834, %vm1865
      %vm1898 = vmand %vm835, %vm1866
      %vm1899 = vmand %vm836, %vm1867
      %vm1900 = vmand %vm837, %vm1868
      %vm1901 = vmand %vm838, %vm1869
      %vm1902 = vmand %vm839, %vm1870
      %vm1903 = vmand %vm840, %vm1871
      %vm1904 = vmand %vm841, %vm1872
      %vm1905 = vcmp.lt.f32.partialorder %v1809, 15.5
      %vm1906 = vcmp.lt.f32.partialorder %v1810, 15.5
      %vm1907 = vcmp.lt.f32.partialorder %v1811, 15.5
      %vm1908 = vcmp.lt.f32.partialorder %v1812, 15.5
      %vm1909 = vcmp.lt.f32.partialorder %v1813, 15.5
      %vm1910 = vcmp.lt.f32.partialorder %v1814, 15.5
      %vm1911 = vcmp.lt.f32.partialorder %v1815, 15.5
      %vm1912 = vcmp.lt.f32.partialorder %v1816, 15.5
      %vm1913 = vcmp.lt.f32.partialorder %v1817, 15.5
      %vm1914 = vcmp.lt.f32.partialorder %v1818, 15.5
      %vm1915 = vcmp.lt.f32.partialorder %v1819, 15.5
      %vm1916 = vcmp.lt.f32.partialorder %v1820, 15.5
      %vm1917 = vcmp.lt.f32.partialorder %v1821, 15.5
      %vm1918 = vcmp.lt.f32.partialorder %v1822, 15.5
      %vm1919 = vcmp.lt.f32.partialorder %v1823, 15.5
      %vm1920 = vcmp.lt.f32.partialorder %v1824, 15.5
      %vm1921 = vcmp.lt.f32.partialorder %v1825, 15.5
      %vm1922 = vcmp.lt.f32.partialorder %v1826, 15.5
      %vm1923 = vcmp.lt.f32.partialorder %v1827, 15.5
      %vm1924 = vcmp.lt.f32.partialorder %v1828, 15.5
      %vm1925 = vcmp.lt.f32.partialorder %v1829, 15.5
      %vm1926 = vcmp.lt.f32.partialorder %v1830, 15.5
      %vm1927 = vcmp.lt.f32.partialorder %v1831, 15.5
      %vm1928 = vcmp.lt.f32.partialorder %v1832, 15.5
      %vm1929 = vcmp.lt.f32.partialorder %v1833, 15.5
      %vm1930 = vcmp.lt.f32.partialorder %v1834, 15.5
      %vm1931 = vcmp.lt.f32.partialorder %v1835, 15.5
      %vm1932 = vcmp.lt.f32.partialorder %v1836, 15.5
      %vm1933 = vcmp.lt.f32.partialorder %v1837, 15.5
      %vm1934 = vcmp.lt.f32.partialorder %v1838, 15.5
      %vm1935 = vcmp.lt.f32.partialorder %v1839, 15.5
      %vm1936 = vcmp.lt.f32.partialorder %v1840, 15.5
      %vm1937 = vmand %vm1873, %vm1905
      %vm1938 = vmand %vm1874, %vm1906
      %vm1939 = vmand %vm1875, %vm1907
      %vm1940 = vmand %vm1876, %vm1908
      %vm1941 = vmand %vm1877, %vm1909
      %vm1942 = vmand %vm1878, %vm1910
      %vm1943 = vmand %vm1879, %vm1911
      %vm1944 = vmand %vm1880, %vm1912
      %vm1945 = vmand %vm1881, %vm1913
      %vm1946 = vmand %vm1882, %vm1914
      %vm1947 = vmand %vm1883, %vm1915
      %vm1948 = vmand %vm1884, %vm1916
      %vm1949 = vmand %vm1885, %vm1917
      %vm1950 = vmand %vm1886, %vm1918
      %vm1951 = vmand %vm1887, %vm1919
      %vm1952 = vmand %vm1888, %vm1920
      %vm1953 = vmand %vm1889, %vm1921
      %vm1954 = vmand %vm1890, %vm1922
      %vm1955 = vmand %vm1891, %vm1923
      %vm1956 = vmand %vm1892, %vm1924
      %vm1957 = vmand %vm1893, %vm1925
      %vm1958 = vmand %vm1894, %vm1926
      %vm1959 = vmand %vm1895, %vm1927
      %vm1960 = vmand %vm1896, %vm1928
      %vm1961 = vmand %vm1897, %vm1929
      %vm1962 = vmand %vm1898, %vm1930
      %vm1963 = vmand %vm1899, %vm1931
      %vm1964 = vmand %vm1900, %vm1932
      %vm1965 = vmand %vm1901, %vm1933
      %vm1966 = vmand %vm1902, %vm1934
      %vm1967 = vmand %vm1903, %vm1935
      %vm1968 = vmand %vm1904, %vm1936
      %v1969 = vsel %vm1937, 1, 0
      %v1970 = vsel %vm1938, 1, 0
      %v1971 = vsel %vm1939, 1, 0
      %v1972 = vsel %vm1940, 1, 0
      %v1973 = vsel %vm1941, 1, 0
      %v1974 = vsel %vm1942, 1, 0
      %v1975 = vsel %vm1943, 1, 0
      %v1976 = vsel %vm1944, 1, 0
      %v1977 = vsel %vm1945, 1, 0
      %v1978 = vsel %vm1946, 1, 0
      %v1979 = vsel %vm1947, 1, 0
      %v1980 = vsel %vm1948, 1, 0
      %v1981 = vsel %vm1949, 1, 0
      %v1982 = vsel %vm1950, 1, 0
      %v1983 = vsel %vm1951, 1, 0
      %v1984 = vsel %vm1952, 1, 0
      %v1985 = vsel %vm1953, 1, 0
      %v1986 = vsel %vm1954, 1, 0
      %v1987 = vsel %vm1955, 1, 0
      %v1988 = vsel %vm1956, 1, 0
      %v1989 = vsel %vm1957, 1, 0
      %v1990 = vsel %vm1958, 1, 0
      %v1991 = vsel %vm1959, 1, 0
      %v1992 = vsel %vm1960, 1, 0
      %v1993 = vsel %vm1961, 1, 0
      %v1994 = vsel %vm1962, 1, 0
      %v1995 = vsel %vm1963, 1, 0
      %v1996 = vsel %vm1964, 1, 0
      %v1997 = vsel %vm1965, 1, 0
      %v1998 = vsel %vm1966, 1, 0
      %v1999 = vsel %vm1967, 1, 0
      %v2000 = vsel %vm1968, 1, 0
      %vm2001 = vcmp.eq.s32.totalorder %v1969, 1
      %vm2002 = vcmp.eq.s32.totalorder %v1970, 1
      %vm2003 = vcmp.eq.s32.totalorder %v1971, 1
      %vm2004 = vcmp.eq.s32.totalorder %v1972, 1
      %vm2005 = vcmp.eq.s32.totalorder %v1973, 1
      %vm2006 = vcmp.eq.s32.totalorder %v1974, 1
      %vm2007 = vcmp.eq.s32.totalorder %v1975, 1
      %vm2008 = vcmp.eq.s32.totalorder %v1976, 1
      %vm2009 = vcmp.eq.s32.totalorder %v1977, 1
      %vm2010 = vcmp.eq.s32.totalorder %v1978, 1
      %vm2011 = vcmp.eq.s32.totalorder %v1979, 1
      %vm2012 = vcmp.eq.s32.totalorder %v1980, 1
      %vm2013 = vcmp.eq.s32.totalorder %v1981, 1
      %vm2014 = vcmp.eq.s32.totalorder %v1982, 1
      %vm2015 = vcmp.eq.s32.totalorder %v1983, 1
      %vm2016 = vcmp.eq.s32.totalorder %v1984, 1
      %vm2017 = vcmp.eq.s32.totalorder %v1985, 1
      %vm2018 = vcmp.eq.s32.totalorder %v1986, 1
      %vm2019 = vcmp.eq.s32.totalorder %v1987, 1
      %vm2020 = vcmp.eq.s32.totalorder %v1988, 1
      %vm2021 = vcmp.eq.s32.totalorder %v1989, 1
      %vm2022 = vcmp.eq.s32.totalorder %v1990, 1
      %vm2023 = vcmp.eq.s32.totalorder %v1991, 1
      %vm2024 = vcmp.eq.s32.totalorder %v1992, 1
      %vm2025 = vcmp.eq.s32.totalorder %v1993, 1
      %vm2026 = vcmp.eq.s32.totalorder %v1994, 1
      %vm2027 = vcmp.eq.s32.totalorder %v1995, 1
      %vm2028 = vcmp.eq.s32.totalorder %v1996, 1
      %vm2029 = vcmp.eq.s32.totalorder %v1997, 1
      %vm2030 = vcmp.eq.s32.totalorder %v1998, 1
      %vm2031 = vcmp.eq.s32.totalorder %v1999, 1
      %vm2032 = vcmp.eq.s32.totalorder %v2000, 1
      %v2033 = vsel %vm2001, %v1777, 0.0
      %v2034 = vsel %vm2002, %v1808, 0.0
      %v2035 = vsel %vm2003, %v1807, 0.0
      %v2036 = vsel %vm2004, %v1806, 0.0
      %v2037 = vsel %vm2005, %v1805, 0.0
      %v2038 = vsel %vm2006, %v1804, 0.0
      %v2039 = vsel %vm2007, %v1803, 0.0
      %v2040 = vsel %vm2008, %v1802, 0.0
      %v2041 = vsel %vm2009, %v1801, 0.0
      %v2042 = vsel %vm2010, %v1800, 0.0
      %v2043 = vsel %vm2011, %v1799, 0.0
      %v2044 = vsel %vm2012, %v1798, 0.0
      %v2045 = vsel %vm2013, %v1797, 0.0
      %v2046 = vsel %vm2014, %v1796, 0.0
      %v2047 = vsel %vm2015, %v1795, 0.0
      %v2048 = vsel %vm2016, %v1794, 0.0
      %v2049 = vsel %vm2017, %v1793, 0.0
      %v2050 = vsel %vm2018, %v1792, 0.0
      %v2051 = vsel %vm2019, %v1791, 0.0
      %v2052 = vsel %vm2020, %v1790, 0.0
      %v2053 = vsel %vm2021, %v1789, 0.0
      %v2054 = vsel %vm2022, %v1788, 0.0
      %v2055 = vsel %vm2023, %v1787, 0.0
      %v2056 = vsel %vm2024, %v1786, 0.0
      %v2057 = vsel %vm2025, %v1785, 0.0
      %v2058 = vsel %vm2026, %v1784, 0.0
      %v2059 = vsel %vm2027, %v1783, 0.0
      %v2060 = vsel %vm2028, %v1782, 0.0
      %v2061 = vsel %vm2029, %v1781, 0.0
      %v2062 = vsel %vm2030, %v1780, 0.0
      %v2063 = vsel %vm2031, %v1779, 0.0
      %v2064 = vsel %vm2032, %v1778, 0.0
      %s2065 = scalar_lea.vmem %s1, 16
      %v2066 = vld [vmem:[%s2065] sm:$0xff]
      %v2068 = vsel %vm1325, %v2033, 0
      %v2071 = vsel %vm1325, %v2034, 0
      %v2074 = vsel %vm1325, %v2035, 0
      %v2077 = vsel %vm1325, %v2036, 0
      %v2080 = vsel %vm1325, %v2037, 0
      %v2083 = vsel %vm1325, %v2038, 0
      %v2086 = vsel %vm1325, %v2039, 0
      %v2089 = vsel %vm1325, %v2040, 0
      %v2092 = vsel %vm1325, %v2041, 0
      %v2095 = vsel %vm1325, %v2042, 0
      %v2098 = vsel %vm1325, %v2043, 0
      %v2101 = vsel %vm1325, %v2044, 0
      %v2104 = vsel %vm1325, %v2045, 0
      %v2107 = vsel %vm1325, %v2046, 0
      %v2110 = vsel %vm1325, %v2047, 0
      %v2113 = vsel %vm1325, %v2048, 0
      %v2116 = vsel %vm1325, %v2049, 0
      %v2119 = vsel %vm1325, %v2050, 0
      %v2122 = vsel %vm1325, %v2051, 0
      %v2125 = vsel %vm1325, %v2052, 0
      %v2128 = vsel %vm1325, %v2053, 0
      %v2131 = vsel %vm1325, %v2054, 0
      %v2134 = vsel %vm1325, %v2055, 0
      %v2137 = vsel %vm1325, %v2056, 0
      %v2140 = vsel %vm1325, %v2057, 0
      %v2143 = vsel %vm1325, %v2058, 0
      %v2146 = vsel %vm1325, %v2059, 0
      %v2149 = vsel %vm1325, %v2060, 0
      %v2152 = vsel %vm1325, %v2061, 0
      %v2155 = vsel %vm1325, %v2062, 0
      %v2158 = vsel %vm1325, %v2063, 0
      %v2161 = vsel %vm1325, %v2064, 0
      %2163 = vmatpush.msra.mxu0 0.0
      %2164 = vmatpush.msra.mxu0 0.0
      %2165 = vmatpush.msra.mxu0 0.0
      %2166 = vmatpush.msra.mxu0 0.0
      %2167 = vmatpush.msra.mxu0 0.0
      %2168 = vmatpush.msra.mxu0 0.0
      %2169 = vmatpush.msra.mxu0 0.0
      %2170 = vmatpush.msra.mxu0 0.0
      %2171 = vmatpush.msra.mxu0 0.0
      %2172 = vmatpush.msra.mxu0 0.0
      %2173 = vmatpush.msra.mxu0 0.0
      %2174 = vmatpush.msra.mxu0 0.0
      %2175 = vmatpush.msra.mxu0 0.0
      %2176 = vmatpush.msra.mxu0 0.0
      %2177 = vmatpush.msra.mxu0 0.0
      %2178 = vmatpush.msra.mxu0 %v2066
      %2179 = vmatmul.f32.gmra.mxu0 %v2068
      %v2180 = vpop.f32.mrf.mxu0
      %v2181 = vadd.f32 0.0, %v2180
      %2182 = vmatmul.f32.gmra.mxu0 %v2071
      %v2183 = vpop.f32.mrf.mxu0
      %v2184 = vadd.f32 0.0, %v2183
      %2185 = vmatmul.f32.gmra.mxu0 %v2074
      %v2186 = vpop.f32.mrf.mxu0
      %v2187 = vadd.f32 0.0, %v2186
      %2188 = vmatmul.f32.gmra.mxu0 %v2077
      %v2189 = vpop.f32.mrf.mxu0
      %v2190 = vadd.f32 0.0, %v2189
      %2191 = vmatmul.f32.gmra.mxu0 %v2080
      %v2192 = vpop.f32.mrf.mxu0
      %v2193 = vadd.f32 0.0, %v2192
      %2194 = vmatmul.f32.gmra.mxu0 %v2083
      %v2195 = vpop.f32.mrf.mxu0
      %v2196 = vadd.f32 0.0, %v2195
      %2197 = vmatmul.f32.gmra.mxu0 %v2086
      %v2198 = vpop.f32.mrf.mxu0
      %v2199 = vadd.f32 0.0, %v2198
      %2200 = vmatmul.f32.gmra.mxu0 %v2089
      %v2201 = vpop.f32.mrf.mxu0
      %v2202 = vadd.f32 0.0, %v2201
      %2203 = vmatmul.f32.gmra.mxu0 %v2092
      %v2204 = vpop.f32.mrf.mxu0
      %v2205 = vadd.f32 0.0, %v2204
      %2206 = vmatmul.f32.gmra.mxu0 %v2095
      %v2207 = vpop.f32.mrf.mxu0
      %v2208 = vadd.f32 0.0, %v2207
      %2209 = vmatmul.f32.gmra.mxu0 %v2098
      %v2210 = vpop.f32.mrf.mxu0
      %v2211 = vadd.f32 0.0, %v2210
      %2212 = vmatmul.f32.gmra.mxu0 %v2101
      %v2213 = vpop.f32.mrf.mxu0
      %v2214 = vadd.f32 0.0, %v2213
      %2215 = vmatmul.f32.gmra.mxu0 %v2104
      %v2216 = vpop.f32.mrf.mxu0
      %v2217 = vadd.f32 0.0, %v2216
      %2218 = vmatmul.f32.gmra.mxu0 %v2107
      %v2219 = vpop.f32.mrf.mxu0
      %v2220 = vadd.f32 0.0, %v2219
      %2221 = vmatmul.f32.gmra.mxu0 %v2110
      %v2222 = vpop.f32.mrf.mxu0
      %v2223 = vadd.f32 0.0, %v2222
      %2224 = vmatmul.f32.gmra.mxu0 %v2113
      %v2225 = vpop.f32.mrf.mxu0
      %v2226 = vadd.f32 0.0, %v2225
      %2227 = vmatmul.f32.gmra.mxu0 %v2116
      %v2228 = vpop.f32.mrf.mxu0
      %v2229 = vadd.f32 0.0, %v2228
      %2230 = vmatmul.f32.gmra.mxu0 %v2119
      %v2231 = vpop.f32.mrf.mxu0
      %v2232 = vadd.f32 0.0, %v2231
      %2233 = vmatmul.f32.gmra.mxu0 %v2122
      %v2234 = vpop.f32.mrf.mxu0
      %v2235 = vadd.f32 0.0, %v2234
      %2236 = vmatmul.f32.gmra.mxu0 %v2125
      %v2237 = vpop.f32.mrf.mxu0
      %v2238 = vadd.f32 0.0, %v2237
      %2239 = vmatmul.f32.gmra.mxu0 %v2128
      %v2240 = vpop.f32.mrf.mxu0
      %v2241 = vadd.f32 0.0, %v2240
      %2242 = vmatmul.f32.gmra.mxu0 %v2131
      %v2243 = vpop.f32.mrf.mxu0
      %v2244 = vadd.f32 0.0, %v2243
      %2245 = vmatmul.f32.gmra.mxu0 %v2134
      %v2246 = vpop.f32.mrf.mxu0
      %v2247 = vadd.f32 0.0, %v2246
      %2248 = vmatmul.f32.gmra.mxu0 %v2137
      %v2249 = vpop.f32.mrf.mxu0
      %v2250 = vadd.f32 0.0, %v2249
      %2251 = vmatmul.f32.gmra.mxu0 %v2140
      %v2252 = vpop.f32.mrf.mxu0
      %v2253 = vadd.f32 0.0, %v2252
      %2254 = vmatmul.f32.gmra.mxu0 %v2143
      %v2255 = vpop.f32.mrf.mxu0
      %v2256 = vadd.f32 0.0, %v2255
      %2257 = vmatmul.f32.gmra.mxu0 %v2146
      %v2258 = vpop.f32.mrf.mxu0
      %v2259 = vadd.f32 0.0, %v2258
      %2260 = vmatmul.f32.gmra.mxu0 %v2149
      %v2261 = vpop.f32.mrf.mxu0
      %v2262 = vadd.f32 0.0, %v2261
      %2263 = vmatmul.f32.gmra.mxu0 %v2152
      %v2264 = vpop.f32.mrf.mxu0
      %v2265 = vadd.f32 0.0, %v2264
      %2266 = vmatmul.f32.gmra.mxu0 %v2155
      %v2267 = vpop.f32.mrf.mxu0
      %v2268 = vadd.f32 0.0, %v2267
      %2269 = vmatmul.f32.gmra.mxu0 %v2158
      %v2270 = vpop.f32.mrf.mxu0
      %v2271 = vadd.f32 0.0, %v2270
      %2272 = vmatmul.f32.gmra.mxu0 %v2161
      %v2273 = vpop.f32.mrf.mxu0
      %v2274 = vadd.f32 0.0, %v2273
      %2275 = vdwg.mxu0
      %v2276 = vadd.f32 %v1649, %v2181
      %v2277 = vadd.f32 %v1652, %v2184
      %v2278 = vadd.f32 %v1655, %v2187
      %v2279 = vadd.f32 %v1658, %v2190
      %v2280 = vadd.f32 %v1661, %v2193
      %v2281 = vadd.f32 %v1664, %v2196
      %v2282 = vadd.f32 %v1667, %v2199
      %v2283 = vadd.f32 %v1670, %v2202
      %v2284 = vadd.f32 %v1673, %v2205
      %v2285 = vadd.f32 %v1676, %v2208
      %v2286 = vadd.f32 %v1679, %v2211
      %v2287 = vadd.f32 %v1682, %v2214
      %v2288 = vadd.f32 %v1685, %v2217
      %v2289 = vadd.f32 %v1688, %v2220
      %v2290 = vadd.f32 %v1691, %v2223
      %v2291 = vadd.f32 %v1694, %v2226
      %v2292 = vadd.f32 %v1697, %v2229
      %v2293 = vadd.f32 %v1700, %v2232
      %v2294 = vadd.f32 %v1703, %v2235
      %v2295 = vadd.f32 %v1706, %v2238
      %v2296 = vadd.f32 %v1709, %v2241
      %v2297 = vadd.f32 %v1712, %v2244
      %v2298 = vadd.f32 %v1715, %v2247
      %v2299 = vadd.f32 %v1718, %v2250
      %v2300 = vadd.f32 %v1721, %v2253
      %v2301 = vadd.f32 %v1724, %v2256
      %v2302 = vadd.f32 %v1727, %v2259
      %v2303 = vadd.f32 %v1730, %v2262
      %v2304 = vadd.f32 %v1733, %v2265
      %v2305 = vadd.f32 %v1736, %v2268
      %v2306 = vadd.f32 %v1739, %v2271
      %v2307 = vadd.f32 %v1742, %v2274
      %v2308 = vadd.f32 %v521, 0.0
      %v2309 = vadd.f32 %v522, 0.0
      %v2310 = vadd.f32 %v523, 0.0
      %v2311 = vadd.f32 %v524, 0.0
      %v2312 = vadd.f32 %v525, 0.0
      %v2313 = vadd.f32 %v526, 0.0
      %v2314 = vadd.f32 %v527, 0.0
      %v2315 = vadd.f32 %v528, 0.0
      %v2316 = vadd.f32 %v529, 0.0
      %v2317 = vadd.f32 %v530, 0.0
      %v2318 = vadd.f32 %v531, 0.0
      %v2319 = vadd.f32 %v532, 0.0
      %v2320 = vadd.f32 %v533, 0.0
      %v2321 = vadd.f32 %v534, 0.0
      %v2322 = vadd.f32 %v535, 0.0
      %v2323 = vadd.f32 %v536, 0.0
      %v2324 = vadd.f32 %v537, 0.0
      %v2325 = vadd.f32 %v538, 0.0
      %v2326 = vadd.f32 %v539, 0.0
      %v2327 = vadd.f32 %v540, 0.0
      %v2328 = vadd.f32 %v541, 0.0
      %v2329 = vadd.f32 %v542, 0.0
      %v2330 = vadd.f32 %v543, 0.0
      %v2331 = vadd.f32 %v544, 0.0
      %v2332 = vadd.f32 %v545, 0.0
      %v2333 = vadd.f32 %v546, 0.0
      %v2334 = vadd.f32 %v547, 0.0
      %v2335 = vadd.f32 %v548, 0.0
      %v2336 = vadd.f32 %v549, 0.0
      %v2337 = vadd.f32 %v550, 0.0
      %v2338 = vadd.f32 %v551, 0.0
      %v2339 = vadd.f32 %v552, 0.0
      %vm2340 = vcmp.gt.f32.partialorder %v2308, -0.5
      %vm2341 = vcmp.gt.f32.partialorder %v2309, -0.5
      %vm2342 = vcmp.gt.f32.partialorder %v2310, -0.5
      %vm2343 = vcmp.gt.f32.partialorder %v2311, -0.5
      %vm2344 = vcmp.gt.f32.partialorder %v2312, -0.5
      %vm2345 = vcmp.gt.f32.partialorder %v2313, -0.5
      %vm2346 = vcmp.gt.f32.partialorder %v2314, -0.5
      %vm2347 = vcmp.gt.f32.partialorder %v2315, -0.5
      %vm2348 = vcmp.gt.f32.partialorder %v2316, -0.5
      %vm2349 = vcmp.gt.f32.partialorder %v2317, -0.5
      %vm2350 = vcmp.gt.f32.partialorder %v2318, -0.5
      %vm2351 = vcmp.gt.f32.partialorder %v2319, -0.5
      %vm2352 = vcmp.gt.f32.partialorder %v2320, -0.5
      %vm2353 = vcmp.gt.f32.partialorder %v2321, -0.5
      %vm2354 = vcmp.gt.f32.partialorder %v2322, -0.5
      %vm2355 = vcmp.gt.f32.partialorder %v2323, -0.5
      %vm2356 = vcmp.gt.f32.partialorder %v2324, -0.5
      %vm2357 = vcmp.gt.f32.partialorder %v2325, -0.5
      %vm2358 = vcmp.gt.f32.partialorder %v2326, -0.5
      %vm2359 = vcmp.gt.f32.partialorder %v2327, -0.5
      %vm2360 = vcmp.gt.f32.partialorder %v2328, -0.5
      %vm2361 = vcmp.gt.f32.partialorder %v2329, -0.5
      %vm2362 = vcmp.gt.f32.partialorder %v2330, -0.5
      %vm2363 = vcmp.gt.f32.partialorder %v2331, -0.5
      %vm2364 = vcmp.gt.f32.partialorder %v2332, -0.5
      %vm2365 = vcmp.gt.f32.partialorder %v2333, -0.5
      %vm2366 = vcmp.gt.f32.partialorder %v2334, -0.5
      %vm2367 = vcmp.gt.f32.partialorder %v2335, -0.5
      %vm2368 = vcmp.gt.f32.partialorder %v2336, -0.5
      %vm2369 = vcmp.gt.f32.partialorder %v2337, -0.5
      %vm2370 = vcmp.gt.f32.partialorder %v2338, -0.5
      %vm2371 = vcmp.gt.f32.partialorder %v2339, -0.5
      %vm2372 = vcmp.lt.f32.partialorder %v2308, 15.5
      %vm2373 = vcmp.lt.f32.partialorder %v2309, 15.5
      %vm2374 = vcmp.lt.f32.partialorder %v2310, 15.5
      %vm2375 = vcmp.lt.f32.partialorder %v2311, 15.5
      %vm2376 = vcmp.lt.f32.partialorder %v2312, 15.5
      %vm2377 = vcmp.lt.f32.partialorder %v2313, 15.5
      %vm2378 = vcmp.lt.f32.partialorder %v2314, 15.5
      %vm2379 = vcmp.lt.f32.partialorder %v2315, 15.5
      %vm2380 = vcmp.lt.f32.partialorder %v2316, 15.5
      %vm2381 = vcmp.lt.f32.partialorder %v2317, 15.5
      %vm2382 = vcmp.lt.f32.partialorder %v2318, 15.5
      %vm2383 = vcmp.lt.f32.partialorder %v2319, 15.5
      %vm2384 = vcmp.lt.f32.partialorder %v2320, 15.5
      %vm2385 = vcmp.lt.f32.partialorder %v2321, 15.5
      %vm2386 = vcmp.lt.f32.partialorder %v2322, 15.5
      %vm2387 = vcmp.lt.f32.partialorder %v2323, 15.5
      %vm2388 = vcmp.lt.f32.partialorder %v2324, 15.5
      %vm2389 = vcmp.lt.f32.partialorder %v2325, 15.5
      %vm2390 = vcmp.lt.f32.partialorder %v2326, 15.5
      %vm2391 = vcmp.lt.f32.partialorder %v2327, 15.5
      %vm2392 = vcmp.lt.f32.partialorder %v2328, 15.5
      %vm2393 = vcmp.lt.f32.partialorder %v2329, 15.5
      %vm2394 = vcmp.lt.f32.partialorder %v2330, 15.5
      %vm2395 = vcmp.lt.f32.partialorder %v2331, 15.5
      %vm2396 = vcmp.lt.f32.partialorder %v2332, 15.5
      %vm2397 = vcmp.lt.f32.partialorder %v2333, 15.5
      %vm2398 = vcmp.lt.f32.partialorder %v2334, 15.5
      %vm2399 = vcmp.lt.f32.partialorder %v2335, 15.5
      %vm2400 = vcmp.lt.f32.partialorder %v2336, 15.5
      %vm2401 = vcmp.lt.f32.partialorder %v2337, 15.5
      %vm2402 = vcmp.lt.f32.partialorder %v2338, 15.5
      %vm2403 = vcmp.lt.f32.partialorder %v2339, 15.5
      %vm2404 = vmand %vm2340, %vm2372
      %vm2405 = vmand %vm2341, %vm2373
      %vm2406 = vmand %vm2342, %vm2374
      %vm2407 = vmand %vm2343, %vm2375
      %vm2408 = vmand %vm2344, %vm2376
      %vm2409 = vmand %vm2345, %vm2377
      %vm2410 = vmand %vm2346, %vm2378
      %vm2411 = vmand %vm2347, %vm2379
      %vm2412 = vmand %vm2348, %vm2380
      %vm2413 = vmand %vm2349, %vm2381
      %vm2414 = vmand %vm2350, %vm2382
      %vm2415 = vmand %vm2351, %vm2383
      %vm2416 = vmand %vm2352, %vm2384
      %vm2417 = vmand %vm2353, %vm2385
      %vm2418 = vmand %vm2354, %vm2386
      %vm2419 = vmand %vm2355, %vm2387
      %vm2420 = vmand %vm2356, %vm2388
      %vm2421 = vmand %vm2357, %vm2389
      %vm2422 = vmand %vm2358, %vm2390
      %vm2423 = vmand %vm2359, %vm2391
      %vm2424 = vmand %vm2360, %vm2392
      %vm2425 = vmand %vm2361, %vm2393
      %vm2426 = vmand %vm2362, %vm2394
      %vm2427 = vmand %vm2363, %vm2395
      %vm2428 = vmand %vm2364, %vm2396
      %vm2429 = vmand %vm2365, %vm2397
      %vm2430 = vmand %vm2366, %vm2398
      %vm2431 = vmand %vm2367, %vm2399
      %vm2432 = vmand %vm2368, %vm2400
      %vm2433 = vmand %vm2369, %vm2401
      %vm2434 = vmand %vm2370, %vm2402
      %vm2435 = vmand %vm2371, %vm2403
      %vm2436 = vmand %vm2404, %vm842
      %vm2437 = vmand %vm2405, %vm843
      %vm2438 = vmand %vm2406, %vm844
      %vm2439 = vmand %vm2407, %vm845
      %vm2440 = vmand %vm2408, %vm846
      %vm2441 = vmand %vm2409, %vm847
      %vm2442 = vmand %vm2410, %vm848
      %vm2443 = vmand %vm2411, %vm849
      %vm2444 = vmand %vm2412, %vm850
      %vm2445 = vmand %vm2413, %vm851
      %vm2446 = vmand %vm2414, %vm852
      %vm2447 = vmand %vm2415, %vm853
      %vm2448 = vmand %vm2416, %vm854
      %vm2449 = vmand %vm2417, %vm855
      %vm2450 = vmand %vm2418, %vm856
      %vm2451 = vmand %vm2419, %vm857
      %vm2452 = vmand %vm2420, %vm858
      %vm2453 = vmand %vm2421, %vm859
      %vm2454 = vmand %vm2422, %vm860
      %vm2455 = vmand %vm2423, %vm861
      %vm2456 = vmand %vm2424, %vm862
      %vm2457 = vmand %vm2425, %vm863
      %vm2458 = vmand %vm2426, %vm864
      %vm2459 = vmand %vm2427, %vm865
      %vm2460 = vmand %vm2428, %vm866
      %vm2461 = vmand %vm2429, %vm867
      %vm2462 = vmand %vm2430, %vm868
      %vm2463 = vmand %vm2431, %vm869
      %vm2464 = vmand %vm2432, %vm870
      %vm2465 = vmand %vm2433, %vm871
      %vm2466 = vmand %vm2434, %vm872
      %vm2467 = vmand %vm2435, %vm873
      %vm2468 = vmand %vm2436, %vm906
      %vm2469 = vmand %vm2437, %vm907
      %vm2470 = vmand %vm2438, %vm908
      %vm2471 = vmand %vm2439, %vm909
      %vm2472 = vmand %vm2440, %vm910
      %vm2473 = vmand %vm2441, %vm911
      %vm2474 = vmand %vm2442, %vm912
      %vm2475 = vmand %vm2443, %vm913
      %vm2476 = vmand %vm2444, %vm914
      %vm2477 = vmand %vm2445, %vm915
      %vm2478 = vmand %vm2446, %vm916
      %vm2479 = vmand %vm2447, %vm917
      %vm2480 = vmand %vm2448, %vm918
      %vm2481 = vmand %vm2449, %vm919
      %vm2482 = vmand %vm2450, %vm920
      %vm2483 = vmand %vm2451, %vm921
      %vm2484 = vmand %vm2452, %vm922
      %vm2485 = vmand %vm2453, %vm923
      %vm2486 = vmand %vm2454, %vm924
      %vm2487 = vmand %vm2455, %vm925
      %vm2488 = vmand %vm2456, %vm926
      %vm2489 = vmand %vm2457, %vm927
      %vm2490 = vmand %vm2458, %vm928
      %vm2491 = vmand %vm2459, %vm929
      %vm2492 = vmand %vm2460, %vm930
      %vm2493 = vmand %vm2461, %vm931
      %vm2494 = vmand %vm2462, %vm932
      %vm2495 = vmand %vm2463, %vm933
      %vm2496 = vmand %vm2464, %vm934
      %vm2497 = vmand %vm2465, %vm935
      %vm2498 = vmand %vm2466, %vm936
      %vm2499 = vmand %vm2467, %vm937
      %v2500 = vsel %vm2468, 1, 0
      %v2501 = vsel %vm2469, 1, 0
      %v2502 = vsel %vm2470, 1, 0
      %v2503 = vsel %vm2471, 1, 0
      %v2504 = vsel %vm2472, 1, 0
      %v2505 = vsel %vm2473, 1, 0
      %v2506 = vsel %vm2474, 1, 0
      %v2507 = vsel %vm2475, 1, 0
      %v2508 = vsel %vm2476, 1, 0
      %v2509 = vsel %vm2477, 1, 0
      %v2510 = vsel %vm2478, 1, 0
      %v2511 = vsel %vm2479, 1, 0
      %v2512 = vsel %vm2480, 1, 0
      %v2513 = vsel %vm2481, 1, 0
      %v2514 = vsel %vm2482, 1, 0
      %v2515 = vsel %vm2483, 1, 0
      %v2516 = vsel %vm2484, 1, 0
      %v2517 = vsel %vm2485, 1, 0
      %v2518 = vsel %vm2486, 1, 0
      %v2519 = vsel %vm2487, 1, 0
      %v2520 = vsel %vm2488, 1, 0
      %v2521 = vsel %vm2489, 1, 0
      %v2522 = vsel %vm2490, 1, 0
      %v2523 = vsel %vm2491, 1, 0
      %v2524 = vsel %vm2492, 1, 0
      %v2525 = vsel %vm2493, 1, 0
      %v2526 = vsel %vm2494, 1, 0
      %v2527 = vsel %vm2495, 1, 0
      %v2528 = vsel %vm2496, 1, 0
      %v2529 = vsel %vm2497, 1, 0
      %v2530 = vsel %vm2498, 1, 0
      %v2531 = vsel %vm2499, 1, 0
      %vm2532 = vcmp.eq.s32.totalorder %v2500, 1
      %vm2533 = vcmp.eq.s32.totalorder %v2501, 1
      %vm2534 = vcmp.eq.s32.totalorder %v2502, 1
      %vm2535 = vcmp.eq.s32.totalorder %v2503, 1
      %vm2536 = vcmp.eq.s32.totalorder %v2504, 1
      %vm2537 = vcmp.eq.s32.totalorder %v2505, 1
      %vm2538 = vcmp.eq.s32.totalorder %v2506, 1
      %vm2539 = vcmp.eq.s32.totalorder %v2507, 1
      %vm2540 = vcmp.eq.s32.totalorder %v2508, 1
      %vm2541 = vcmp.eq.s32.totalorder %v2509, 1
      %vm2542 = vcmp.eq.s32.totalorder %v2510, 1
      %vm2543 = vcmp.eq.s32.totalorder %v2511, 1
      %vm2544 = vcmp.eq.s32.totalorder %v2512, 1
      %vm2545 = vcmp.eq.s32.totalorder %v2513, 1
      %vm2546 = vcmp.eq.s32.totalorder %v2514, 1
      %vm2547 = vcmp.eq.s32.totalorder %v2515, 1
      %vm2548 = vcmp.eq.s32.totalorder %v2516, 1
      %vm2549 = vcmp.eq.s32.totalorder %v2517, 1
      %vm2550 = vcmp.eq.s32.totalorder %v2518, 1
      %vm2551 = vcmp.eq.s32.totalorder %v2519, 1
      %vm2552 = vcmp.eq.s32.totalorder %v2520, 1
      %vm2553 = vcmp.eq.s32.totalorder %v2521, 1
      %vm2554 = vcmp.eq.s32.totalorder %v2522, 1
      %vm2555 = vcmp.eq.s32.totalorder %v2523, 1
      %vm2556 = vcmp.eq.s32.totalorder %v2524, 1
      %vm2557 = vcmp.eq.s32.totalorder %v2525, 1
      %vm2558 = vcmp.eq.s32.totalorder %v2526, 1
      %vm2559 = vcmp.eq.s32.totalorder %v2527, 1
      %vm2560 = vcmp.eq.s32.totalorder %v2528, 1
      %vm2561 = vcmp.eq.s32.totalorder %v2529, 1
      %vm2562 = vcmp.eq.s32.totalorder %v2530, 1
      %vm2563 = vcmp.eq.s32.totalorder %v2531, 1
      %v2564 = vsel %vm2532, %v681, 0.0
      %v2565 = vsel %vm2533, %v680, 0.0
      %v2566 = vsel %vm2534, %v679, 0.0
      %v2567 = vsel %vm2535, %v678, 0.0
      %v2568 = vsel %vm2536, %v677, 0.0
      %v2569 = vsel %vm2537, %v676, 0.0
      %v2570 = vsel %vm2538, %v675, 0.0
      %v2571 = vsel %vm2539, %v674, 0.0
      %v2572 = vsel %vm2540, %v673, 0.0
      %v2573 = vsel %vm2541, %v672, 0.0
      %v2574 = vsel %vm2542, %v671, 0.0
      %v2575 = vsel %vm2543, %v670, 0.0
      %v2576 = vsel %vm2544, %v669, 0.0
      %v2577 = vsel %vm2545, %v668, 0.0
      %v2578 = vsel %vm2546, %v667, 0.0
      %v2579 = vsel %vm2547, %v666, 0.0
      %v2580 = vsel %vm2548, %v665, 0.0
      %v2581 = vsel %vm2549, %v664, 0.0
      %v2582 = vsel %vm2550, %v663, 0.0
      %v2583 = vsel %vm2551, %v662, 0.0
      %v2584 = vsel %vm2552, %v661, 0.0
      %v2585 = vsel %vm2553, %v660, 0.0
      %v2586 = vsel %vm2554, %v659, 0.0
      %v2587 = vsel %vm2555, %v658, 0.0
      %v2588 = vsel %vm2556, %v657, 0.0
      %v2589 = vsel %vm2557, %v656, 0.0
      %v2590 = vsel %vm2558, %v655, 0.0
      %v2591 = vsel %vm2559, %v654, 0.0
      %v2592 = vsel %vm2560, %v653, 0.0
      %v2593 = vsel %vm2561, %v652, 0.0
      %v2594 = vsel %vm2562, %v651, 0.0
      %v2595 = vsel %vm2563, %v650, 0.0
      %s2596 = scalar_lea.vmem %s1, 24
      %v2597 = vld [vmem:[%s2596] sm:$0xff]
      %v2599 = vsel %vm1325, %v2564, 0
      %v2602 = vsel %vm1325, %v2565, 0
      %v2605 = vsel %vm1325, %v2566, 0
      %v2608 = vsel %vm1325, %v2567, 0
      %v2611 = vsel %vm1325, %v2568, 0
      %v2614 = vsel %vm1325, %v2569, 0
      %v2617 = vsel %vm1325, %v2570, 0
      %v2620 = vsel %vm1325, %v2571, 0
      %v2623 = vsel %vm1325, %v2572, 0
      %v2626 = vsel %vm1325, %v2573, 0
      %v2629 = vsel %vm1325, %v2574, 0
      %v2632 = vsel %vm1325, %v2575, 0
      %v2635 = vsel %vm1325, %v2576, 0
      %v2638 = vsel %vm1325, %v2577, 0
      %v2641 = vsel %vm1325, %v2578, 0
      %v2644 = vsel %vm1325, %v2579, 0
      %v2647 = vsel %vm1325, %v2580, 0
      %v2650 = vsel %vm1325, %v2581, 0
      %v2653 = vsel %vm1325, %v2582, 0
      %v2656 = vsel %vm1325, %v2583, 0
      %v2659 = vsel %vm1325, %v2584, 0
      %v2662 = vsel %vm1325, %v2585, 0
      %v2665 = vsel %vm1325, %v2586, 0
      %v2668 = vsel %vm1325, %v2587, 0
      %v2671 = vsel %vm1325, %v2588, 0
      %v2674 = vsel %vm1325, %v2589, 0
      %v2677 = vsel %vm1325, %v2590, 0
      %v2680 = vsel %vm1325, %v2591, 0
      %v2683 = vsel %vm1325, %v2592, 0
      %v2686 = vsel %vm1325, %v2593, 0
      %v2689 = vsel %vm1325, %v2594, 0
      %v2692 = vsel %vm1325, %v2595, 0
      %2694 = vmatpush.msra.mxu0 0.0
      %2695 = vmatpush.msra.mxu0 0.0
      %2696 = vmatpush.msra.mxu0 0.0
      %2697 = vmatpush.msra.mxu0 0.0
      %2698 = vmatpush.msra.mxu0 0.0
      %2699 = vmatpush.msra.mxu0 0.0
      %2700 = vmatpush.msra.mxu0 0.0
      %2701 = vmatpush.msra.mxu0 0.0
      %2702 = vmatpush.msra.mxu0 0.0
      %2703 = vmatpush.msra.mxu0 0.0
      %2704 = vmatpush.msra.mxu0 0.0
      %2705 = vmatpush.msra.mxu0 0.0
      %2706 = vmatpush.msra.mxu0 0.0
      %2707 = vmatpush.msra.mxu0 0.0
      %2708 = vmatpush.msra.mxu0 0.0
      %2709 = vmatpush.msra.mxu0 %v2597
      %2710 = vmatmul.f32.gmra.mxu0 %v2599
      %v2711 = vpop.f32.mrf.mxu0
      %v2712 = vadd.f32 0.0, %v2711
      %2713 = vmatmul.f32.gmra.mxu0 %v2602
      %v2714 = vpop.f32.mrf.mxu0
      %v2715 = vadd.f32 0.0, %v2714
      %2716 = vmatmul.f32.gmra.mxu0 %v2605
      %v2717 = vpop.f32.mrf.mxu0
      %v2718 = vadd.f32 0.0, %v2717
      %2719 = vmatmul.f32.gmra.mxu0 %v2608
      %v2720 = vpop.f32.mrf.mxu0
      %v2721 = vadd.f32 0.0, %v2720
      %2722 = vmatmul.f32.gmra.mxu0 %v2611
      %v2723 = vpop.f32.mrf.mxu0
      %v2724 = vadd.f32 0.0, %v2723
      %2725 = vmatmul.f32.gmra.mxu0 %v2614
      %v2726 = vpop.f32.mrf.mxu0
      %v2727 = vadd.f32 0.0, %v2726
      %2728 = vmatmul.f32.gmra.mxu0 %v2617
      %v2729 = vpop.f32.mrf.mxu0
      %v2730 = vadd.f32 0.0, %v2729
      %2731 = vmatmul.f32.gmra.mxu0 %v2620
      %v2732 = vpop.f32.mrf.mxu0
      %v2733 = vadd.f32 0.0, %v2732
      %2734 = vmatmul.f32.gmra.mxu0 %v2623
      %v2735 = vpop.f32.mrf.mxu0
      %v2736 = vadd.f32 0.0, %v2735
      %2737 = vmatmul.f32.gmra.mxu0 %v2626
      %v2738 = vpop.f32.mrf.mxu0
      %v2739 = vadd.f32 0.0, %v2738
      %2740 = vmatmul.f32.gmra.mxu0 %v2629
      %v2741 = vpop.f32.mrf.mxu0
      %v2742 = vadd.f32 0.0, %v2741
      %2743 = vmatmul.f32.gmra.mxu0 %v2632
      %v2744 = vpop.f32.mrf.mxu0
      %v2745 = vadd.f32 0.0, %v2744
      %2746 = vmatmul.f32.gmra.mxu0 %v2635
      %v2747 = vpop.f32.mrf.mxu0
      %v2748 = vadd.f32 0.0, %v2747
      %2749 = vmatmul.f32.gmra.mxu0 %v2638
      %v2750 = vpop.f32.mrf.mxu0
      %v2751 = vadd.f32 0.0, %v2750
      %2752 = vmatmul.f32.gmra.mxu0 %v2641
      %v2753 = vpop.f32.mrf.mxu0
      %v2754 = vadd.f32 0.0, %v2753
      %2755 = vmatmul.f32.gmra.mxu0 %v2644
      %v2756 = vpop.f32.mrf.mxu0
      %v2757 = vadd.f32 0.0, %v2756
      %2758 = vmatmul.f32.gmra.mxu0 %v2647
      %v2759 = vpop.f32.mrf.mxu0
      %v2760 = vadd.f32 0.0, %v2759
      %2761 = vmatmul.f32.gmra.mxu0 %v2650
      %v2762 = vpop.f32.mrf.mxu0
      %v2763 = vadd.f32 0.0, %v2762
      %2764 = vmatmul.f32.gmra.mxu0 %v2653
      %v2765 = vpop.f32.mrf.mxu0
      %v2766 = vadd.f32 0.0, %v2765
      %2767 = vmatmul.f32.gmra.mxu0 %v2656
      %v2768 = vpop.f32.mrf.mxu0
      %v2769 = vadd.f32 0.0, %v2768
      %2770 = vmatmul.f32.gmra.mxu0 %v2659
      %v2771 = vpop.f32.mrf.mxu0
      %v2772 = vadd.f32 0.0, %v2771
      %2773 = vmatmul.f32.gmra.mxu0 %v2662
      %v2774 = vpop.f32.mrf.mxu0
      %v2775 = vadd.f32 0.0, %v2774
      %2776 = vmatmul.f32.gmra.mxu0 %v2665
      %v2777 = vpop.f32.mrf.mxu0
      %v2778 = vadd.f32 0.0, %v2777
      %2779 = vmatmul.f32.gmra.mxu0 %v2668
      %v2780 = vpop.f32.mrf.mxu0
      %v2781 = vadd.f32 0.0, %v2780
      %2782 = vmatmul.f32.gmra.mxu0 %v2671
      %v2783 = vpop.f32.mrf.mxu0
      %v2784 = vadd.f32 0.0, %v2783
      %2785 = vmatmul.f32.gmra.mxu0 %v2674
      %v2786 = vpop.f32.mrf.mxu0
      %v2787 = vadd.f32 0.0, %v2786
      %2788 = vmatmul.f32.gmra.mxu0 %v2677
      %v2789 = vpop.f32.mrf.mxu0
      %v2790 = vadd.f32 0.0, %v2789
      %2791 = vmatmul.f32.gmra.mxu0 %v2680
      %v2792 = vpop.f32.mrf.mxu0
      %v2793 = vadd.f32 0.0, %v2792
      %2794 = vmatmul.f32.gmra.mxu0 %v2683
      %v2795 = vpop.f32.mrf.mxu0
      %v2796 = vadd.f32 0.0, %v2795
      %2797 = vmatmul.f32.gmra.mxu0 %v2686
      %v2798 = vpop.f32.mrf.mxu0
      %v2799 = vadd.f32 0.0, %v2798
      %2800 = vmatmul.f32.gmra.mxu0 %v2689
      %v2801 = vpop.f32.mrf.mxu0
      %v2802 = vadd.f32 0.0, %v2801
      %2803 = vmatmul.f32.gmra.mxu0 %v2692
      %v2804 = vpop.f32.mrf.mxu0
      %v2805 = vadd.f32 0.0, %v2804
      %2806 = vdwg.mxu0
      %v2807 = vadd.f32 %v2276, %v2712
      %v2808 = vadd.f32 %v2277, %v2715
      %v2809 = vadd.f32 %v2278, %v2718
      %v2810 = vadd.f32 %v2279, %v2721
      %v2811 = vadd.f32 %v2280, %v2724
      %v2812 = vadd.f32 %v2281, %v2727
      %v2813 = vadd.f32 %v2282, %v2730
      %v2814 = vadd.f32 %v2283, %v2733
      %v2815 = vadd.f32 %v2284, %v2736
      %v2816 = vadd.f32 %v2285, %v2739
      %v2817 = vadd.f32 %v2286, %v2742
      %v2818 = vadd.f32 %v2287, %v2745
      %v2819 = vadd.f32 %v2288, %v2748
      %v2820 = vadd.f32 %v2289, %v2751
      %v2821 = vadd.f32 %v2290, %v2754
      %v2822 = vadd.f32 %v2291, %v2757
      %v2823 = vadd.f32 %v2292, %v2760
      %v2824 = vadd.f32 %v2293, %v2763
      %v2825 = vadd.f32 %v2294, %v2766
      %v2826 = vadd.f32 %v2295, %v2769
      %v2827 = vadd.f32 %v2296, %v2772
      %v2828 = vadd.f32 %v2297, %v2775
      %v2829 = vadd.f32 %v2298, %v2778
      %v2830 = vadd.f32 %v2299, %v2781
      %v2831 = vadd.f32 %v2300, %v2784
      %v2832 = vadd.f32 %v2301, %v2787
      %v2833 = vadd.f32 %v2302, %v2790
      %v2834 = vadd.f32 %v2303, %v2793
      %v2835 = vadd.f32 %v2304, %v2796
      %v2836 = vadd.f32 %v2305, %v2799
      %v2837 = vadd.f32 %v2306, %v2802
      %v2838 = vadd.f32 %v2307, %v2805
      %vm2839 = vmand %vm2404, %vm1099
      %vm2840 = vmand %vm2405, %vm1100
      %vm2841 = vmand %vm2406, %vm1101
      %vm2842 = vmand %vm2407, %vm1102
      %vm2843 = vmand %vm2408, %vm1103
      %vm2844 = vmand %vm2409, %vm1104
      %vm2845 = vmand %vm2410, %vm1105
      %vm2846 = vmand %vm2411, %vm1106
      %vm2847 = vmand %vm2412, %vm1107
      %vm2848 = vmand %vm2413, %vm1108
      %vm2849 = vmand %vm2414, %vm1109
      %vm2850 = vmand %vm2415, %vm1110
      %vm2851 = vmand %vm2416, %vm1111
      %vm2852 = vmand %vm2417, %vm1112
      %vm2853 = vmand %vm2418, %vm1113
      %vm2854 = vmand %vm2419, %vm1114
      %vm2855 = vmand %vm2420, %vm1115
      %vm2856 = vmand %vm2421, %vm1116
      %vm2857 = vmand %vm2422, %vm1117
      %vm2858 = vmand %vm2423, %vm1118
      %vm2859 = vmand %vm2424, %vm1119
      %vm2860 = vmand %vm2425, %vm1120
      %vm2861 = vmand %vm2426, %vm1121
      %vm2862 = vmand %vm2427, %vm1122
      %vm2863 = vmand %vm2428, %vm1123
      %vm2864 = vmand %vm2429, %vm1124
      %vm2865 = vmand %vm2430, %vm1125
      %vm2866 = vmand %vm2431, %vm1126
      %vm2867 = vmand %vm2432, %vm1127
      %vm2868 = vmand %vm2433, %vm1128
      %vm2869 = vmand %vm2434, %vm1129
      %vm2870 = vmand %vm2435, %vm1130
      %vm2871 = vmand %vm2839, %vm1163
      %vm2872 = vmand %vm2840, %vm1164
      %vm2873 = vmand %vm2841, %vm1165
      %vm2874 = vmand %vm2842, %vm1166
      %vm2875 = vmand %vm2843, %vm1167
      %vm2876 = vmand %vm2844, %vm1168
      %vm2877 = vmand %vm2845, %vm1169
      %vm2878 = vmand %vm2846, %vm1170
      %vm2879 = vmand %vm2847, %vm1171
      %vm2880 = vmand %vm2848, %vm1172
      %vm2881 = vmand %vm2849, %vm1173
      %vm2882 = vmand %vm2850, %vm1174
      %vm2883 = vmand %vm2851, %vm1175
      %vm2884 = vmand %vm2852, %vm1176
      %vm2885 = vmand %vm2853, %vm1177
      %vm2886 = vmand %vm2854, %vm1178
      %vm2887 = vmand %vm2855, %vm1179
      %vm2888 = vmand %vm2856, %vm1180
      %vm2889 = vmand %vm2857, %vm1181
      %vm2890 = vmand %vm2858, %vm1182
      %vm2891 = vmand %vm2859, %vm1183
      %vm2892 = vmand %vm2860, %vm1184
      %vm2893 = vmand %vm2861, %vm1185
      %vm2894 = vmand %vm2862, %vm1186
      %vm2895 = vmand %vm2863, %vm1187
      %vm2896 = vmand %vm2864, %vm1188
      %vm2897 = vmand %vm2865, %vm1189
      %vm2898 = vmand %vm2866, %vm1190
      %vm2899 = vmand %vm2867, %vm1191
      %vm2900 = vmand %vm2868, %vm1192
      %vm2901 = vmand %vm2869, %vm1193
      %vm2902 = vmand %vm2870, %vm1194
      %v2903 = vsel %vm2871, 1, 0
      %v2904 = vsel %vm2872, 1, 0
      %v2905 = vsel %vm2873, 1, 0
      %v2906 = vsel %vm2874, 1, 0
      %v2907 = vsel %vm2875, 1, 0
      %v2908 = vsel %vm2876, 1, 0
      %v2909 = vsel %vm2877, 1, 0
      %v2910 = vsel %vm2878, 1, 0
      %v2911 = vsel %vm2879, 1, 0
      %v2912 = vsel %vm2880, 1, 0
      %v2913 = vsel %vm2881, 1, 0
      %v2914 = vsel %vm2882, 1, 0
      %v2915 = vsel %vm2883, 1, 0
      %v2916 = vsel %vm2884, 1, 0
      %v2917 = vsel %vm2885, 1, 0
      %v2918 = vsel %vm2886, 1, 0
      %v2919 = vsel %vm2887, 1, 0
      %v2920 = vsel %vm2888, 1, 0
      %v2921 = vsel %vm2889, 1, 0
      %v2922 = vsel %vm2890, 1, 0
      %v2923 = vsel %vm2891, 1, 0
      %v2924 = vsel %vm2892, 1, 0
      %v2925 = vsel %vm2893, 1, 0
      %v2926 = vsel %vm2894, 1, 0
      %v2927 = vsel %vm2895, 1, 0
      %v2928 = vsel %vm2896, 1, 0
      %v2929 = vsel %vm2897, 1, 0
      %v2930 = vsel %vm2898, 1, 0
      %v2931 = vsel %vm2899, 1, 0
      %v2932 = vsel %vm2900, 1, 0
      %v2933 = vsel %vm2901, 1, 0
      %v2934 = vsel %vm2902, 1, 0
      %vm2935 = vcmp.eq.s32.totalorder %v2903, 1
      %vm2936 = vcmp.eq.s32.totalorder %v2904, 1
      %vm2937 = vcmp.eq.s32.totalorder %v2905, 1
      %vm2938 = vcmp.eq.s32.totalorder %v2906, 1
      %vm2939 = vcmp.eq.s32.totalorder %v2907, 1
      %vm2940 = vcmp.eq.s32.totalorder %v2908, 1
      %vm2941 = vcmp.eq.s32.totalorder %v2909, 1
      %vm2942 = vcmp.eq.s32.totalorder %v2910, 1
      %vm2943 = vcmp.eq.s32.totalorder %v2911, 1
      %vm2944 = vcmp.eq.s32.totalorder %v2912, 1
      %vm2945 = vcmp.eq.s32.totalorder %v2913, 1
      %vm2946 = vcmp.eq.s32.totalorder %v2914, 1
      %vm2947 = vcmp.eq.s32.totalorder %v2915, 1
      %vm2948 = vcmp.eq.s32.totalorder %v2916, 1
      %vm2949 = vcmp.eq.s32.totalorder %v2917, 1
      %vm2950 = vcmp.eq.s32.totalorder %v2918, 1
      %vm2951 = vcmp.eq.s32.totalorder %v2919, 1
      %vm2952 = vcmp.eq.s32.totalorder %v2920, 1
      %vm2953 = vcmp.eq.s32.totalorder %v2921, 1
      %vm2954 = vcmp.eq.s32.totalorder %v2922, 1
      %vm2955 = vcmp.eq.s32.totalorder %v2923, 1
      %vm2956 = vcmp.eq.s32.totalorder %v2924, 1
      %vm2957 = vcmp.eq.s32.totalorder %v2925, 1
      %vm2958 = vcmp.eq.s32.totalorder %v2926, 1
      %vm2959 = vcmp.eq.s32.totalorder %v2927, 1
      %vm2960 = vcmp.eq.s32.totalorder %v2928, 1
      %vm2961 = vcmp.eq.s32.totalorder %v2929, 1
      %vm2962 = vcmp.eq.s32.totalorder %v2930, 1
      %vm2963 = vcmp.eq.s32.totalorder %v2931, 1
      %vm2964 = vcmp.eq.s32.totalorder %v2932, 1
      %vm2965 = vcmp.eq.s32.totalorder %v2933, 1
      %vm2966 = vcmp.eq.s32.totalorder %v2934, 1
      %v2967 = vsel %vm2935, %v360, 0.0
      %v2968 = vsel %vm2936, %v361, 0.0
      %v2969 = vsel %vm2937, %v362, 0.0
      %v2970 = vsel %vm2938, %v363, 0.0
      %v2971 = vsel %vm2939, %v364, 0.0
      %v2972 = vsel %vm2940, %v365, 0.0
      %v2973 = vsel %vm2941, %v366, 0.0
      %v2974 = vsel %vm2942, %v367, 0.0
      %v2975 = vsel %vm2943, %v368, 0.0
      %v2976 = vsel %vm2944, %v369, 0.0
      %v2977 = vsel %vm2945, %v370, 0.0
      %v2978 = vsel %vm2946, %v371, 0.0
      %v2979 = vsel %vm2947, %v372, 0.0
      %v2980 = vsel %vm2948, %v373, 0.0
      %v2981 = vsel %vm2949, %v374, 0.0
      %v2982 = vsel %vm2950, %v375, 0.0
      %v2983 = vsel %vm2951, %v376, 0.0
      %v2984 = vsel %vm2952, %v377, 0.0
      %v2985 = vsel %vm2953, %v378, 0.0
      %v2986 = vsel %vm2954, %v379, 0.0
      %v2987 = vsel %vm2955, %v380, 0.0
      %v2988 = vsel %vm2956, %v381, 0.0
      %v2989 = vsel %vm2957, %v382, 0.0
      %v2990 = vsel %vm2958, %v383, 0.0
      %v2991 = vsel %vm2959, %v384, 0.0
      %v2992 = vsel %vm2960, %v385, 0.0
      %v2993 = vsel %vm2961, %v386, 0.0
      %v2994 = vsel %vm2962, %v387, 0.0
      %v2995 = vsel %vm2963, %v388, 0.0
      %v2996 = vsel %vm2964, %v389, 0.0
      %v2997 = vsel %vm2965, %v390, 0.0
      %v2998 = vsel %vm2966, %v391, 0.0
      %s2999 = scalar_lea.vmem %s1, 32
      %v3000 = vld [vmem:[%s2999] sm:$0xff]
      %v3002 = vsel %vm1325, %v2967, 0
      %v3005 = vsel %vm1325, %v2968, 0
      %v3008 = vsel %vm1325, %v2969, 0
      %v3011 = vsel %vm1325, %v2970, 0
      %v3014 = vsel %vm1325, %v2971, 0
      %v3017 = vsel %vm1325, %v2972, 0
      %v3020 = vsel %vm1325, %v2973, 0
      %v3023 = vsel %vm1325, %v2974, 0
      %v3026 = vsel %vm1325, %v2975, 0
      %v3029 = vsel %vm1325, %v2976, 0
      %v3032 = vsel %vm1325, %v2977, 0
      %v3035 = vsel %vm1325, %v2978, 0
      %v3038 = vsel %vm1325, %v2979, 0
      %v3041 = vsel %vm1325, %v2980, 0
      %v3044 = vsel %vm1325, %v2981, 0
      %v3047 = vsel %vm1325, %v2982, 0
      %v3050 = vsel %vm1325, %v2983, 0
      %v3053 = vsel %vm1325, %v2984, 0
      %v3056 = vsel %vm1325, %v2985, 0
      %v3059 = vsel %vm1325, %v2986, 0
      %v3062 = vsel %vm1325, %v2987, 0
      %v3065 = vsel %vm1325, %v2988, 0
      %v3068 = vsel %vm1325, %v2989, 0
      %v3071 = vsel %vm1325, %v2990, 0
      %v3074 = vsel %vm1325, %v2991, 0
      %v3077 = vsel %vm1325, %v2992, 0
      %v3080 = vsel %vm1325, %v2993, 0
      %v3083 = vsel %vm1325, %v2994, 0
      %v3086 = vsel %vm1325, %v2995, 0
      %v3089 = vsel %vm1325, %v2996, 0
      %v3092 = vsel %vm1325, %v2997, 0
      %v3095 = vsel %vm1325, %v2998, 0
      %3097 = vmatpush.msra.mxu0 0.0
      %3098 = vmatpush.msra.mxu0 0.0
      %3099 = vmatpush.msra.mxu0 0.0
      %3100 = vmatpush.msra.mxu0 0.0
      %3101 = vmatpush.msra.mxu0 0.0
      %3102 = vmatpush.msra.mxu0 0.0
      %3103 = vmatpush.msra.mxu0 0.0
      %3104 = vmatpush.msra.mxu0 0.0
      %3105 = vmatpush.msra.mxu0 0.0
      %3106 = vmatpush.msra.mxu0 0.0
      %3107 = vmatpush.msra.mxu0 0.0
      %3108 = vmatpush.msra.mxu0 0.0
      %3109 = vmatpush.msra.mxu0 0.0
      %3110 = vmatpush.msra.mxu0 0.0
      %3111 = vmatpush.msra.mxu0 0.0
      %3112 = vmatpush.msra.mxu0 %v3000
      %3113 = vmatmul.f32.gmra.mxu0 %v3002
      %v3114 = vpop.f32.mrf.mxu0
      %v3115 = vadd.f32 0.0, %v3114
      %3116 = vmatmul.f32.gmra.mxu0 %v3005
      %v3117 = vpop.f32.mrf.mxu0
      %v3118 = vadd.f32 0.0, %v3117
      %3119 = vmatmul.f32.gmra.mxu0 %v3008
      %v3120 = vpop.f32.mrf.mxu0
      %v3121 = vadd.f32 0.0, %v3120
      %3122 = vmatmul.f32.gmra.mxu0 %v3011
      %v3123 = vpop.f32.mrf.mxu0
      %v3124 = vadd.f32 0.0, %v3123
      %3125 = vmatmul.f32.gmra.mxu0 %v3014
      %v3126 = vpop.f32.mrf.mxu0
      %v3127 = vadd.f32 0.0, %v3126
      %3128 = vmatmul.f32.gmra.mxu0 %v3017
      %v3129 = vpop.f32.mrf.mxu0
      %v3130 = vadd.f32 0.0, %v3129
      %3131 = vmatmul.f32.gmra.mxu0 %v3020
      %v3132 = vpop.f32.mrf.mxu0
      %v3133 = vadd.f32 0.0, %v3132
      %3134 = vmatmul.f32.gmra.mxu0 %v3023
      %v3135 = vpop.f32.mrf.mxu0
      %v3136 = vadd.f32 0.0, %v3135
      %3137 = vmatmul.f32.gmra.mxu0 %v3026
      %v3138 = vpop.f32.mrf.mxu0
      %v3139 = vadd.f32 0.0, %v3138
      %3140 = vmatmul.f32.gmra.mxu0 %v3029
      %v3141 = vpop.f32.mrf.mxu0
      %v3142 = vadd.f32 0.0, %v3141
      %3143 = vmatmul.f32.gmra.mxu0 %v3032
      %v3144 = vpop.f32.mrf.mxu0
      %v3145 = vadd.f32 0.0, %v3144
      %3146 = vmatmul.f32.gmra.mxu0 %v3035
      %v3147 = vpop.f32.mrf.mxu0
      %v3148 = vadd.f32 0.0, %v3147
      %3149 = vmatmul.f32.gmra.mxu0 %v3038
      %v3150 = vpop.f32.mrf.mxu0
      %v3151 = vadd.f32 0.0, %v3150
      %3152 = vmatmul.f32.gmra.mxu0 %v3041
      %v3153 = vpop.f32.mrf.mxu0
      %v3154 = vadd.f32 0.0, %v3153
      %3155 = vmatmul.f32.gmra.mxu0 %v3044
      %v3156 = vpop.f32.mrf.mxu0
      %v3157 = vadd.f32 0.0, %v3156
      %3158 = vmatmul.f32.gmra.mxu0 %v3047
      %v3159 = vpop.f32.mrf.mxu0
      %v3160 = vadd.f32 0.0, %v3159
      %3161 = vmatmul.f32.gmra.mxu0 %v3050
      %v3162 = vpop.f32.mrf.mxu0
      %v3163 = vadd.f32 0.0, %v3162
      %3164 = vmatmul.f32.gmra.mxu0 %v3053
      %v3165 = vpop.f32.mrf.mxu0
      %v3166 = vadd.f32 0.0, %v3165
      %3167 = vmatmul.f32.gmra.mxu0 %v3056
      %v3168 = vpop.f32.mrf.mxu0
      %v3169 = vadd.f32 0.0, %v3168
      %3170 = vmatmul.f32.gmra.mxu0 %v3059
      %v3171 = vpop.f32.mrf.mxu0
      %v3172 = vadd.f32 0.0, %v3171
      %3173 = vmatmul.f32.gmra.mxu0 %v3062
      %v3174 = vpop.f32.mrf.mxu0
      %v3175 = vadd.f32 0.0, %v3174
      %3176 = vmatmul.f32.gmra.mxu0 %v3065
      %v3177 = vpop.f32.mrf.mxu0
      %v3178 = vadd.f32 0.0, %v3177
      %3179 = vmatmul.f32.gmra.mxu0 %v3068
      %v3180 = vpop.f32.mrf.mxu0
      %v3181 = vadd.f32 0.0, %v3180
      %3182 = vmatmul.f32.gmra.mxu0 %v3071
      %v3183 = vpop.f32.mrf.mxu0
      %v3184 = vadd.f32 0.0, %v3183
      %3185 = vmatmul.f32.gmra.mxu0 %v3074
      %v3186 = vpop.f32.mrf.mxu0
      %v3187 = vadd.f32 0.0, %v3186
      %3188 = vmatmul.f32.gmra.mxu0 %v3077
      %v3189 = vpop.f32.mrf.mxu0
      %v3190 = vadd.f32 0.0, %v3189
      %3191 = vmatmul.f32.gmra.mxu0 %v3080
      %v3192 = vpop.f32.mrf.mxu0
      %v3193 = vadd.f32 0.0, %v3192
      %3194 = vmatmul.f32.gmra.mxu0 %v3083
      %v3195 = vpop.f32.mrf.mxu0
      %v3196 = vadd.f32 0.0, %v3195
      %3197 = vmatmul.f32.gmra.mxu0 %v3086
      %v3198 = vpop.f32.mrf.mxu0
      %v3199 = vadd.f32 0.0, %v3198
      %3200 = vmatmul.f32.gmra.mxu0 %v3089
      %v3201 = vpop.f32.mrf.mxu0
      %v3202 = vadd.f32 0.0, %v3201
      %3203 = vmatmul.f32.gmra.mxu0 %v3092
      %v3204 = vpop.f32.mrf.mxu0
      %v3205 = vadd.f32 0.0, %v3204
      %3206 = vmatmul.f32.gmra.mxu0 %v3095
      %v3207 = vpop.f32.mrf.mxu0
      %v3208 = vadd.f32 0.0, %v3207
      %3209 = vdwg.mxu0
      %v3210 = vadd.f32 %v2807, %v3115
      %v3211 = vadd.f32 %v2808, %v3118
      %v3212 = vadd.f32 %v2809, %v3121
      %v3213 = vadd.f32 %v2810, %v3124
      %v3214 = vadd.f32 %v2811, %v3127
      %v3215 = vadd.f32 %v2812, %v3130
      %v3216 = vadd.f32 %v2813, %v3133
      %v3217 = vadd.f32 %v2814, %v3136
      %v3218 = vadd.f32 %v2815, %v3139
      %v3219 = vadd.f32 %v2816, %v3142
      %v3220 = vadd.f32 %v2817, %v3145
      %v3221 = vadd.f32 %v2818, %v3148
      %v3222 = vadd.f32 %v2819, %v3151
      %v3223 = vadd.f32 %v2820, %v3154
      %v3224 = vadd.f32 %v2821, %v3157
      %v3225 = vadd.f32 %v2822, %v3160
      %v3226 = vadd.f32 %v2823, %v3163
      %v3227 = vadd.f32 %v2824, %v3166
      %v3228 = vadd.f32 %v2825, %v3169
      %v3229 = vadd.f32 %v2826, %v3172
      %v3230 = vadd.f32 %v2827, %v3175
      %v3231 = vadd.f32 %v2828, %v3178
      %v3232 = vadd.f32 %v2829, %v3181
      %v3233 = vadd.f32 %v2830, %v3184
      %v3234 = vadd.f32 %v2831, %v3187
      %v3235 = vadd.f32 %v2832, %v3190
      %v3236 = vadd.f32 %v2833, %v3193
      %v3237 = vadd.f32 %v2834, %v3196
      %v3238 = vadd.f32 %v2835, %v3199
      %v3239 = vadd.f32 %v2836, %v3202
      %v3240 = vadd.f32 %v2837, %v3205
      %v3241 = vadd.f32 %v2838, %v3208
      %vm3242 = vmand %vm2404, %vm1841
      %vm3243 = vmand %vm2405, %vm1842
      %vm3244 = vmand %vm2406, %vm1843
      %vm3245 = vmand %vm2407, %vm1844
      %vm3246 = vmand %vm2408, %vm1845
      %vm3247 = vmand %vm2409, %vm1846
      %vm3248 = vmand %vm2410, %vm1847
      %vm3249 = vmand %vm2411, %vm1848
      %vm3250 = vmand %vm2412, %vm1849
      %vm3251 = vmand %vm2413, %vm1850
      %vm3252 = vmand %vm2414, %vm1851
      %vm3253 = vmand %vm2415, %vm1852
      %vm3254 = vmand %vm2416, %vm1853
      %vm3255 = vmand %vm2417, %vm1854
      %vm3256 = vmand %vm2418, %vm1855
      %vm3257 = vmand %vm2419, %vm1856
      %vm3258 = vmand %vm2420, %vm1857
      %vm3259 = vmand %vm2421, %vm1858
      %vm3260 = vmand %vm2422, %vm1859
      %vm3261 = vmand %vm2423, %vm1860
      %vm3262 = vmand %vm2424, %vm1861
      %vm3263 = vmand %vm2425, %vm1862
      %vm3264 = vmand %vm2426, %vm1863
      %vm3265 = vmand %vm2427, %vm1864
      %vm3266 = vmand %vm2428, %vm1865
      %vm3267 = vmand %vm2429, %vm1866
      %vm3268 = vmand %vm2430, %vm1867
      %vm3269 = vmand %vm2431, %vm1868
      %vm3270 = vmand %vm2432, %vm1869
      %vm3271 = vmand %vm2433, %vm1870
      %vm3272 = vmand %vm2434, %vm1871
      %vm3273 = vmand %vm2435, %vm1872
      %vm3274 = vmand %vm3242, %vm1905
      %vm3275 = vmand %vm3243, %vm1906
      %vm3276 = vmand %vm3244, %vm1907
      %vm3277 = vmand %vm3245, %vm1908
      %vm3278 = vmand %vm3246, %vm1909
      %vm3279 = vmand %vm3247, %vm1910
      %vm3280 = vmand %vm3248, %vm1911
      %vm3281 = vmand %vm3249, %vm1912
      %vm3282 = vmand %vm3250, %vm1913
      %vm3283 = vmand %vm3251, %vm1914
      %vm3284 = vmand %vm3252, %vm1915
      %vm3285 = vmand %vm3253, %vm1916
      %vm3286 = vmand %vm3254, %vm1917
      %vm3287 = vmand %vm3255, %vm1918
      %vm3288 = vmand %vm3256, %vm1919
      %vm3289 = vmand %vm3257, %vm1920
      %vm3290 = vmand %vm3258, %vm1921
      %vm3291 = vmand %vm3259, %vm1922
      %vm3292 = vmand %vm3260, %vm1923
      %vm3293 = vmand %vm3261, %vm1924
      %vm3294 = vmand %vm3262, %vm1925
      %vm3295 = vmand %vm3263, %vm1926
      %vm3296 = vmand %vm3264, %vm1927
      %vm3297 = vmand %vm3265, %vm1928
      %vm3298 = vmand %vm3266, %vm1929
      %vm3299 = vmand %vm3267, %vm1930
      %vm3300 = vmand %vm3268, %vm1931
      %vm3301 = vmand %vm3269, %vm1932
      %vm3302 = vmand %vm3270, %vm1933
      %vm3303 = vmand %vm3271, %vm1934
      %vm3304 = vmand %vm3272, %vm1935
      %vm3305 = vmand %vm3273, %vm1936
      %v3306 = vsel %vm3274, 1, 0
      %v3307 = vsel %vm3275, 1, 0
      %v3308 = vsel %vm3276, 1, 0
      %v3309 = vsel %vm3277, 1, 0
      %v3310 = vsel %vm3278, 1, 0
      %v3311 = vsel %vm3279, 1, 0
      %v3312 = vsel %vm3280, 1, 0
      %v3313 = vsel %vm3281, 1, 0
      %v3314 = vsel %vm3282, 1, 0
      %v3315 = vsel %vm3283, 1, 0
      %v3316 = vsel %vm3284, 1, 0
      %v3317 = vsel %vm3285, 1, 0
      %v3318 = vsel %vm3286, 1, 0
      %v3319 = vsel %vm3287, 1, 0
      %v3320 = vsel %vm3288, 1, 0
      %v3321 = vsel %vm3289, 1, 0
      %v3322 = vsel %vm3290, 1, 0
      %v3323 = vsel %vm3291, 1, 0
      %v3324 = vsel %vm3292, 1, 0
      %v3325 = vsel %vm3293, 1, 0
      %v3326 = vsel %vm3294, 1, 0
      %v3327 = vsel %vm3295, 1, 0
      %v3328 = vsel %vm3296, 1, 0
      %v3329 = vsel %vm3297, 1, 0
      %v3330 = vsel %vm3298, 1, 0
      %v3331 = vsel %vm3299, 1, 0
      %v3332 = vsel %vm3300, 1, 0
      %v3333 = vsel %vm3301, 1, 0
      %v3334 = vsel %vm3302, 1, 0
      %v3335 = vsel %vm3303, 1, 0
      %v3336 = vsel %vm3304, 1, 0
      %v3337 = vsel %vm3305, 1, 0
      %vm3338 = vcmp.eq.s32.totalorder %v3306, 1
      %vm3339 = vcmp.eq.s32.totalorder %v3307, 1
      %vm3340 = vcmp.eq.s32.totalorder %v3308, 1
      %vm3341 = vcmp.eq.s32.totalorder %v3309, 1
      %vm3342 = vcmp.eq.s32.totalorder %v3310, 1
      %vm3343 = vcmp.eq.s32.totalorder %v3311, 1
      %vm3344 = vcmp.eq.s32.totalorder %v3312, 1
      %vm3345 = vcmp.eq.s32.totalorder %v3313, 1
      %vm3346 = vcmp.eq.s32.totalorder %v3314, 1
      %vm3347 = vcmp.eq.s32.totalorder %v3315, 1
      %vm3348 = vcmp.eq.s32.totalorder %v3316, 1
      %vm3349 = vcmp.eq.s32.totalorder %v3317, 1
      %vm3350 = vcmp.eq.s32.totalorder %v3318, 1
      %vm3351 = vcmp.eq.s32.totalorder %v3319, 1
      %vm3352 = vcmp.eq.s32.totalorder %v3320, 1
      %vm3353 = vcmp.eq.s32.totalorder %v3321, 1
      %vm3354 = vcmp.eq.s32.totalorder %v3322, 1
      %vm3355 = vcmp.eq.s32.totalorder %v3323, 1
      %vm3356 = vcmp.eq.s32.totalorder %v3324, 1
      %vm3357 = vcmp.eq.s32.totalorder %v3325, 1
      %vm3358 = vcmp.eq.s32.totalorder %v3326, 1
      %vm3359 = vcmp.eq.s32.totalorder %v3327, 1
      %vm3360 = vcmp.eq.s32.totalorder %v3328, 1
      %vm3361 = vcmp.eq.s32.totalorder %v3329, 1
      %vm3362 = vcmp.eq.s32.totalorder %v3330, 1
      %vm3363 = vcmp.eq.s32.totalorder %v3331, 1
      %vm3364 = vcmp.eq.s32.totalorder %v3332, 1
      %vm3365 = vcmp.eq.s32.totalorder %v3333, 1
      %vm3366 = vcmp.eq.s32.totalorder %v3334, 1
      %vm3367 = vcmp.eq.s32.totalorder %v3335, 1
      %vm3368 = vcmp.eq.s32.totalorder %v3336, 1
      %vm3369 = vcmp.eq.s32.totalorder %v3337, 1
      %v3370 = vsel %vm3338, %v1807, 0.0
      %v3371 = vsel %vm3339, %v1806, 0.0
      %v3372 = vsel %vm3340, %v1805, 0.0
      %v3373 = vsel %vm3341, %v1804, 0.0
      %v3374 = vsel %vm3342, %v1803, 0.0
      %v3375 = vsel %vm3343, %v1802, 0.0
      %v3376 = vsel %vm3344, %v1801, 0.0
      %v3377 = vsel %vm3345, %v1800, 0.0
      %v3378 = vsel %vm3346, %v1799, 0.0
      %v3379 = vsel %vm3347, %v1798, 0.0
      %v3380 = vsel %vm3348, %v1797, 0.0
      %v3381 = vsel %vm3349, %v1796, 0.0
      %v3382 = vsel %vm3350, %v1795, 0.0
      %v3383 = vsel %vm3351, %v1794, 0.0
      %v3384 = vsel %vm3352, %v1793, 0.0
      %v3385 = vsel %vm3353, %v1792, 0.0
      %v3386 = vsel %vm3354, %v1791, 0.0
      %v3387 = vsel %vm3355, %v1790, 0.0
      %v3388 = vsel %vm3356, %v1789, 0.0
      %v3389 = vsel %vm3357, %v1788, 0.0
      %v3390 = vsel %vm3358, %v1787, 0.0
      %v3391 = vsel %vm3359, %v1786, 0.0
      %v3392 = vsel %vm3360, %v1785, 0.0
      %v3393 = vsel %vm3361, %v1784, 0.0
      %v3394 = vsel %vm3362, %v1783, 0.0
      %v3395 = vsel %vm3363, %v1782, 0.0
      %v3396 = vsel %vm3364, %v1781, 0.0
      %v3397 = vsel %vm3365, %v1780, 0.0
      %v3398 = vsel %vm3366, %v1779, 0.0
      %v3399 = vsel %vm3367, %v1778, 0.0
      %v3400 = vsel %vm3368, %v1777, 0.0
      %v3401 = vsel %vm3369, %v1808, 0.0
      %s3402 = scalar_lea.vmem %s1, 40
      %v3403 = vld [vmem:[%s3402] sm:$0xff]
      %v3405 = vsel %vm1325, %v3370, 0
      %v3408 = vsel %vm1325, %v3371, 0
      %v3411 = vsel %vm1325, %v3372, 0
      %v3414 = vsel %vm1325, %v3373, 0
      %v3417 = vsel %vm1325, %v3374, 0
      %v3420 = vsel %vm1325, %v3375, 0
      %v3423 = vsel %vm1325, %v3376, 0
      %v3426 = vsel %vm1325, %v3377, 0
      %v3429 = vsel %vm1325, %v3378, 0
      %v3432 = vsel %vm1325, %v3379, 0
      %v3435 = vsel %vm1325, %v3380, 0
      %v3438 = vsel %vm1325, %v3381, 0
      %v3441 = vsel %vm1325, %v3382, 0
      %v3444 = vsel %vm1325, %v3383, 0
      %v3447 = vsel %vm1325, %v3384, 0
      %v3450 = vsel %vm1325, %v3385, 0
      %v3453 = vsel %vm1325, %v3386, 0
      %v3456 = vsel %vm1325, %v3387, 0
      %v3459 = vsel %vm1325, %v3388, 0
      %v3462 = vsel %vm1325, %v3389, 0
      %v3465 = vsel %vm1325, %v3390, 0
      %v3468 = vsel %vm1325, %v3391, 0
      %v3471 = vsel %vm1325, %v3392, 0
      %v3474 = vsel %vm1325, %v3393, 0
      %v3477 = vsel %vm1325, %v3394, 0
      %v3480 = vsel %vm1325, %v3395, 0
      %v3483 = vsel %vm1325, %v3396, 0
      %v3486 = vsel %vm1325, %v3397, 0
      %v3489 = vsel %vm1325, %v3398, 0
      %v3492 = vsel %vm1325, %v3399, 0
      %v3495 = vsel %vm1325, %v3400, 0
      %v3498 = vsel %vm1325, %v3401, 0
      %3500 = vmatpush.msra.mxu0 0.0
      %3501 = vmatpush.msra.mxu0 0.0
      %3502 = vmatpush.msra.mxu0 0.0
      %3503 = vmatpush.msra.mxu0 0.0
      %3504 = vmatpush.msra.mxu0 0.0
      %3505 = vmatpush.msra.mxu0 0.0
      %3506 = vmatpush.msra.mxu0 0.0
      %3507 = vmatpush.msra.mxu0 0.0
      %3508 = vmatpush.msra.mxu0 0.0
      %3509 = vmatpush.msra.mxu0 0.0
      %3510 = vmatpush.msra.mxu0 0.0
      %3511 = vmatpush.msra.mxu0 0.0
      %3512 = vmatpush.msra.mxu0 0.0
      %3513 = vmatpush.msra.mxu0 0.0
      %3514 = vmatpush.msra.mxu0 0.0
      %3515 = vmatpush.msra.mxu0 %v3403
      %3516 = vmatmul.f32.gmra.mxu0 %v3405
      %v3517 = vpop.f32.mrf.mxu0
      %v3518 = vadd.f32 0.0, %v3517
      %3519 = vmatmul.f32.gmra.mxu0 %v3408
      %v3520 = vpop.f32.mrf.mxu0
      %v3521 = vadd.f32 0.0, %v3520
      %3522 = vmatmul.f32.gmra.mxu0 %v3411
      %v3523 = vpop.f32.mrf.mxu0
      %v3524 = vadd.f32 0.0, %v3523
      %3525 = vmatmul.f32.gmra.mxu0 %v3414
      %v3526 = vpop.f32.mrf.mxu0
      %v3527 = vadd.f32 0.0, %v3526
      %3528 = vmatmul.f32.gmra.mxu0 %v3417
      %v3529 = vpop.f32.mrf.mxu0
      %v3530 = vadd.f32 0.0, %v3529
      %3531 = vmatmul.f32.gmra.mxu0 %v3420
      %v3532 = vpop.f32.mrf.mxu0
      %v3533 = vadd.f32 0.0, %v3532
      %3534 = vmatmul.f32.gmra.mxu0 %v3423
      %v3535 = vpop.f32.mrf.mxu0
      %v3536 = vadd.f32 0.0, %v3535
      %3537 = vmatmul.f32.gmra.mxu0 %v3426
      %v3538 = vpop.f32.mrf.mxu0
      %v3539 = vadd.f32 0.0, %v3538
      %3540 = vmatmul.f32.gmra.mxu0 %v3429
      %v3541 = vpop.f32.mrf.mxu0
      %v3542 = vadd.f32 0.0, %v3541
      %3543 = vmatmul.f32.gmra.mxu0 %v3432
      %v3544 = vpop.f32.mrf.mxu0
      %v3545 = vadd.f32 0.0, %v3544
      %3546 = vmatmul.f32.gmra.mxu0 %v3435
      %v3547 = vpop.f32.mrf.mxu0
      %v3548 = vadd.f32 0.0, %v3547
      %3549 = vmatmul.f32.gmra.mxu0 %v3438
      %v3550 = vpop.f32.mrf.mxu0
      %v3551 = vadd.f32 0.0, %v3550
      %3552 = vmatmul.f32.gmra.mxu0 %v3441
      %v3553 = vpop.f32.mrf.mxu0
      %v3554 = vadd.f32 0.0, %v3553
      %3555 = vmatmul.f32.gmra.mxu0 %v3444
      %v3556 = vpop.f32.mrf.mxu0
      %v3557 = vadd.f32 0.0, %v3556
      %3558 = vmatmul.f32.gmra.mxu0 %v3447
      %v3559 = vpop.f32.mrf.mxu0
      %v3560 = vadd.f32 0.0, %v3559
      %3561 = vmatmul.f32.gmra.mxu0 %v3450
      %v3562 = vpop.f32.mrf.mxu0
      %v3563 = vadd.f32 0.0, %v3562
      %3564 = vmatmul.f32.gmra.mxu0 %v3453
      %v3565 = vpop.f32.mrf.mxu0
      %v3566 = vadd.f32 0.0, %v3565
      %3567 = vmatmul.f32.gmra.mxu0 %v3456
      %v3568 = vpop.f32.mrf.mxu0
      %v3569 = vadd.f32 0.0, %v3568
      %3570 = vmatmul.f32.gmra.mxu0 %v3459
      %v3571 = vpop.f32.mrf.mxu0
      %v3572 = vadd.f32 0.0, %v3571
      %3573 = vmatmul.f32.gmra.mxu0 %v3462
      %v3574 = vpop.f32.mrf.mxu0
      %v3575 = vadd.f32 0.0, %v3574
      %3576 = vmatmul.f32.gmra.mxu0 %v3465
      %v3577 = vpop.f32.mrf.mxu0
      %v3578 = vadd.f32 0.0, %v3577
      %3579 = vmatmul.f32.gmra.mxu0 %v3468
      %v3580 = vpop.f32.mrf.mxu0
      %v3581 = vadd.f32 0.0, %v3580
      %3582 = vmatmul.f32.gmra.mxu0 %v3471
      %v3583 = vpop.f32.mrf.mxu0
      %v3584 = vadd.f32 0.0, %v3583
      %3585 = vmatmul.f32.gmra.mxu0 %v3474
      %v3586 = vpop.f32.mrf.mxu0
      %v3587 = vadd.f32 0.0, %v3586
      %3588 = vmatmul.f32.gmra.mxu0 %v3477
      %v3589 = vpop.f32.mrf.mxu0
      %v3590 = vadd.f32 0.0, %v3589
      %3591 = vmatmul.f32.gmra.mxu0 %v3480
      %v3592 = vpop.f32.mrf.mxu0
      %v3593 = vadd.f32 0.0, %v3592
      %3594 = vmatmul.f32.gmra.mxu0 %v3483
      %v3595 = vpop.f32.mrf.mxu0
      %v3596 = vadd.f32 0.0, %v3595
      %3597 = vmatmul.f32.gmra.mxu0 %v3486
      %v3598 = vpop.f32.mrf.mxu0
      %v3599 = vadd.f32 0.0, %v3598
      %3600 = vmatmul.f32.gmra.mxu0 %v3489
      %v3601 = vpop.f32.mrf.mxu0
      %v3602 = vadd.f32 0.0, %v3601
      %3603 = vmatmul.f32.gmra.mxu0 %v3492
      %v3604 = vpop.f32.mrf.mxu0
      %v3605 = vadd.f32 0.0, %v3604
      %3606 = vmatmul.f32.gmra.mxu0 %v3495
      %v3607 = vpop.f32.mrf.mxu0
      %v3608 = vadd.f32 0.0, %v3607
      %3609 = vmatmul.f32.gmra.mxu0 %v3498
      %v3610 = vpop.f32.mrf.mxu0
      %v3611 = vadd.f32 0.0, %v3610
      %3612 = vdwg.mxu0
      %v3613 = vadd.f32 %v3210, %v3518
      %v3614 = vadd.f32 %v3211, %v3521
      %v3615 = vadd.f32 %v3212, %v3524
      %v3616 = vadd.f32 %v3213, %v3527
      %v3617 = vadd.f32 %v3214, %v3530
      %v3618 = vadd.f32 %v3215, %v3533
      %v3619 = vadd.f32 %v3216, %v3536
      %v3620 = vadd.f32 %v3217, %v3539
      %v3621 = vadd.f32 %v3218, %v3542
      %v3622 = vadd.f32 %v3219, %v3545
      %v3623 = vadd.f32 %v3220, %v3548
      %v3624 = vadd.f32 %v3221, %v3551
      %v3625 = vadd.f32 %v3222, %v3554
      %v3626 = vadd.f32 %v3223, %v3557
      %v3627 = vadd.f32 %v3224, %v3560
      %v3628 = vadd.f32 %v3225, %v3563
      %v3629 = vadd.f32 %v3226, %v3566
      %v3630 = vadd.f32 %v3227, %v3569
      %v3631 = vadd.f32 %v3228, %v3572
      %v3632 = vadd.f32 %v3229, %v3575
      %v3633 = vadd.f32 %v3230, %v3578
      %v3634 = vadd.f32 %v3231, %v3581
      %v3635 = vadd.f32 %v3232, %v3584
      %v3636 = vadd.f32 %v3233, %v3587
      %v3637 = vadd.f32 %v3234, %v3590
      %v3638 = vadd.f32 %v3235, %v3593
      %v3639 = vadd.f32 %v3236, %v3596
      %v3640 = vadd.f32 %v3237, %v3599
      %v3641 = vadd.f32 %v3238, %v3602
      %v3642 = vadd.f32 %v3239, %v3605
      %v3643 = vadd.f32 %v3240, %v3608
      %v3644 = vadd.f32 %v3241, %v3611
      %v3645 = vadd.f32 %v521, 1.0
      %v3646 = vadd.f32 %v522, 1.0
      %v3647 = vadd.f32 %v523, 1.0
      %v3648 = vadd.f32 %v524, 1.0
      %v3649 = vadd.f32 %v525, 1.0
      %v3650 = vadd.f32 %v526, 1.0
      %v3651 = vadd.f32 %v527, 1.0
      %v3652 = vadd.f32 %v528, 1.0
      %v3653 = vadd.f32 %v529, 1.0
      %v3654 = vadd.f32 %v530, 1.0
      %v3655 = vadd.f32 %v531, 1.0
      %v3656 = vadd.f32 %v532, 1.0
      %v3657 = vadd.f32 %v533, 1.0
      %v3658 = vadd.f32 %v534, 1.0
      %v3659 = vadd.f32 %v535, 1.0
      %v3660 = vadd.f32 %v536, 1.0
      %v3661 = vadd.f32 %v537, 1.0
      %v3662 = vadd.f32 %v538, 1.0
      %v3663 = vadd.f32 %v539, 1.0
      %v3664 = vadd.f32 %v540, 1.0
      %v3665 = vadd.f32 %v541, 1.0
      %v3666 = vadd.f32 %v542, 1.0
      %v3667 = vadd.f32 %v543, 1.0
      %v3668 = vadd.f32 %v544, 1.0
      %v3669 = vadd.f32 %v545, 1.0
      %v3670 = vadd.f32 %v546, 1.0
      %v3671 = vadd.f32 %v547, 1.0
      %v3672 = vadd.f32 %v548, 1.0
      %v3673 = vadd.f32 %v549, 1.0
      %v3674 = vadd.f32 %v550, 1.0
      %v3675 = vadd.f32 %v551, 1.0
      %v3676 = vadd.f32 %v552, 1.0
      %vm3677 = vcmp.gt.f32.partialorder %v3645, -0.5
      %vm3678 = vcmp.gt.f32.partialorder %v3646, -0.5
      %vm3679 = vcmp.gt.f32.partialorder %v3647, -0.5
      %vm3680 = vcmp.gt.f32.partialorder %v3648, -0.5
      %vm3681 = vcmp.gt.f32.partialorder %v3649, -0.5
      %vm3682 = vcmp.gt.f32.partialorder %v3650, -0.5
      %vm3683 = vcmp.gt.f32.partialorder %v3651, -0.5
      %vm3684 = vcmp.gt.f32.partialorder %v3652, -0.5
      %vm3685 = vcmp.gt.f32.partialorder %v3653, -0.5
      %vm3686 = vcmp.gt.f32.partialorder %v3654, -0.5
      %vm3687 = vcmp.gt.f32.partialorder %v3655, -0.5
      %vm3688 = vcmp.gt.f32.partialorder %v3656, -0.5
      %vm3689 = vcmp.gt.f32.partialorder %v3657, -0.5
      %vm3690 = vcmp.gt.f32.partialorder %v3658, -0.5
      %vm3691 = vcmp.gt.f32.partialorder %v3659, -0.5
      %vm3692 = vcmp.gt.f32.partialorder %v3660, -0.5
      %vm3693 = vcmp.gt.f32.partialorder %v3661, -0.5
      %vm3694 = vcmp.gt.f32.partialorder %v3662, -0.5
      %vm3695 = vcmp.gt.f32.partialorder %v3663, -0.5
      %vm3696 = vcmp.gt.f32.partialorder %v3664, -0.5
      %vm3697 = vcmp.gt.f32.partialorder %v3665, -0.5
      %vm3698 = vcmp.gt.f32.partialorder %v3666, -0.5
      %vm3699 = vcmp.gt.f32.partialorder %v3667, -0.5
      %vm3700 = vcmp.gt.f32.partialorder %v3668, -0.5
      %vm3701 = vcmp.gt.f32.partialorder %v3669, -0.5
      %vm3702 = vcmp.gt.f32.partialorder %v3670, -0.5
      %vm3703 = vcmp.gt.f32.partialorder %v3671, -0.5
      %vm3704 = vcmp.gt.f32.partialorder %v3672, -0.5
      %vm3705 = vcmp.gt.f32.partialorder %v3673, -0.5
      %vm3706 = vcmp.gt.f32.partialorder %v3674, -0.5
      %vm3707 = vcmp.gt.f32.partialorder %v3675, -0.5
      %vm3708 = vcmp.gt.f32.partialorder %v3676, -0.5
      %vm3709 = vcmp.lt.f32.partialorder %v3645, 15.5
      %vm3710 = vcmp.lt.f32.partialorder %v3646, 15.5
      %vm3711 = vcmp.lt.f32.partialorder %v3647, 15.5
      %vm3712 = vcmp.lt.f32.partialorder %v3648, 15.5
      %vm3713 = vcmp.lt.f32.partialorder %v3649, 15.5
      %vm3714 = vcmp.lt.f32.partialorder %v3650, 15.5
      %vm3715 = vcmp.lt.f32.partialorder %v3651, 15.5
      %vm3716 = vcmp.lt.f32.partialorder %v3652, 15.5
      %vm3717 = vcmp.lt.f32.partialorder %v3653, 15.5
      %vm3718 = vcmp.lt.f32.partialorder %v3654, 15.5
      %vm3719 = vcmp.lt.f32.partialorder %v3655, 15.5
      %vm3720 = vcmp.lt.f32.partialorder %v3656, 15.5
      %vm3721 = vcmp.lt.f32.partialorder %v3657, 15.5
      %vm3722 = vcmp.lt.f32.partialorder %v3658, 15.5
      %vm3723 = vcmp.lt.f32.partialorder %v3659, 15.5
      %vm3724 = vcmp.lt.f32.partialorder %v3660, 15.5
      %vm3725 = vcmp.lt.f32.partialorder %v3661, 15.5
      %vm3726 = vcmp.lt.f32.partialorder %v3662, 15.5
      %vm3727 = vcmp.lt.f32.partialorder %v3663, 15.5
      %vm3728 = vcmp.lt.f32.partialorder %v3664, 15.5
      %vm3729 = vcmp.lt.f32.partialorder %v3665, 15.5
      %vm3730 = vcmp.lt.f32.partialorder %v3666, 15.5
      %vm3731 = vcmp.lt.f32.partialorder %v3667, 15.5
      %vm3732 = vcmp.lt.f32.partialorder %v3668, 15.5
      %vm3733 = vcmp.lt.f32.partialorder %v3669, 15.5
      %vm3734 = vcmp.lt.f32.partialorder %v3670, 15.5
      %vm3735 = vcmp.lt.f32.partialorder %v3671, 15.5
      %vm3736 = vcmp.lt.f32.partialorder %v3672, 15.5
      %vm3737 = vcmp.lt.f32.partialorder %v3673, 15.5
      %vm3738 = vcmp.lt.f32.partialorder %v3674, 15.5
      %vm3739 = vcmp.lt.f32.partialorder %v3675, 15.5
      %vm3740 = vcmp.lt.f32.partialorder %v3676, 15.5
      %vm3741 = vmand %vm3677, %vm3709
      %vm3742 = vmand %vm3678, %vm3710
      %vm3743 = vmand %vm3679, %vm3711
      %vm3744 = vmand %vm3680, %vm3712
      %vm3745 = vmand %vm3681, %vm3713
      %vm3746 = vmand %vm3682, %vm3714
      %vm3747 = vmand %vm3683, %vm3715
      %vm3748 = vmand %vm3684, %vm3716
      %vm3749 = vmand %vm3685, %vm3717
      %vm3750 = vmand %vm3686, %vm3718
      %vm3751 = vmand %vm3687, %vm3719
      %vm3752 = vmand %vm3688, %vm3720
      %vm3753 = vmand %vm3689, %vm3721
      %vm3754 = vmand %vm3690, %vm3722
      %vm3755 = vmand %vm3691, %vm3723
      %vm3756 = vmand %vm3692, %vm3724
      %vm3757 = vmand %vm3693, %vm3725
      %vm3758 = vmand %vm3694, %vm3726
      %vm3759 = vmand %vm3695, %vm3727
      %vm3760 = vmand %vm3696, %vm3728
      %vm3761 = vmand %vm3697, %vm3729
      %vm3762 = vmand %vm3698, %vm3730
      %vm3763 = vmand %vm3699, %vm3731
      %vm3764 = vmand %vm3700, %vm3732
      %vm3765 = vmand %vm3701, %vm3733
      %vm3766 = vmand %vm3702, %vm3734
      %vm3767 = vmand %vm3703, %vm3735
      %vm3768 = vmand %vm3704, %vm3736
      %vm3769 = vmand %vm3705, %vm3737
      %vm3770 = vmand %vm3706, %vm3738
      %vm3771 = vmand %vm3707, %vm3739
      %vm3772 = vmand %vm3708, %vm3740
      %vm3773 = vmand %vm3741, %vm842
      %vm3774 = vmand %vm3742, %vm843
      %vm3775 = vmand %vm3743, %vm844
      %vm3776 = vmand %vm3744, %vm845
      %vm3777 = vmand %vm3745, %vm846
      %vm3778 = vmand %vm3746, %vm847
      %vm3779 = vmand %vm3747, %vm848
      %vm3780 = vmand %vm3748, %vm849
      %vm3781 = vmand %vm3749, %vm850
      %vm3782 = vmand %vm3750, %vm851
      %vm3783 = vmand %vm3751, %vm852
      %vm3784 = vmand %vm3752, %vm853
      %vm3785 = vmand %vm3753, %vm854
      %vm3786 = vmand %vm3754, %vm855
      %vm3787 = vmand %vm3755, %vm856
      %vm3788 = vmand %vm3756, %vm857
      %vm3789 = vmand %vm3757, %vm858
      %vm3790 = vmand %vm3758, %vm859
      %vm3791 = vmand %vm3759, %vm860
      %vm3792 = vmand %vm3760, %vm861
      %vm3793 = vmand %vm3761, %vm862
      %vm3794 = vmand %vm3762, %vm863
      %vm3795 = vmand %vm3763, %vm864
      %vm3796 = vmand %vm3764, %vm865
      %vm3797 = vmand %vm3765, %vm866
      %vm3798 = vmand %vm3766, %vm867
      %vm3799 = vmand %vm3767, %vm868
      %vm3800 = vmand %vm3768, %vm869
      %vm3801 = vmand %vm3769, %vm870
      %vm3802 = vmand %vm3770, %vm871
      %vm3803 = vmand %vm3771, %vm872
      %vm3804 = vmand %vm3772, %vm873
      %vm3805 = vmand %vm3773, %vm906
      %vm3806 = vmand %vm3774, %vm907
      %vm3807 = vmand %vm3775, %vm908
      %vm3808 = vmand %vm3776, %vm909
      %vm3809 = vmand %vm3777, %vm910
      %vm3810 = vmand %vm3778, %vm911
      %vm3811 = vmand %vm3779, %vm912
      %vm3812 = vmand %vm3780, %vm913
      %vm3813 = vmand %vm3781, %vm914
      %vm3814 = vmand %vm3782, %vm915
      %vm3815 = vmand %vm3783, %vm916
      %vm3816 = vmand %vm3784, %vm917
      %vm3817 = vmand %vm3785, %vm918
      %vm3818 = vmand %vm3786, %vm919
      %vm3819 = vmand %vm3787, %vm920
      %vm3820 = vmand %vm3788, %vm921
      %vm3821 = vmand %vm3789, %vm922
      %vm3822 = vmand %vm3790, %vm923
      %vm3823 = vmand %vm3791, %vm924
      %vm3824 = vmand %vm3792, %vm925
      %vm3825 = vmand %vm3793, %vm926
      %vm3826 = vmand %vm3794, %vm927
      %vm3827 = vmand %vm3795, %vm928
      %vm3828 = vmand %vm3796, %vm929
      %vm3829 = vmand %vm3797, %vm930
      %vm3830 = vmand %vm3798, %vm931
      %vm3831 = vmand %vm3799, %vm932
      %vm3832 = vmand %vm3800, %vm933
      %vm3833 = vmand %vm3801, %vm934
      %vm3834 = vmand %vm3802, %vm935
      %vm3835 = vmand %vm3803, %vm936
      %vm3836 = vmand %vm3804, %vm937
      %v3837 = vsel %vm3805, 1, 0
      %v3838 = vsel %vm3806, 1, 0
      %v3839 = vsel %vm3807, 1, 0
      %v3840 = vsel %vm3808, 1, 0
      %v3841 = vsel %vm3809, 1, 0
      %v3842 = vsel %vm3810, 1, 0
      %v3843 = vsel %vm3811, 1, 0
      %v3844 = vsel %vm3812, 1, 0
      %v3845 = vsel %vm3813, 1, 0
      %v3846 = vsel %vm3814, 1, 0
      %v3847 = vsel %vm3815, 1, 0
      %v3848 = vsel %vm3816, 1, 0
      %v3849 = vsel %vm3817, 1, 0
      %v3850 = vsel %vm3818, 1, 0
      %v3851 = vsel %vm3819, 1, 0
      %v3852 = vsel %vm3820, 1, 0
      %v3853 = vsel %vm3821, 1, 0
      %v3854 = vsel %vm3822, 1, 0
      %v3855 = vsel %vm3823, 1, 0
      %v3856 = vsel %vm3824, 1, 0
      %v3857 = vsel %vm3825, 1, 0
      %v3858 = vsel %vm3826, 1, 0
      %v3859 = vsel %vm3827, 1, 0
      %v3860 = vsel %vm3828, 1, 0
      %v3861 = vsel %vm3829, 1, 0
      %v3862 = vsel %vm3830, 1, 0
      %v3863 = vsel %vm3831, 1, 0
      %v3864 = vsel %vm3832, 1, 0
      %v3865 = vsel %vm3833, 1, 0
      %v3866 = vsel %vm3834, 1, 0
      %v3867 = vsel %vm3835, 1, 0
      %v3868 = vsel %vm3836, 1, 0
      %vm3869 = vcmp.eq.s32.totalorder %v3837, 1
      %vm3870 = vcmp.eq.s32.totalorder %v3838, 1
      %vm3871 = vcmp.eq.s32.totalorder %v3839, 1
      %vm3872 = vcmp.eq.s32.totalorder %v3840, 1
      %vm3873 = vcmp.eq.s32.totalorder %v3841, 1
      %vm3874 = vcmp.eq.s32.totalorder %v3842, 1
      %vm3875 = vcmp.eq.s32.totalorder %v3843, 1
      %vm3876 = vcmp.eq.s32.totalorder %v3844, 1
      %vm3877 = vcmp.eq.s32.totalorder %v3845, 1
      %vm3878 = vcmp.eq.s32.totalorder %v3846, 1
      %vm3879 = vcmp.eq.s32.totalorder %v3847, 1
      %vm3880 = vcmp.eq.s32.totalorder %v3848, 1
      %vm3881 = vcmp.eq.s32.totalorder %v3849, 1
      %vm3882 = vcmp.eq.s32.totalorder %v3850, 1
      %vm3883 = vcmp.eq.s32.totalorder %v3851, 1
      %vm3884 = vcmp.eq.s32.totalorder %v3852, 1
      %vm3885 = vcmp.eq.s32.totalorder %v3853, 1
      %vm3886 = vcmp.eq.s32.totalorder %v3854, 1
      %vm3887 = vcmp.eq.s32.totalorder %v3855, 1
      %vm3888 = vcmp.eq.s32.totalorder %v3856, 1
      %vm3889 = vcmp.eq.s32.totalorder %v3857, 1
      %vm3890 = vcmp.eq.s32.totalorder %v3858, 1
      %vm3891 = vcmp.eq.s32.totalorder %v3859, 1
      %vm3892 = vcmp.eq.s32.totalorder %v3860, 1
      %vm3893 = vcmp.eq.s32.totalorder %v3861, 1
      %vm3894 = vcmp.eq.s32.totalorder %v3862, 1
      %vm3895 = vcmp.eq.s32.totalorder %v3863, 1
      %vm3896 = vcmp.eq.s32.totalorder %v3864, 1
      %vm3897 = vcmp.eq.s32.totalorder %v3865, 1
      %vm3898 = vcmp.eq.s32.totalorder %v3866, 1
      %vm3899 = vcmp.eq.s32.totalorder %v3867, 1
      %vm3900 = vcmp.eq.s32.totalorder %v3868, 1
      %v3901 = vsel %vm3869, %v679, 0.0
      %v3902 = vsel %vm3870, %v678, 0.0
      %v3903 = vsel %vm3871, %v677, 0.0
      %v3904 = vsel %vm3872, %v676, 0.0
      %v3905 = vsel %vm3873, %v675, 0.0
      %v3906 = vsel %vm3874, %v674, 0.0
      %v3907 = vsel %vm3875, %v673, 0.0
      %v3908 = vsel %vm3876, %v672, 0.0
      %v3909 = vsel %vm3877, %v671, 0.0
      %v3910 = vsel %vm3878, %v670, 0.0
      %v3911 = vsel %vm3879, %v669, 0.0
      %v3912 = vsel %vm3880, %v668, 0.0
      %v3913 = vsel %vm3881, %v667, 0.0
      %v3914 = vsel %vm3882, %v666, 0.0
      %v3915 = vsel %vm3883, %v665, 0.0
      %v3916 = vsel %vm3884, %v664, 0.0
      %v3917 = vsel %vm3885, %v663, 0.0
      %v3918 = vsel %vm3886, %v662, 0.0
      %v3919 = vsel %vm3887, %v661, 0.0
      %v3920 = vsel %vm3888, %v660, 0.0
      %v3921 = vsel %vm3889, %v659, 0.0
      %v3922 = vsel %vm3890, %v658, 0.0
      %v3923 = vsel %vm3891, %v657, 0.0
      %v3924 = vsel %vm3892, %v656, 0.0
      %v3925 = vsel %vm3893, %v655, 0.0
      %v3926 = vsel %vm3894, %v654, 0.0
      %v3927 = vsel %vm3895, %v653, 0.0
      %v3928 = vsel %vm3896, %v652, 0.0
      %v3929 = vsel %vm3897, %v651, 0.0
      %v3930 = vsel %vm3898, %v650, 0.0
      %v3931 = vsel %vm3899, %v681, 0.0
      %v3932 = vsel %vm3900, %v680, 0.0
      %s3933 = scalar_lea.vmem %s1, 48
      %v3934 = vld [vmem:[%s3933] sm:$0xff]
      %v3936 = vsel %vm1325, %v3901, 0
      %v3939 = vsel %vm1325, %v3902, 0
      %v3942 = vsel %vm1325, %v3903, 0
      %v3945 = vsel %vm1325, %v3904, 0
      %v3948 = vsel %vm1325, %v3905, 0
      %v3951 = vsel %vm1325, %v3906, 0
      %v3954 = vsel %vm1325, %v3907, 0
      %v3957 = vsel %vm1325, %v3908, 0
      %v3960 = vsel %vm1325, %v3909, 0
      %v3963 = vsel %vm1325, %v3910, 0
      %v3966 = vsel %vm1325, %v3911, 0
      %v3969 = vsel %vm1325, %v3912, 0
      %v3972 = vsel %vm1325, %v3913, 0
      %v3975 = vsel %vm1325, %v3914, 0
      %v3978 = vsel %vm1325, %v3915, 0
      %v3981 = vsel %vm1325, %v3916, 0
      %v3984 = vsel %vm1325, %v3917, 0
      %v3987 = vsel %vm1325, %v3918, 0
      %v3990 = vsel %vm1325, %v3919, 0
      %v3993 = vsel %vm1325, %v3920, 0
      %v3996 = vsel %vm1325, %v3921, 0
      %v3999 = vsel %vm1325, %v3922, 0
      %v4002 = vsel %vm1325, %v3923, 0
      %v4005 = vsel %vm1325, %v3924, 0
      %v4008 = vsel %vm1325, %v3925, 0
      %v4011 = vsel %vm1325, %v3926, 0
      %v4014 = vsel %vm1325, %v3927, 0
      %v4017 = vsel %vm1325, %v3928, 0
      %v4020 = vsel %vm1325, %v3929, 0
      %v4023 = vsel %vm1325, %v3930, 0
      %v4026 = vsel %vm1325, %v3931, 0
      %v4029 = vsel %vm1325, %v3932, 0
      %4031 = vmatpush.msra.mxu0 0.0
      %4032 = vmatpush.msra.mxu0 0.0
      %4033 = vmatpush.msra.mxu0 0.0
      %4034 = vmatpush.msra.mxu0 0.0
      %4035 = vmatpush.msra.mxu0 0.0
      %4036 = vmatpush.msra.mxu0 0.0
      %4037 = vmatpush.msra.mxu0 0.0
      %4038 = vmatpush.msra.mxu0 0.0
      %4039 = vmatpush.msra.mxu0 0.0
      %4040 = vmatpush.msra.mxu0 0.0
      %4041 = vmatpush.msra.mxu0 0.0
      %4042 = vmatpush.msra.mxu0 0.0
      %4043 = vmatpush.msra.mxu0 0.0
      %4044 = vmatpush.msra.mxu0 0.0
      %4045 = vmatpush.msra.mxu0 0.0
      %4046 = vmatpush.msra.mxu0 %v3934
      %4047 = vmatmul.f32.gmra.mxu0 %v3936
      %v4048 = vpop.f32.mrf.mxu0
      %v4049 = vadd.f32 0.0, %v4048
      %4050 = vmatmul.f32.gmra.mxu0 %v3939
      %v4051 = vpop.f32.mrf.mxu0
      %v4052 = vadd.f32 0.0, %v4051
      %4053 = vmatmul.f32.gmra.mxu0 %v3942
      %v4054 = vpop.f32.mrf.mxu0
      %v4055 = vadd.f32 0.0, %v4054
      %4056 = vmatmul.f32.gmra.mxu0 %v3945
      %v4057 = vpop.f32.mrf.mxu0
      %v4058 = vadd.f32 0.0, %v4057
      %4059 = vmatmul.f32.gmra.mxu0 %v3948
      %v4060 = vpop.f32.mrf.mxu0
      %v4061 = vadd.f32 0.0, %v4060
      %4062 = vmatmul.f32.gmra.mxu0 %v3951
      %v4063 = vpop.f32.mrf.mxu0
      %v4064 = vadd.f32 0.0, %v4063
      %4065 = vmatmul.f32.gmra.mxu0 %v3954
      %v4066 = vpop.f32.mrf.mxu0
      %v4067 = vadd.f32 0.0, %v4066
      %4068 = vmatmul.f32.gmra.mxu0 %v3957
      %v4069 = vpop.f32.mrf.mxu0
      %v4070 = vadd.f32 0.0, %v4069
      %4071 = vmatmul.f32.gmra.mxu0 %v3960
      %v4072 = vpop.f32.mrf.mxu0
      %v4073 = vadd.f32 0.0, %v4072
      %4074 = vmatmul.f32.gmra.mxu0 %v3963
      %v4075 = vpop.f32.mrf.mxu0
      %v4076 = vadd.f32 0.0, %v4075
      %4077 = vmatmul.f32.gmra.mxu0 %v3966
      %v4078 = vpop.f32.mrf.mxu0
      %v4079 = vadd.f32 0.0, %v4078
      %4080 = vmatmul.f32.gmra.mxu0 %v3969
      %v4081 = vpop.f32.mrf.mxu0
      %v4082 = vadd.f32 0.0, %v4081
      %4083 = vmatmul.f32.gmra.mxu0 %v3972
      %v4084 = vpop.f32.mrf.mxu0
      %v4085 = vadd.f32 0.0, %v4084
      %4086 = vmatmul.f32.gmra.mxu0 %v3975
      %v4087 = vpop.f32.mrf.mxu0
      %v4088 = vadd.f32 0.0, %v4087
      %4089 = vmatmul.f32.gmra.mxu0 %v3978
      %v4090 = vpop.f32.mrf.mxu0
      %v4091 = vadd.f32 0.0, %v4090
      %4092 = vmatmul.f32.gmra.mxu0 %v3981
      %v4093 = vpop.f32.mrf.mxu0
      %v4094 = vadd.f32 0.0, %v4093
      %4095 = vmatmul.f32.gmra.mxu0 %v3984
      %v4096 = vpop.f32.mrf.mxu0
      %v4097 = vadd.f32 0.0, %v4096
      %4098 = vmatmul.f32.gmra.mxu0 %v3987
      %v4099 = vpop.f32.mrf.mxu0
      %v4100 = vadd.f32 0.0, %v4099
      %4101 = vmatmul.f32.gmra.mxu0 %v3990
      %v4102 = vpop.f32.mrf.mxu0
      %v4103 = vadd.f32 0.0, %v4102
      %4104 = vmatmul.f32.gmra.mxu0 %v3993
      %v4105 = vpop.f32.mrf.mxu0
      %v4106 = vadd.f32 0.0, %v4105
      %4107 = vmatmul.f32.gmra.mxu0 %v3996
      %v4108 = vpop.f32.mrf.mxu0
      %v4109 = vadd.f32 0.0, %v4108
      %4110 = vmatmul.f32.gmra.mxu0 %v3999
      %v4111 = vpop.f32.mrf.mxu0
      %v4112 = vadd.f32 0.0, %v4111
      %4113 = vmatmul.f32.gmra.mxu0 %v4002
      %v4114 = vpop.f32.mrf.mxu0
      %v4115 = vadd.f32 0.0, %v4114
      %4116 = vmatmul.f32.gmra.mxu0 %v4005
      %v4117 = vpop.f32.mrf.mxu0
      %v4118 = vadd.f32 0.0, %v4117
      %4119 = vmatmul.f32.gmra.mxu0 %v4008
      %v4120 = vpop.f32.mrf.mxu0
      %v4121 = vadd.f32 0.0, %v4120
      %4122 = vmatmul.f32.gmra.mxu0 %v4011
      %v4123 = vpop.f32.mrf.mxu0
      %v4124 = vadd.f32 0.0, %v4123
      %4125 = vmatmul.f32.gmra.mxu0 %v4014
      %v4126 = vpop.f32.mrf.mxu0
      %v4127 = vadd.f32 0.0, %v4126
      %4128 = vmatmul.f32.gmra.mxu0 %v4017
      %v4129 = vpop.f32.mrf.mxu0
      %v4130 = vadd.f32 0.0, %v4129
      %4131 = vmatmul.f32.gmra.mxu0 %v4020
      %v4132 = vpop.f32.mrf.mxu0
      %v4133 = vadd.f32 0.0, %v4132
      %4134 = vmatmul.f32.gmra.mxu0 %v4023
      %v4135 = vpop.f32.mrf.mxu0
      %v4136 = vadd.f32 0.0, %v4135
      %4137 = vmatmul.f32.gmra.mxu0 %v4026
      %v4138 = vpop.f32.mrf.mxu0
      %v4139 = vadd.f32 0.0, %v4138
      %4140 = vmatmul.f32.gmra.mxu0 %v4029
      %v4141 = vpop.f32.mrf.mxu0
      %v4142 = vadd.f32 0.0, %v4141
      %4143 = vdwg.mxu0
      %v4144 = vadd.f32 %v3613, %v4049
      %v4145 = vadd.f32 %v3614, %v4052
      %v4146 = vadd.f32 %v3615, %v4055
      %v4147 = vadd.f32 %v3616, %v4058
      %v4148 = vadd.f32 %v3617, %v4061
      %v4149 = vadd.f32 %v3618, %v4064
      %v4150 = vadd.f32 %v3619, %v4067
      %v4151 = vadd.f32 %v3620, %v4070
      %v4152 = vadd.f32 %v3621, %v4073
      %v4153 = vadd.f32 %v3622, %v4076
      %v4154 = vadd.f32 %v3623, %v4079
      %v4155 = vadd.f32 %v3624, %v4082
      %v4156 = vadd.f32 %v3625, %v4085
      %v4157 = vadd.f32 %v3626, %v4088
      %v4158 = vadd.f32 %v3627, %v4091
      %v4159 = vadd.f32 %v3628, %v4094
      %v4160 = vadd.f32 %v3629, %v4097
      %v4161 = vadd.f32 %v3630, %v4100
      %v4162 = vadd.f32 %v3631, %v4103
      %v4163 = vadd.f32 %v3632, %v4106
      %v4164 = vadd.f32 %v3633, %v4109
      %v4165 = vadd.f32 %v3634, %v4112
      %v4166 = vadd.f32 %v3635, %v4115
      %v4167 = vadd.f32 %v3636, %v4118
      %v4168 = vadd.f32 %v3637, %v4121
      %v4169 = vadd.f32 %v3638, %v4124
      %v4170 = vadd.f32 %v3639, %v4127
      %v4171 = vadd.f32 %v3640, %v4130
      %v4172 = vadd.f32 %v3641, %v4133
      %v4173 = vadd.f32 %v3642, %v4136
      %v4174 = vadd.f32 %v3643, %v4139
      %v4175 = vadd.f32 %v3644, %v4142
      %vm4176 = vmand %vm3741, %vm1099
      %vm4177 = vmand %vm3742, %vm1100
      %vm4178 = vmand %vm3743, %vm1101
      %vm4179 = vmand %vm3744, %vm1102
      %vm4180 = vmand %vm3745, %vm1103
      %vm4181 = vmand %vm3746, %vm1104
      %vm4182 = vmand %vm3747, %vm1105
      %vm4183 = vmand %vm3748, %vm1106
      %vm4184 = vmand %vm3749, %vm1107
      %vm4185 = vmand %vm3750, %vm1108
      %vm4186 = vmand %vm3751, %vm1109
      %vm4187 = vmand %vm3752, %vm1110
      %vm4188 = vmand %vm3753, %vm1111
      %vm4189 = vmand %vm3754, %vm1112
      %vm4190 = vmand %vm3755, %vm1113
      %vm4191 = vmand %vm3756, %vm1114
      %vm4192 = vmand %vm3757, %vm1115
      %vm4193 = vmand %vm3758, %vm1116
      %vm4194 = vmand %vm3759, %vm1117
      %vm4195 = vmand %vm3760, %vm1118
      %vm4196 = vmand %vm3761, %vm1119
      %vm4197 = vmand %vm3762, %vm1120
      %vm4198 = vmand %vm3763, %vm1121
      %vm4199 = vmand %vm3764, %vm1122
      %vm4200 = vmand %vm3765, %vm1123
      %vm4201 = vmand %vm3766, %vm1124
      %vm4202 = vmand %vm3767, %vm1125
      %vm4203 = vmand %vm3768, %vm1126
      %vm4204 = vmand %vm3769, %vm1127
      %vm4205 = vmand %vm3770, %vm1128
      %vm4206 = vmand %vm3771, %vm1129
      %vm4207 = vmand %vm3772, %vm1130
      %vm4208 = vmand %vm4176, %vm1163
      %vm4209 = vmand %vm4177, %vm1164
      %vm4210 = vmand %vm4178, %vm1165
      %vm4211 = vmand %vm4179, %vm1166
      %vm4212 = vmand %vm4180, %vm1167
      %vm4213 = vmand %vm4181, %vm1168
      %vm4214 = vmand %vm4182, %vm1169
      %vm4215 = vmand %vm4183, %vm1170
      %vm4216 = vmand %vm4184, %vm1171
      %vm4217 = vmand %vm4185, %vm1172
      %vm4218 = vmand %vm4186, %vm1173
      %vm4219 = vmand %vm4187, %vm1174
      %vm4220 = vmand %vm4188, %vm1175
      %vm4221 = vmand %vm4189, %vm1176
      %vm4222 = vmand %vm4190, %vm1177
      %vm4223 = vmand %vm4191, %vm1178
      %vm4224 = vmand %vm4192, %vm1179
      %vm4225 = vmand %vm4193, %vm1180
      %vm4226 = vmand %vm4194, %vm1181
      %vm4227 = vmand %vm4195, %vm1182
      %vm4228 = vmand %vm4196, %vm1183
      %vm4229 = vmand %vm4197, %vm1184
      %vm4230 = vmand %vm4198, %vm1185
      %vm4231 = vmand %vm4199, %vm1186
      %vm4232 = vmand %vm4200, %vm1187
      %vm4233 = vmand %vm4201, %vm1188
      %vm4234 = vmand %vm4202, %vm1189
      %vm4235 = vmand %vm4203, %vm1190
      %vm4236 = vmand %vm4204, %vm1191
      %vm4237 = vmand %vm4205, %vm1192
      %vm4238 = vmand %vm4206, %vm1193
      %vm4239 = vmand %vm4207, %vm1194
      %v4240 = vsel %vm4208, 1, 0
      %v4241 = vsel %vm4209, 1, 0
      %v4242 = vsel %vm4210, 1, 0
      %v4243 = vsel %vm4211, 1, 0
      %v4244 = vsel %vm4212, 1, 0
      %v4245 = vsel %vm4213, 1, 0
      %v4246 = vsel %vm4214, 1, 0
      %v4247 = vsel %vm4215, 1, 0
      %v4248 = vsel %vm4216, 1, 0
      %v4249 = vsel %vm4217, 1, 0
      %v4250 = vsel %vm4218, 1, 0
      %v4251 = vsel %vm4219, 1, 0
      %v4252 = vsel %vm4220, 1, 0
      %v4253 = vsel %vm4221, 1, 0
      %v4254 = vsel %vm4222, 1, 0
      %v4255 = vsel %vm4223, 1, 0
      %v4256 = vsel %vm4224, 1, 0
      %v4257 = vsel %vm4225, 1, 0
      %v4258 = vsel %vm4226, 1, 0
      %v4259 = vsel %vm4227, 1, 0
      %v4260 = vsel %vm4228, 1, 0
      %v4261 = vsel %vm4229, 1, 0
      %v4262 = vsel %vm4230, 1, 0
      %v4263 = vsel %vm4231, 1, 0
      %v4264 = vsel %vm4232, 1, 0
      %v4265 = vsel %vm4233, 1, 0
      %v4266 = vsel %vm4234, 1, 0
      %v4267 = vsel %vm4235, 1, 0
      %v4268 = vsel %vm4236, 1, 0
      %v4269 = vsel %vm4237, 1, 0
      %v4270 = vsel %vm4238, 1, 0
      %v4271 = vsel %vm4239, 1, 0
      %vm4272 = vcmp.eq.s32.totalorder %v4240, 1
      %vm4273 = vcmp.eq.s32.totalorder %v4241, 1
      %vm4274 = vcmp.eq.s32.totalorder %v4242, 1
      %vm4275 = vcmp.eq.s32.totalorder %v4243, 1
      %vm4276 = vcmp.eq.s32.totalorder %v4244, 1
      %vm4277 = vcmp.eq.s32.totalorder %v4245, 1
      %vm4278 = vcmp.eq.s32.totalorder %v4246, 1
      %vm4279 = vcmp.eq.s32.totalorder %v4247, 1
      %vm4280 = vcmp.eq.s32.totalorder %v4248, 1
      %vm4281 = vcmp.eq.s32.totalorder %v4249, 1
      %vm4282 = vcmp.eq.s32.totalorder %v4250, 1
      %vm4283 = vcmp.eq.s32.totalorder %v4251, 1
      %vm4284 = vcmp.eq.s32.totalorder %v4252, 1
      %vm4285 = vcmp.eq.s32.totalorder %v4253, 1
      %vm4286 = vcmp.eq.s32.totalorder %v4254, 1
      %vm4287 = vcmp.eq.s32.totalorder %v4255, 1
      %vm4288 = vcmp.eq.s32.totalorder %v4256, 1
      %vm4289 = vcmp.eq.s32.totalorder %v4257, 1
      %vm4290 = vcmp.eq.s32.totalorder %v4258, 1
      %vm4291 = vcmp.eq.s32.totalorder %v4259, 1
      %vm4292 = vcmp.eq.s32.totalorder %v4260, 1
      %vm4293 = vcmp.eq.s32.totalorder %v4261, 1
      %vm4294 = vcmp.eq.s32.totalorder %v4262, 1
      %vm4295 = vcmp.eq.s32.totalorder %v4263, 1
      %vm4296 = vcmp.eq.s32.totalorder %v4264, 1
      %vm4297 = vcmp.eq.s32.totalorder %v4265, 1
      %vm4298 = vcmp.eq.s32.totalorder %v4266, 1
      %vm4299 = vcmp.eq.s32.totalorder %v4267, 1
      %vm4300 = vcmp.eq.s32.totalorder %v4268, 1
      %vm4301 = vcmp.eq.s32.totalorder %v4269, 1
      %vm4302 = vcmp.eq.s32.totalorder %v4270, 1
      %vm4303 = vcmp.eq.s32.totalorder %v4271, 1
      %v4304 = vsel %vm4272, %v362, 0.0
      %v4305 = vsel %vm4273, %v363, 0.0
      %v4306 = vsel %vm4274, %v364, 0.0
      %v4307 = vsel %vm4275, %v365, 0.0
      %v4308 = vsel %vm4276, %v366, 0.0
      %v4309 = vsel %vm4277, %v367, 0.0
      %v4310 = vsel %vm4278, %v368, 0.0
      %v4311 = vsel %vm4279, %v369, 0.0
      %v4312 = vsel %vm4280, %v370, 0.0
      %v4313 = vsel %vm4281, %v371, 0.0
      %v4314 = vsel %vm4282, %v372, 0.0
      %v4315 = vsel %vm4283, %v373, 0.0
      %v4316 = vsel %vm4284, %v374, 0.0
      %v4317 = vsel %vm4285, %v375, 0.0
      %v4318 = vsel %vm4286, %v376, 0.0
      %v4319 = vsel %vm4287, %v377, 0.0
      %v4320 = vsel %vm4288, %v378, 0.0
      %v4321 = vsel %vm4289, %v379, 0.0
      %v4322 = vsel %vm4290, %v380, 0.0
      %v4323 = vsel %vm4291, %v381, 0.0
      %v4324 = vsel %vm4292, %v382, 0.0
      %v4325 = vsel %vm4293, %v383, 0.0
      %v4326 = vsel %vm4294, %v384, 0.0
      %v4327 = vsel %vm4295, %v385, 0.0
      %v4328 = vsel %vm4296, %v386, 0.0
      %v4329 = vsel %vm4297, %v387, 0.0
      %v4330 = vsel %vm4298, %v388, 0.0
      %v4331 = vsel %vm4299, %v389, 0.0
      %v4332 = vsel %vm4300, %v390, 0.0
      %v4333 = vsel %vm4301, %v391, 0.0
      %v4334 = vsel %vm4302, %v360, 0.0
      %v4335 = vsel %vm4303, %v361, 0.0
      %s4336 = scalar_lea.vmem %s1, 56
      %v4337 = vld [vmem:[%s4336] sm:$0xff]
      %v4339 = vsel %vm1325, %v4304, 0
      %v4342 = vsel %vm1325, %v4305, 0
      %v4345 = vsel %vm1325, %v4306, 0
      %v4348 = vsel %vm1325, %v4307, 0
      %v4351 = vsel %vm1325, %v4308, 0
      %v4354 = vsel %vm1325, %v4309, 0
      %v4357 = vsel %vm1325, %v4310, 0
      %v4360 = vsel %vm1325, %v4311, 0
      %v4363 = vsel %vm1325, %v4312, 0
      %v4366 = vsel %vm1325, %v4313, 0
      %v4369 = vsel %vm1325, %v4314, 0
      %v4372 = vsel %vm1325, %v4315, 0
      %v4375 = vsel %vm1325, %v4316, 0
      %v4378 = vsel %vm1325, %v4317, 0
      %v4381 = vsel %vm1325, %v4318, 0
      %v4384 = vsel %vm1325, %v4319, 0
      %v4387 = vsel %vm1325, %v4320, 0
      %v4390 = vsel %vm1325, %v4321, 0
      %v4393 = vsel %vm1325, %v4322, 0
      %v4396 = vsel %vm1325, %v4323, 0
      %v4399 = vsel %vm1325, %v4324, 0
      %v4402 = vsel %vm1325, %v4325, 0
      %v4405 = vsel %vm1325, %v4326, 0
      %v4408 = vsel %vm1325, %v4327, 0
      %v4411 = vsel %vm1325, %v4328, 0
      %v4414 = vsel %vm1325, %v4329, 0
      %v4417 = vsel %vm1325, %v4330, 0
      %v4420 = vsel %vm1325, %v4331, 0
      %v4423 = vsel %vm1325, %v4332, 0
      %v4426 = vsel %vm1325, %v4333, 0
      %v4429 = vsel %vm1325, %v4334, 0
      %v4432 = vsel %vm1325, %v4335, 0
      %4434 = vmatpush.msra.mxu0 0.0
      %4435 = vmatpush.msra.mxu0 0.0
      %4436 = vmatpush.msra.mxu0 0.0
      %4437 = vmatpush.msra.mxu0 0.0
      %4438 = vmatpush.msra.mxu0 0.0
      %4439 = vmatpush.msra.mxu0 0.0
      %4440 = vmatpush.msra.mxu0 0.0
      %4441 = vmatpush.msra.mxu0 0.0
      %4442 = vmatpush.msra.mxu0 0.0
      %4443 = vmatpush.msra.mxu0 0.0
      %4444 = vmatpush.msra.mxu0 0.0
      %4445 = vmatpush.msra.mxu0 0.0
      %4446 = vmatpush.msra.mxu0 0.0
      %4447 = vmatpush.msra.mxu0 0.0
      %4448 = vmatpush.msra.mxu0 0.0
      %4449 = vmatpush.msra.mxu0 %v4337
      %4450 = vmatmul.f32.gmra.mxu0 %v4339
      %v4451 = vpop.f32.mrf.mxu0
      %v4452 = vadd.f32 0.0, %v4451
      %4453 = vmatmul.f32.gmra.mxu0 %v4342
      %v4454 = vpop.f32.mrf.mxu0
      %v4455 = vadd.f32 0.0, %v4454
      %4456 = vmatmul.f32.gmra.mxu0 %v4345
      %v4457 = vpop.f32.mrf.mxu0
      %v4458 = vadd.f32 0.0, %v4457
      %4459 = vmatmul.f32.gmra.mxu0 %v4348
      %v4460 = vpop.f32.mrf.mxu0
      %v4461 = vadd.f32 0.0, %v4460
      %4462 = vmatmul.f32.gmra.mxu0 %v4351
      %v4463 = vpop.f32.mrf.mxu0
      %v4464 = vadd.f32 0.0, %v4463
      %4465 = vmatmul.f32.gmra.mxu0 %v4354
      %v4466 = vpop.f32.mrf.mxu0
      %v4467 = vadd.f32 0.0, %v4466
      %4468 = vmatmul.f32.gmra.mxu0 %v4357
      %v4469 = vpop.f32.mrf.mxu0
      %v4470 = vadd.f32 0.0, %v4469
      %4471 = vmatmul.f32.gmra.mxu0 %v4360
      %v4472 = vpop.f32.mrf.mxu0
      %v4473 = vadd.f32 0.0, %v4472
      %4474 = vmatmul.f32.gmra.mxu0 %v4363
      %v4475 = vpop.f32.mrf.mxu0
      %v4476 = vadd.f32 0.0, %v4475
      %4477 = vmatmul.f32.gmra.mxu0 %v4366
      %v4478 = vpop.f32.mrf.mxu0
      %v4479 = vadd.f32 0.0, %v4478
      %4480 = vmatmul.f32.gmra.mxu0 %v4369
      %v4481 = vpop.f32.mrf.mxu0
      %v4482 = vadd.f32 0.0, %v4481
      %4483 = vmatmul.f32.gmra.mxu0 %v4372
      %v4484 = vpop.f32.mrf.mxu0
      %v4485 = vadd.f32 0.0, %v4484
      %4486 = vmatmul.f32.gmra.mxu0 %v4375
      %v4487 = vpop.f32.mrf.mxu0
      %v4488 = vadd.f32 0.0, %v4487
      %4489 = vmatmul.f32.gmra.mxu0 %v4378
      %v4490 = vpop.f32.mrf.mxu0
      %v4491 = vadd.f32 0.0, %v4490
      %4492 = vmatmul.f32.gmra.mxu0 %v4381
      %v4493 = vpop.f32.mrf.mxu0
      %v4494 = vadd.f32 0.0, %v4493
      %4495 = vmatmul.f32.gmra.mxu0 %v4384
      %v4496 = vpop.f32.mrf.mxu0
      %v4497 = vadd.f32 0.0, %v4496
      %4498 = vmatmul.f32.gmra.mxu0 %v4387
      %v4499 = vpop.f32.mrf.mxu0
      %v4500 = vadd.f32 0.0, %v4499
      %4501 = vmatmul.f32.gmra.mxu0 %v4390
      %v4502 = vpop.f32.mrf.mxu0
      %v4503 = vadd.f32 0.0, %v4502
      %4504 = vmatmul.f32.gmra.mxu0 %v4393
      %v4505 = vpop.f32.mrf.mxu0
      %v4506 = vadd.f32 0.0, %v4505
      %4507 = vmatmul.f32.gmra.mxu0 %v4396
      %v4508 = vpop.f32.mrf.mxu0
      %v4509 = vadd.f32 0.0, %v4508
      %4510 = vmatmul.f32.gmra.mxu0 %v4399
      %v4511 = vpop.f32.mrf.mxu0
      %v4512 = vadd.f32 0.0, %v4511
      %4513 = vmatmul.f32.gmra.mxu0 %v4402
      %v4514 = vpop.f32.mrf.mxu0
      %v4515 = vadd.f32 0.0, %v4514
      %4516 = vmatmul.f32.gmra.mxu0 %v4405
      %v4517 = vpop.f32.mrf.mxu0
      %v4518 = vadd.f32 0.0, %v4517
      %4519 = vmatmul.f32.gmra.mxu0 %v4408
      %v4520 = vpop.f32.mrf.mxu0
      %v4521 = vadd.f32 0.0, %v4520
      %4522 = vmatmul.f32.gmra.mxu0 %v4411
      %v4523 = vpop.f32.mrf.mxu0
      %v4524 = vadd.f32 0.0, %v4523
      %4525 = vmatmul.f32.gmra.mxu0 %v4414
      %v4526 = vpop.f32.mrf.mxu0
      %v4527 = vadd.f32 0.0, %v4526
      %4528 = vmatmul.f32.gmra.mxu0 %v4417
      %v4529 = vpop.f32.mrf.mxu0
      %v4530 = vadd.f32 0.0, %v4529
      %4531 = vmatmul.f32.gmra.mxu0 %v4420
      %v4532 = vpop.f32.mrf.mxu0
      %v4533 = vadd.f32 0.0, %v4532
      %4534 = vmatmul.f32.gmra.mxu0 %v4423
      %v4535 = vpop.f32.mrf.mxu0
      %v4536 = vadd.f32 0.0, %v4535
      %4537 = vmatmul.f32.gmra.mxu0 %v4426
      %v4538 = vpop.f32.mrf.mxu0
      %v4539 = vadd.f32 0.0, %v4538
      %4540 = vmatmul.f32.gmra.mxu0 %v4429
      %v4541 = vpop.f32.mrf.mxu0
      %v4542 = vadd.f32 0.0, %v4541
      %4543 = vmatmul.f32.gmra.mxu0 %v4432
      %v4544 = vpop.f32.mrf.mxu0
      %v4545 = vadd.f32 0.0, %v4544
      %4546 = vdwg.mxu0
      %v4547 = vadd.f32 %v4144, %v4452
      %v4548 = vadd.f32 %v4145, %v4455
      %v4549 = vadd.f32 %v4146, %v4458
      %v4550 = vadd.f32 %v4147, %v4461
      %v4551 = vadd.f32 %v4148, %v4464
      %v4552 = vadd.f32 %v4149, %v4467
      %v4553 = vadd.f32 %v4150, %v4470
      %v4554 = vadd.f32 %v4151, %v4473
      %v4555 = vadd.f32 %v4152, %v4476
      %v4556 = vadd.f32 %v4153, %v4479
      %v4557 = vadd.f32 %v4154, %v4482
      %v4558 = vadd.f32 %v4155, %v4485
      %v4559 = vadd.f32 %v4156, %v4488
      %v4560 = vadd.f32 %v4157, %v4491
      %v4561 = vadd.f32 %v4158, %v4494
      %v4562 = vadd.f32 %v4159, %v4497
      %v4563 = vadd.f32 %v4160, %v4500
      %v4564 = vadd.f32 %v4161, %v4503
      %v4565 = vadd.f32 %v4162, %v4506
      %v4566 = vadd.f32 %v4163, %v4509
      %v4567 = vadd.f32 %v4164, %v4512
      %v4568 = vadd.f32 %v4165, %v4515
      %v4569 = vadd.f32 %v4166, %v4518
      %v4570 = vadd.f32 %v4167, %v4521
      %v4571 = vadd.f32 %v4168, %v4524
      %v4572 = vadd.f32 %v4169, %v4527
      %v4573 = vadd.f32 %v4170, %v4530
      %v4574 = vadd.f32 %v4171, %v4533
      %v4575 = vadd.f32 %v4172, %v4536
      %v4576 = vadd.f32 %v4173, %v4539
      %v4577 = vadd.f32 %v4174, %v4542
      %v4578 = vadd.f32 %v4175, %v4545
      %vm4579 = vmand %vm3741, %vm1841
      %vm4580 = vmand %vm3742, %vm1842
      %vm4581 = vmand %vm3743, %vm1843
      %vm4582 = vmand %vm3744, %vm1844
      %vm4583 = vmand %vm3745, %vm1845
      %vm4584 = vmand %vm3746, %vm1846
      %vm4585 = vmand %vm3747, %vm1847
      %vm4586 = vmand %vm3748, %vm1848
      %vm4587 = vmand %vm3749, %vm1849
      %vm4588 = vmand %vm3750, %vm1850
      %vm4589 = vmand %vm3751, %vm1851
      %vm4590 = vmand %vm3752, %vm1852
      %vm4591 = vmand %vm3753, %vm1853
      %vm4592 = vmand %vm3754, %vm1854
      %vm4593 = vmand %vm3755, %vm1855
      %vm4594 = vmand %vm3756, %vm1856
      %vm4595 = vmand %vm3757, %vm1857
      %vm4596 = vmand %vm3758, %vm1858
      %vm4597 = vmand %vm3759, %vm1859
      %vm4598 = vmand %vm3760, %vm1860
      %vm4599 = vmand %vm3761, %vm1861
      %vm4600 = vmand %vm3762, %vm1862
      %vm4601 = vmand %vm3763, %vm1863
      %vm4602 = vmand %vm3764, %vm1864
      %vm4603 = vmand %vm3765, %vm1865
      %vm4604 = vmand %vm3766, %vm1866
      %vm4605 = vmand %vm3767, %vm1867
      %vm4606 = vmand %vm3768, %vm1868
      %vm4607 = vmand %vm3769, %vm1869
      %vm4608 = vmand %vm3770, %vm1870
      %vm4609 = vmand %vm3771, %vm1871
      %vm4610 = vmand %vm3772, %vm1872
      %vm4611 = vmand %vm4579, %vm1905
      %vm4612 = vmand %vm4580, %vm1906
      %vm4613 = vmand %vm4581, %vm1907
      %vm4614 = vmand %vm4582, %vm1908
      %vm4615 = vmand %vm4583, %vm1909
      %vm4616 = vmand %vm4584, %vm1910
      %vm4617 = vmand %vm4585, %vm1911
      %vm4618 = vmand %vm4586, %vm1912
      %vm4619 = vmand %vm4587, %vm1913
      %vm4620 = vmand %vm4588, %vm1914
      %vm4621 = vmand %vm4589, %vm1915
      %vm4622 = vmand %vm4590, %vm1916
      %vm4623 = vmand %vm4591, %vm1917
      %vm4624 = vmand %vm4592, %vm1918
      %vm4625 = vmand %vm4593, %vm1919
      %vm4626 = vmand %vm4594, %vm1920
      %vm4627 = vmand %vm4595, %vm1921
      %vm4628 = vmand %vm4596, %vm1922
      %vm4629 = vmand %vm4597, %vm1923
      %vm4630 = vmand %vm4598, %vm1924
      %vm4631 = vmand %vm4599, %vm1925
      %vm4632 = vmand %vm4600, %vm1926
      %vm4633 = vmand %vm4601, %vm1927
      %vm4634 = vmand %vm4602, %vm1928
      %vm4635 = vmand %vm4603, %vm1929
      %vm4636 = vmand %vm4604, %vm1930
      %vm4637 = vmand %vm4605, %vm1931
      %vm4638 = vmand %vm4606, %vm1932
      %vm4639 = vmand %vm4607, %vm1933
      %vm4640 = vmand %vm4608, %vm1934
      %vm4641 = vmand %vm4609, %vm1935
      %vm4642 = vmand %vm4610, %vm1936
      %v4643 = vsel %vm4611, 1, 0
      %v4644 = vsel %vm4612, 1, 0
      %v4645 = vsel %vm4613, 1, 0
      %v4646 = vsel %vm4614, 1, 0
      %v4647 = vsel %vm4615, 1, 0
      %v4648 = vsel %vm4616, 1, 0
      %v4649 = vsel %vm4617, 1, 0
      %v4650 = vsel %vm4618, 1, 0
      %v4651 = vsel %vm4619, 1, 0
      %v4652 = vsel %vm4620, 1, 0
      %v4653 = vsel %vm4621, 1, 0
      %v4654 = vsel %vm4622, 1, 0
      %v4655 = vsel %vm4623, 1, 0
      %v4656 = vsel %vm4624, 1, 0
      %v4657 = vsel %vm4625, 1, 0
      %v4658 = vsel %vm4626, 1, 0
      %v4659 = vsel %vm4627, 1, 0
      %v4660 = vsel %vm4628, 1, 0
      %v4661 = vsel %vm4629, 1, 0
      %v4662 = vsel %vm4630, 1, 0
      %v4663 = vsel %vm4631, 1, 0
      %v4664 = vsel %vm4632, 1, 0
      %v4665 = vsel %vm4633, 1, 0
      %v4666 = vsel %vm4634, 1, 0
      %v4667 = vsel %vm4635, 1, 0
      %v4668 = vsel %vm4636, 1, 0
      %v4669 = vsel %vm4637, 1, 0
      %v4670 = vsel %vm4638, 1, 0
      %v4671 = vsel %vm4639, 1, 0
      %v4672 = vsel %vm4640, 1, 0
      %v4673 = vsel %vm4641, 1, 0
      %v4674 = vsel %vm4642, 1, 0
      %vm4675 = vcmp.eq.s32.totalorder %v4643, 1
      %vm4676 = vcmp.eq.s32.totalorder %v4644, 1
      %vm4677 = vcmp.eq.s32.totalorder %v4645, 1
      %vm4678 = vcmp.eq.s32.totalorder %v4646, 1
      %vm4679 = vcmp.eq.s32.totalorder %v4647, 1
      %vm4680 = vcmp.eq.s32.totalorder %v4648, 1
      %vm4681 = vcmp.eq.s32.totalorder %v4649, 1
      %vm4682 = vcmp.eq.s32.totalorder %v4650, 1
      %vm4683 = vcmp.eq.s32.totalorder %v4651, 1
      %vm4684 = vcmp.eq.s32.totalorder %v4652, 1
      %vm4685 = vcmp.eq.s32.totalorder %v4653, 1
      %vm4686 = vcmp.eq.s32.totalorder %v4654, 1
      %vm4687 = vcmp.eq.s32.totalorder %v4655, 1
      %vm4688 = vcmp.eq.s32.totalorder %v4656, 1
      %vm4689 = vcmp.eq.s32.totalorder %v4657, 1
      %vm4690 = vcmp.eq.s32.totalorder %v4658, 1
      %vm4691 = vcmp.eq.s32.totalorder %v4659, 1
      %vm4692 = vcmp.eq.s32.totalorder %v4660, 1
      %vm4693 = vcmp.eq.s32.totalorder %v4661, 1
      %vm4694 = vcmp.eq.s32.totalorder %v4662, 1
      %vm4695 = vcmp.eq.s32.totalorder %v4663, 1
      %vm4696 = vcmp.eq.s32.totalorder %v4664, 1
      %vm4697 = vcmp.eq.s32.totalorder %v4665, 1
      %vm4698 = vcmp.eq.s32.totalorder %v4666, 1
      %vm4699 = vcmp.eq.s32.totalorder %v4667, 1
      %vm4700 = vcmp.eq.s32.totalorder %v4668, 1
      %vm4701 = vcmp.eq.s32.totalorder %v4669, 1
      %vm4702 = vcmp.eq.s32.totalorder %v4670, 1
      %vm4703 = vcmp.eq.s32.totalorder %v4671, 1
      %vm4704 = vcmp.eq.s32.totalorder %v4672, 1
      %vm4705 = vcmp.eq.s32.totalorder %v4673, 1
      %vm4706 = vcmp.eq.s32.totalorder %v4674, 1
      %v4707 = vsel %vm4675, %v1805, 0.0
      %v4708 = vsel %vm4676, %v1804, 0.0
      %v4709 = vsel %vm4677, %v1803, 0.0
      %v4710 = vsel %vm4678, %v1802, 0.0
      %v4711 = vsel %vm4679, %v1801, 0.0
      %v4712 = vsel %vm4680, %v1800, 0.0
      %v4713 = vsel %vm4681, %v1799, 0.0
      %v4714 = vsel %vm4682, %v1798, 0.0
      %v4715 = vsel %vm4683, %v1797, 0.0
      %v4716 = vsel %vm4684, %v1796, 0.0
      %v4717 = vsel %vm4685, %v1795, 0.0
      %v4718 = vsel %vm4686, %v1794, 0.0
      %v4719 = vsel %vm4687, %v1793, 0.0
      %v4720 = vsel %vm4688, %v1792, 0.0
      %v4721 = vsel %vm4689, %v1791, 0.0
      %v4722 = vsel %vm4690, %v1790, 0.0
      %v4723 = vsel %vm4691, %v1789, 0.0
      %v4724 = vsel %vm4692, %v1788, 0.0
      %v4725 = vsel %vm4693, %v1787, 0.0
      %v4726 = vsel %vm4694, %v1786, 0.0
      %v4727 = vsel %vm4695, %v1785, 0.0
      %v4728 = vsel %vm4696, %v1784, 0.0
      %v4729 = vsel %vm4697, %v1783, 0.0
      %v4730 = vsel %vm4698, %v1782, 0.0
      %v4731 = vsel %vm4699, %v1781, 0.0
      %v4732 = vsel %vm4700, %v1780, 0.0
      %v4733 = vsel %vm4701, %v1779, 0.0
      %v4734 = vsel %vm4702, %v1778, 0.0
      %v4735 = vsel %vm4703, %v1777, 0.0
      %v4736 = vsel %vm4704, %v1808, 0.0
      %v4737 = vsel %vm4705, %v1807, 0.0
      %v4738 = vsel %vm4706, %v1806, 0.0
      %s4739 = scalar_lea.vmem %s1, 64
      %v4740 = vld [vmem:[%s4739] sm:$0xff]
      %v4742 = vsel %vm1325, %v4707, 0
      %v4745 = vsel %vm1325, %v4708, 0
      %v4748 = vsel %vm1325, %v4709, 0
      %v4751 = vsel %vm1325, %v4710, 0
      %v4754 = vsel %vm1325, %v4711, 0
      %v4757 = vsel %vm1325, %v4712, 0
      %v4760 = vsel %vm1325, %v4713, 0
      %v4763 = vsel %vm1325, %v4714, 0
      %v4766 = vsel %vm1325, %v4715, 0
      %v4769 = vsel %vm1325, %v4716, 0
      %v4772 = vsel %vm1325, %v4717, 0
      %v4775 = vsel %vm1325, %v4718, 0
      %v4778 = vsel %vm1325, %v4719, 0
      %v4781 = vsel %vm1325, %v4720, 0
      %v4784 = vsel %vm1325, %v4721, 0
      %v4787 = vsel %vm1325, %v4722, 0
      %v4790 = vsel %vm1325, %v4723, 0
      %v4793 = vsel %vm1325, %v4724, 0
      %v4796 = vsel %vm1325, %v4725, 0
      %v4799 = vsel %vm1325, %v4726, 0
      %v4802 = vsel %vm1325, %v4727, 0
      %v4805 = vsel %vm1325, %v4728, 0
      %v4808 = vsel %vm1325, %v4729, 0
      %v4811 = vsel %vm1325, %v4730, 0
      %v4814 = vsel %vm1325, %v4731, 0
      %v4817 = vsel %vm1325, %v4732, 0
      %v4820 = vsel %vm1325, %v4733, 0
      %v4823 = vsel %vm1325, %v4734, 0
      %v4826 = vsel %vm1325, %v4735, 0
      %v4829 = vsel %vm1325, %v4736, 0
      %v4832 = vsel %vm1325, %v4737, 0
      %v4835 = vsel %vm1325, %v4738, 0
      %4837 = vmatpush.msra.mxu0 0.0
      %4838 = vmatpush.msra.mxu0 0.0
      %4839 = vmatpush.msra.mxu0 0.0
      %4840 = vmatpush.msra.mxu0 0.0
      %4841 = vmatpush.msra.mxu0 0.0
      %4842 = vmatpush.msra.mxu0 0.0
      %4843 = vmatpush.msra.mxu0 0.0
      %4844 = vmatpush.msra.mxu0 0.0
      %4845 = vmatpush.msra.mxu0 0.0
      %4846 = vmatpush.msra.mxu0 0.0
      %4847 = vmatpush.msra.mxu0 0.0
      %4848 = vmatpush.msra.mxu0 0.0
      %4849 = vmatpush.msra.mxu0 0.0
      %4850 = vmatpush.msra.mxu0 0.0
      %4851 = vmatpush.msra.mxu0 0.0
      %4852 = vmatpush.msra.mxu0 %v4740
      %4853 = vmatmul.f32.gmra.mxu0 %v4742
      %v4854 = vpop.f32.mrf.mxu0
      %v4855 = vadd.f32 0.0, %v4854
      %4856 = vmatmul.f32.gmra.mxu0 %v4745
      %v4857 = vpop.f32.mrf.mxu0
      %v4858 = vadd.f32 0.0, %v4857
      %4859 = vmatmul.f32.gmra.mxu0 %v4748
      %v4860 = vpop.f32.mrf.mxu0
      %v4861 = vadd.f32 0.0, %v4860
      %4862 = vmatmul.f32.gmra.mxu0 %v4751
      %v4863 = vpop.f32.mrf.mxu0
      %v4864 = vadd.f32 0.0, %v4863
      %4865 = vmatmul.f32.gmra.mxu0 %v4754
      %v4866 = vpop.f32.mrf.mxu0
      %v4867 = vadd.f32 0.0, %v4866
      %4868 = vmatmul.f32.gmra.mxu0 %v4757
      %v4869 = vpop.f32.mrf.mxu0
      %v4870 = vadd.f32 0.0, %v4869
      %4871 = vmatmul.f32.gmra.mxu0 %v4760
      %v4872 = vpop.f32.mrf.mxu0
      %v4873 = vadd.f32 0.0, %v4872
      %4874 = vmatmul.f32.gmra.mxu0 %v4763
      %v4875 = vpop.f32.mrf.mxu0
      %v4876 = vadd.f32 0.0, %v4875
      %4877 = vmatmul.f32.gmra.mxu0 %v4766
      %v4878 = vpop.f32.mrf.mxu0
      %v4879 = vadd.f32 0.0, %v4878
      %4880 = vmatmul.f32.gmra.mxu0 %v4769
      %v4881 = vpop.f32.mrf.mxu0
      %v4882 = vadd.f32 0.0, %v4881
      %4883 = vmatmul.f32.gmra.mxu0 %v4772
      %v4884 = vpop.f32.mrf.mxu0
      %v4885 = vadd.f32 0.0, %v4884
      %4886 = vmatmul.f32.gmra.mxu0 %v4775
      %v4887 = vpop.f32.mrf.mxu0
      %v4888 = vadd.f32 0.0, %v4887
      %4889 = vmatmul.f32.gmra.mxu0 %v4778
      %v4890 = vpop.f32.mrf.mxu0
      %v4891 = vadd.f32 0.0, %v4890
      %4892 = vmatmul.f32.gmra.mxu0 %v4781
      %v4893 = vpop.f32.mrf.mxu0
      %v4894 = vadd.f32 0.0, %v4893
      %4895 = vmatmul.f32.gmra.mxu0 %v4784
      %v4896 = vpop.f32.mrf.mxu0
      %v4897 = vadd.f32 0.0, %v4896
      %4898 = vmatmul.f32.gmra.mxu0 %v4787
      %v4899 = vpop.f32.mrf.mxu0
      %v4900 = vadd.f32 0.0, %v4899
      %4901 = vmatmul.f32.gmra.mxu0 %v4790
      %v4902 = vpop.f32.mrf.mxu0
      %v4903 = vadd.f32 0.0, %v4902
      %4904 = vmatmul.f32.gmra.mxu0 %v4793
      %v4905 = vpop.f32.mrf.mxu0
      %v4906 = vadd.f32 0.0, %v4905
      %4907 = vmatmul.f32.gmra.mxu0 %v4796
      %v4908 = vpop.f32.mrf.mxu0
      %v4909 = vadd.f32 0.0, %v4908
      %4910 = vmatmul.f32.gmra.mxu0 %v4799
      %v4911 = vpop.f32.mrf.mxu0
      %v4912 = vadd.f32 0.0, %v4911
      %4913 = vmatmul.f32.gmra.mxu0 %v4802
      %v4914 = vpop.f32.mrf.mxu0
      %v4915 = vadd.f32 0.0, %v4914
      %4916 = vmatmul.f32.gmra.mxu0 %v4805
      %v4917 = vpop.f32.mrf.mxu0
      %v4918 = vadd.f32 0.0, %v4917
      %4919 = vmatmul.f32.gmra.mxu0 %v4808
      %v4920 = vpop.f32.mrf.mxu0
      %v4921 = vadd.f32 0.0, %v4920
      %4922 = vmatmul.f32.gmra.mxu0 %v4811
      %v4923 = vpop.f32.mrf.mxu0
      %v4924 = vadd.f32 0.0, %v4923
      %4925 = vmatmul.f32.gmra.mxu0 %v4814
      %v4926 = vpop.f32.mrf.mxu0
      %v4927 = vadd.f32 0.0, %v4926
      %4928 = vmatmul.f32.gmra.mxu0 %v4817
      %v4929 = vpop.f32.mrf.mxu0
      %v4930 = vadd.f32 0.0, %v4929
      %4931 = vmatmul.f32.gmra.mxu0 %v4820
      %v4932 = vpop.f32.mrf.mxu0
      %v4933 = vadd.f32 0.0, %v4932
      %4934 = vmatmul.f32.gmra.mxu0 %v4823
      %v4935 = vpop.f32.mrf.mxu0
      %v4936 = vadd.f32 0.0, %v4935
      %4937 = vmatmul.f32.gmra.mxu0 %v4826
      %v4938 = vpop.f32.mrf.mxu0
      %v4939 = vadd.f32 0.0, %v4938
      %4940 = vmatmul.f32.gmra.mxu0 %v4829
      %v4941 = vpop.f32.mrf.mxu0
      %v4942 = vadd.f32 0.0, %v4941
      %4943 = vmatmul.f32.gmra.mxu0 %v4832
      %v4944 = vpop.f32.mrf.mxu0
      %v4945 = vadd.f32 0.0, %v4944
      %4946 = vmatmul.f32.gmra.mxu0 %v4835
      %v4947 = vpop.f32.mrf.mxu0
      %v4948 = vadd.f32 0.0, %v4947
      %4949 = vdwg.mxu0
      %v4950 = vadd.f32 %v4547, %v4855
      %v4951 = vadd.f32 %v4548, %v4858
      %v4952 = vadd.f32 %v4549, %v4861
      %v4953 = vadd.f32 %v4550, %v4864
      %v4954 = vadd.f32 %v4551, %v4867
      %v4955 = vadd.f32 %v4552, %v4870
      %v4956 = vadd.f32 %v4553, %v4873
      %v4957 = vadd.f32 %v4554, %v4876
      %v4958 = vadd.f32 %v4555, %v4879
      %v4959 = vadd.f32 %v4556, %v4882
      %v4960 = vadd.f32 %v4557, %v4885
      %v4961 = vadd.f32 %v4558, %v4888
      %v4962 = vadd.f32 %v4559, %v4891
      %v4963 = vadd.f32 %v4560, %v4894
      %v4964 = vadd.f32 %v4561, %v4897
      %v4965 = vadd.f32 %v4562, %v4900
      %v4966 = vadd.f32 %v4563, %v4903
      %v4967 = vadd.f32 %v4564, %v4906
      %v4968 = vadd.f32 %v4565, %v4909
      %v4969 = vadd.f32 %v4566, %v4912
      %v4970 = vadd.f32 %v4567, %v4915
      %v4971 = vadd.f32 %v4568, %v4918
      %v4972 = vadd.f32 %v4569, %v4921
      %v4973 = vadd.f32 %v4570, %v4924
      %v4974 = vadd.f32 %v4571, %v4927
      %v4975 = vadd.f32 %v4572, %v4930
      %v4976 = vadd.f32 %v4573, %v4933
      %v4977 = vadd.f32 %v4574, %v4936
      %v4978 = vadd.f32 %v4575, %v4939
      %v4979 = vadd.f32 %v4576, %v4942
      %v4980 = vadd.f32 %v4577, %v4945
      %v4981 = vadd.f32 %v4578, %v4948
      %v4982 = vld [vmem:[%s2] sm:$0x1]
      %v4984 = vperm.slane %v4982, 0
      %v4986 = vadd.f32 %v4950, %v4984
      %v4987 = vadd.f32 %v4951, %v4984
      %v4988 = vadd.f32 %v4952, %v4984
      %v4989 = vadd.f32 %v4953, %v4984
      %v4990 = vadd.f32 %v4954, %v4984
      %v4991 = vadd.f32 %v4955, %v4984
      %v4992 = vadd.f32 %v4956, %v4984
      %v4993 = vadd.f32 %v4957, %v4984
      %v4994 = vadd.f32 %v4958, %v4984
      %v4995 = vadd.f32 %v4959, %v4984
      %v4996 = vadd.f32 %v4960, %v4984
      %v4997 = vadd.f32 %v4961, %v4984
      %v4998 = vadd.f32 %v4962, %v4984
      %v4999 = vadd.f32 %v4963, %v4984
      %v5000 = vadd.f32 %v4964, %v4984
      %v5001 = vadd.f32 %v4965, %v4984
      %v5002 = vadd.f32 %v4966, %v4984
      %v5003 = vadd.f32 %v4967, %v4984
      %v5004 = vadd.f32 %v4968, %v4984
      %v5005 = vadd.f32 %v4969, %v4984
      %v5006 = vadd.f32 %v4970, %v4984
      %v5007 = vadd.f32 %v4971, %v4984
      %v5008 = vadd.f32 %v4972, %v4984
      %v5009 = vadd.f32 %v4973, %v4984
      %v5010 = vadd.f32 %v4974, %v4984
      %v5011 = vadd.f32 %v4975, %v4984
      %v5012 = vadd.f32 %v4976, %v4984
      %v5013 = vadd.f32 %v4977, %v4984
      %v5014 = vadd.f32 %v4978, %v4984
      %v5015 = vadd.f32 %v4979, %v4984
      %v5016 = vadd.f32 %v4980, %v4984
      %v5017 = vadd.f32 %v4981, %v4984
      %v5018 = vmax.f32 %v4986, 0.0
      %v5019 = vmax.f32 %v4987, 0.0
      %v5020 = vmax.f32 %v4988, 0.0
      %v5021 = vmax.f32 %v4989, 0.0
      %v5022 = vmax.f32 %v4990, 0.0
      %v5023 = vmax.f32 %v4991, 0.0
      %v5024 = vmax.f32 %v4992, 0.0
      %v5025 = vmax.f32 %v4993, 0.0
      %v5026 = vmax.f32 %v4994, 0.0
      %v5027 = vmax.f32 %v4995, 0.0
      %v5028 = vmax.f32 %v4996, 0.0
      %v5029 = vmax.f32 %v4997, 0.0
      %v5030 = vmax.f32 %v4998, 0.0
      %v5031 = vmax.f32 %v4999, 0.0
      %v5032 = vmax.f32 %v5000, 0.0
      %v5033 = vmax.f32 %v5001, 0.0
      %v5034 = vmax.f32 %v5002, 0.0
      %v5035 = vmax.f32 %v5003, 0.0
      %v5036 = vmax.f32 %v5004, 0.0
      %v5037 = vmax.f32 %v5005, 0.0
      %v5038 = vmax.f32 %v5006, 0.0
      %v5039 = vmax.f32 %v5007, 0.0
      %v5040 = vmax.f32 %v5008, 0.0
      %v5041 = vmax.f32 %v5009, 0.0
      %v5042 = vmax.f32 %v5010, 0.0
      %v5043 = vmax.f32 %v5011, 0.0
      %v5044 = vmax.f32 %v5012, 0.0
      %v5045 = vmax.f32 %v5013, 0.0
      %v5046 = vmax.f32 %v5014, 0.0
      %v5047 = vmax.f32 %v5015, 0.0
      %v5048 = vmax.f32 %v5016, 0.0
      %v5049 = vmax.f32 %v5017, 0.0
      %v5050 = vpack.c.bf16 %v5019, %v5018
      %v5051 = vpack.c.bf16 %v5021, %v5020
      %v5052 = vpack.c.bf16 %v5023, %v5022
      %v5053 = vpack.c.bf16 %v5025, %v5024
      %v5054 = vpack.c.bf16 %v5027, %v5026
      %v5055 = vpack.c.bf16 %v5029, %v5028
      %v5056 = vpack.c.bf16 %v5031, %v5030
      %v5057 = vpack.c.bf16 %v5033, %v5032
      %v5058 = vpack.c.bf16 %v5035, %v5034
      %v5059 = vpack.c.bf16 %v5037, %v5036
      %v5060 = vpack.c.bf16 %v5039, %v5038
      %v5061 = vpack.c.bf16 %v5041, %v5040
      %v5062 = vpack.c.bf16 %v5043, %v5042
      %v5063 = vpack.c.bf16 %v5045, %v5044
      %v5064 = vpack.c.bf16 %v5047, %v5046
      %v5065 = vpack.c.bf16 %v5049, %v5048
      %v5066 = vld [vmem:[%s4] sm:$0xf]
      %v5067 = vld [vmem:[%s4 + $0x4] sm:$0xf]
      %v5068 = vld [vmem:[%s4 + $0x8] sm:$0xf]
      %v5069 = vld [vmem:[%s4 + $0xc] sm:$0xf]
      %v5070 = vld [vmem:[%s4 + $0x10] sm:$0xf]
      %v5071 = vld [vmem:[%s4 + $0x14] sm:$0xf]
      %v5072 = vld [vmem:[%s4 + $0x18] sm:$0xf]
      %v5073 = vld [vmem:[%s4 + $0x1c] sm:$0xf]
      %v5074 = vld [vmem:[%s4 + $0x20] sm:$0xf]
      %v5075 = vld [vmem:[%s4 + $0x24] sm:$0xf]
      %v5076 = vld [vmem:[%s4 + $0x28] sm:$0xf]
      %v5077 = vld [vmem:[%s4 + $0x2c] sm:$0xf]
      %v5078 = vld [vmem:[%s4 + $0x30] sm:$0xf]
      %v5079 = vld [vmem:[%s4 + $0x34] sm:$0xf]
      %v5080 = vld [vmem:[%s4 + $0x38] sm:$0xf]
      %v5081 = vld [vmem:[%s4 + $0x3c] sm:$0xf]
      %v5098 = vunpack.c.l.b16 %v5066
      %v5099 = vunpack.c.l.b16 %v5067
      %v5100 = vunpack.c.l.b16 %v5068
      %v5101 = vunpack.c.l.b16 %v5069
      %v5102 = vunpack.c.l.b16 %v5070
      %v5103 = vunpack.c.l.b16 %v5071
      %v5104 = vunpack.c.l.b16 %v5072
      %v5105 = vunpack.c.l.b16 %v5073
      %v5106 = vunpack.c.l.b16 %v5074
      %v5107 = vunpack.c.l.b16 %v5075
      %v5108 = vunpack.c.l.b16 %v5076
      %v5109 = vunpack.c.l.b16 %v5077
      %v5110 = vunpack.c.l.b16 %v5078
      %v5111 = vunpack.c.l.b16 %v5079
      %v5112 = vunpack.c.l.b16 %v5080
      %v5113 = vunpack.c.l.b16 %v5081
      %v5114 = vpack.c.b16 %v5099, %v5098
      %v5115 = vpack.c.b16 %v5101, %v5100
      %v5116 = vpack.c.b16 %v5103, %v5102
      %v5117 = vpack.c.b16 %v5105, %v5104
      %v5118 = vpack.c.b16 %v5107, %v5106
      %v5119 = vpack.c.b16 %v5109, %v5108
      %v5120 = vpack.c.b16 %v5111, %v5110
      %v5121 = vpack.c.b16 %v5113, %v5112
      %5130 = vmatpush.bf16.msra.mxu0 %v5121
      %5131 = vmatpush.bf16.msra.mxu0 %v5120
      %5132 = vmatpush.bf16.msra.mxu0 %v5119
      %5133 = vmatpush.bf16.msra.mxu0 %v5118
      %5134 = vmatpush.bf16.msra.mxu0 %v5117
      %5135 = vmatpush.bf16.msra.mxu0 %v5116
      %5136 = vmatpush.bf16.msra.mxu0 %v5115
      %5137 = vmatpush.bf16.msra.mxu0 %v5114
      %5138 = vmatmul.bf16.gmra.mxu0 %v5050
      %v5139 = vpop.f32.mrf.mxu0
      %v5140 = vadd.f32 0.0, %v5139
      %v5141 = vpop.f32.mrf.mxu0
      %v5142 = vadd.f32 0.0, %v5141
      %5143 = vmatmul.bf16.gmra.mxu0 %v5051
      %v5144 = vpop.f32.mrf.mxu0
      %v5145 = vadd.f32 0.0, %v5144
      %v5146 = vpop.f32.mrf.mxu0
      %v5147 = vadd.f32 0.0, %v5146
      %5148 = vmatmul.bf16.gmra.mxu0 %v5052
      %v5149 = vpop.f32.mrf.mxu0
      %v5150 = vadd.f32 0.0, %v5149
      %v5151 = vpop.f32.mrf.mxu0
      %v5152 = vadd.f32 0.0, %v5151
      %5153 = vmatmul.bf16.gmra.mxu0 %v5053
      %v5154 = vpop.f32.mrf.mxu0
      %v5155 = vadd.f32 0.0, %v5154
      %v5156 = vpop.f32.mrf.mxu0
      %v5157 = vadd.f32 0.0, %v5156
      %5158 = vmatmul.bf16.gmra.mxu0 %v5054
      %v5159 = vpop.f32.mrf.mxu0
      %v5160 = vadd.f32 0.0, %v5159
      %v5161 = vpop.f32.mrf.mxu0
      %v5162 = vadd.f32 0.0, %v5161
      %5163 = vmatmul.bf16.gmra.mxu0 %v5055
      %v5164 = vpop.f32.mrf.mxu0
      %v5165 = vadd.f32 0.0, %v5164
      %v5166 = vpop.f32.mrf.mxu0
      %v5167 = vadd.f32 0.0, %v5166
      %5168 = vmatmul.bf16.gmra.mxu0 %v5056
      %v5169 = vpop.f32.mrf.mxu0
      %v5170 = vadd.f32 0.0, %v5169
      %v5171 = vpop.f32.mrf.mxu0
      %v5172 = vadd.f32 0.0, %v5171
      %5173 = vmatmul.bf16.gmra.mxu0 %v5057
      %v5174 = vpop.f32.mrf.mxu0
      %v5175 = vadd.f32 0.0, %v5174
      %v5176 = vpop.f32.mrf.mxu0
      %v5177 = vadd.f32 0.0, %v5176
      %5178 = vmatmul.bf16.gmra.mxu0 %v5058
      %v5179 = vpop.f32.mrf.mxu0
      %v5180 = vadd.f32 0.0, %v5179
      %v5181 = vpop.f32.mrf.mxu0
      %v5182 = vadd.f32 0.0, %v5181
      %5183 = vmatmul.bf16.gmra.mxu0 %v5059
      %v5184 = vpop.f32.mrf.mxu0
      %v5185 = vadd.f32 0.0, %v5184
      %v5186 = vpop.f32.mrf.mxu0
      %v5187 = vadd.f32 0.0, %v5186
      %5188 = vmatmul.bf16.gmra.mxu0 %v5060
      %v5189 = vpop.f32.mrf.mxu0
      %v5190 = vadd.f32 0.0, %v5189
      %v5191 = vpop.f32.mrf.mxu0
      %v5192 = vadd.f32 0.0, %v5191
      %5193 = vmatmul.bf16.gmra.mxu0 %v5061
      %v5194 = vpop.f32.mrf.mxu0
      %v5195 = vadd.f32 0.0, %v5194
      %v5196 = vpop.f32.mrf.mxu0
      %v5197 = vadd.f32 0.0, %v5196
      %5198 = vmatmul.bf16.gmra.mxu0 %v5062
      %v5199 = vpop.f32.mrf.mxu0
      %v5200 = vadd.f32 0.0, %v5199
      %v5201 = vpop.f32.mrf.mxu0
      %v5202 = vadd.f32 0.0, %v5201
      %5203 = vmatmul.bf16.gmra.mxu0 %v5063
      %v5204 = vpop.f32.mrf.mxu0
      %v5205 = vadd.f32 0.0, %v5204
      %v5206 = vpop.f32.mrf.mxu0
      %v5207 = vadd.f32 0.0, %v5206
      %5208 = vmatmul.bf16.gmra.mxu0 %v5064
      %v5209 = vpop.f32.mrf.mxu0
      %v5210 = vadd.f32 0.0, %v5209
      %v5211 = vpop.f32.mrf.mxu0
      %v5212 = vadd.f32 0.0, %v5211
      %5213 = vmatmul.bf16.gmra.mxu0 %v5065
      %v5214 = vpop.f32.mrf.mxu0
      %v5215 = vadd.f32 0.0, %v5214
      %v5216 = vpop.f32.mrf.mxu0
      %v5217 = vadd.f32 0.0, %v5216
      %5218 = vdwg.mxu0
      %v5219 = vld [vmem:[%s5] sm:$0xf]
      %v5220 = vld [vmem:[%s5 + $0x4] sm:$0xf]
      %v5221 = vld [vmem:[%s5 + $0x8] sm:$0xf]
      %v5222 = vld [vmem:[%s5 + $0xc] sm:$0xf]
      %v5223 = vld [vmem:[%s5 + $0x10] sm:$0xf]
      %v5224 = vld [vmem:[%s5 + $0x14] sm:$0xf]
      %v5225 = vld [vmem:[%s5 + $0x18] sm:$0xf]
      %v5226 = vld [vmem:[%s5 + $0x1c] sm:$0xf]
      %v5227 = vld [vmem:[%s5 + $0x20] sm:$0xf]
      %v5228 = vld [vmem:[%s5 + $0x24] sm:$0xf]
      %v5229 = vld [vmem:[%s5 + $0x28] sm:$0xf]
      %v5230 = vld [vmem:[%s5 + $0x2c] sm:$0xf]
      %v5231 = vld [vmem:[%s5 + $0x30] sm:$0xf]
      %v5232 = vld [vmem:[%s5 + $0x34] sm:$0xf]
      %v5233 = vld [vmem:[%s5 + $0x38] sm:$0xf]
      %v5234 = vld [vmem:[%s5 + $0x3c] sm:$0xf]
      %v5251 = vunpack.c.l.b16 %v5219
      %v5252 = vunpack.c.l.b16 %v5220
      %v5253 = vunpack.c.l.b16 %v5221
      %v5254 = vunpack.c.l.b16 %v5222
      %v5255 = vunpack.c.l.b16 %v5223
      %v5256 = vunpack.c.l.b16 %v5224
      %v5257 = vunpack.c.l.b16 %v5225
      %v5258 = vunpack.c.l.b16 %v5226
      %v5259 = vunpack.c.l.b16 %v5227
      %v5260 = vunpack.c.l.b16 %v5228
      %v5261 = vunpack.c.l.b16 %v5229
      %v5262 = vunpack.c.l.b16 %v5230
      %v5263 = vunpack.c.l.b16 %v5231
      %v5264 = vunpack.c.l.b16 %v5232
      %v5265 = vunpack.c.l.b16 %v5233
      %v5266 = vunpack.c.l.b16 %v5234
      %v5267 = vpack.c.b16 %v5252, %v5251
      %v5268 = vpack.c.b16 %v5254, %v5253
      %v5269 = vpack.c.b16 %v5256, %v5255
      %v5270 = vpack.c.b16 %v5258, %v5257
      %v5271 = vpack.c.b16 %v5260, %v5259
      %v5272 = vpack.c.b16 %v5262, %v5261
      %v5273 = vpack.c.b16 %v5264, %v5263
      %v5274 = vpack.c.b16 %v5266, %v5265
      %5283 = vmatpush.bf16.msra.mxu0 %v5274
      %5284 = vmatpush.bf16.msra.mxu0 %v5273
      %5285 = vmatpush.bf16.msra.mxu0 %v5272
      %5286 = vmatpush.bf16.msra.mxu0 %v5271
      %5287 = vmatpush.bf16.msra.mxu0 %v5270
      %5288 = vmatpush.bf16.msra.mxu0 %v5269
      %5289 = vmatpush.bf16.msra.mxu0 %v5268
      %5290 = vmatpush.bf16.msra.mxu0 %v5267
      %5291 = vmatmul.bf16.gmra.mxu0 %v5050
      %v5292 = vpop.f32.mrf.mxu0
      %v5293 = vadd.f32 0.0, %v5292
      %v5294 = vpop.f32.mrf.mxu0
      %v5295 = vadd.f32 0.0, %v5294
      %5296 = vmatmul.bf16.gmra.mxu0 %v5051
      %v5297 = vpop.f32.mrf.mxu0
      %v5298 = vadd.f32 0.0, %v5297
      %v5299 = vpop.f32.mrf.mxu0
      %v5300 = vadd.f32 0.0, %v5299
      %5301 = vmatmul.bf16.gmra.mxu0 %v5052
      %v5302 = vpop.f32.mrf.mxu0
      %v5303 = vadd.f32 0.0, %v5302
      %v5304 = vpop.f32.mrf.mxu0
      %v5305 = vadd.f32 0.0, %v5304
      %5306 = vmatmul.bf16.gmra.mxu0 %v5053
      %v5307 = vpop.f32.mrf.mxu0
      %v5308 = vadd.f32 0.0, %v5307
      %v5309 = vpop.f32.mrf.mxu0
      %v5310 = vadd.f32 0.0, %v5309
      %5311 = vmatmul.bf16.gmra.mxu0 %v5054
      %v5312 = vpop.f32.mrf.mxu0
      %v5313 = vadd.f32 0.0, %v5312
      %v5314 = vpop.f32.mrf.mxu0
      %v5315 = vadd.f32 0.0, %v5314
      %5316 = vmatmul.bf16.gmra.mxu0 %v5055
      %v5317 = vpop.f32.mrf.mxu0
      %v5318 = vadd.f32 0.0, %v5317
      %v5319 = vpop.f32.mrf.mxu0
      %v5320 = vadd.f32 0.0, %v5319
      %5321 = vmatmul.bf16.gmra.mxu0 %v5056
      %v5322 = vpop.f32.mrf.mxu0
      %v5323 = vadd.f32 0.0, %v5322
      %v5324 = vpop.f32.mrf.mxu0
      %v5325 = vadd.f32 0.0, %v5324
      %5326 = vmatmul.bf16.gmra.mxu0 %v5057
      %v5327 = vpop.f32.mrf.mxu0
      %v5328 = vadd.f32 0.0, %v5327
      %v5329 = vpop.f32.mrf.mxu0
      %v5330 = vadd.f32 0.0, %v5329
      %5331 = vmatmul.bf16.gmra.mxu0 %v5058
      %v5332 = vpop.f32.mrf.mxu0
      %v5333 = vadd.f32 0.0, %v5332
      %v5334 = vpop.f32.mrf.mxu0
      %v5335 = vadd.f32 0.0, %v5334
      %5336 = vmatmul.bf16.gmra.mxu0 %v5059
      %v5337 = vpop.f32.mrf.mxu0
      %v5338 = vadd.f32 0.0, %v5337
      %v5339 = vpop.f32.mrf.mxu0
      %v5340 = vadd.f32 0.0, %v5339
      %5341 = vmatmul.bf16.gmra.mxu0 %v5060
      %v5342 = vpop.f32.mrf.mxu0
      %v5343 = vadd.f32 0.0, %v5342
      %v5344 = vpop.f32.mrf.mxu0
      %v5345 = vadd.f32 0.0, %v5344
      %5346 = vmatmul.bf16.gmra.mxu0 %v5061
      %v5347 = vpop.f32.mrf.mxu0
      %v5348 = vadd.f32 0.0, %v5347
      %v5349 = vpop.f32.mrf.mxu0
      %v5350 = vadd.f32 0.0, %v5349
      %5351 = vmatmul.bf16.gmra.mxu0 %v5062
      %v5352 = vpop.f32.mrf.mxu0
      %v5353 = vadd.f32 0.0, %v5352
      %v5354 = vpop.f32.mrf.mxu0
      %v5355 = vadd.f32 0.0, %v5354
      %5356 = vmatmul.bf16.gmra.mxu0 %v5063
      %v5357 = vpop.f32.mrf.mxu0
      %v5358 = vadd.f32 0.0, %v5357
      %v5359 = vpop.f32.mrf.mxu0
      %v5360 = vadd.f32 0.0, %v5359
      %5361 = vmatmul.bf16.gmra.mxu0 %v5064
      %v5362 = vpop.f32.mrf.mxu0
      %v5363 = vadd.f32 0.0, %v5362
      %v5364 = vpop.f32.mrf.mxu0
      %v5365 = vadd.f32 0.0, %v5364
      %5366 = vmatmul.bf16.gmra.mxu0 %v5065
      %v5367 = vpop.f32.mrf.mxu0
      %v5368 = vadd.f32 0.0, %v5367
      %v5369 = vpop.f32.mrf.mxu0
      %v5370 = vadd.f32 0.0, %v5369
      %5371 = vdwg.mxu0
      %v5372 = vld [vmem:[%s3] sm:$0xf]
      %v5373 = vld [vmem:[%s3 + $0x4] sm:$0xf]
      %v5374 = vpack.c.bf16 %v5142, %v5140
      %v5375 = vpack.c.bf16 %v5147, %v5145
      %v5376 = vpack.c.bf16 %v5152, %v5150
      %v5377 = vpack.c.bf16 %v5157, %v5155
      %v5378 = vpack.c.bf16 %v5162, %v5160
      %v5379 = vpack.c.bf16 %v5167, %v5165
      %v5380 = vpack.c.bf16 %v5172, %v5170
      %v5381 = vpack.c.bf16 %v5177, %v5175
      %v5382 = vpack.c.bf16 %v5182, %v5180
      %v5383 = vpack.c.bf16 %v5187, %v5185
      %v5384 = vpack.c.bf16 %v5192, %v5190
      %v5385 = vpack.c.bf16 %v5197, %v5195
      %v5386 = vpack.c.bf16 %v5202, %v5200
      %v5387 = vpack.c.bf16 %v5207, %v5205
      %v5388 = vpack.c.bf16 %v5212, %v5210
      %v5389 = vpack.c.bf16 %v5217, %v5215
      %v5392 = vunpack.c.l.b16 %v5372
      %v5393 = vunpack.c.l.b16 %v5373
      %v5394 = vpack.c.b16 %v5393, %v5392
      %5396 = vmatpush.bf16.xpose.msra.mxu0 %v5381
      %5397 = vmatpush.bf16.xpose.msra.mxu0 %v5380
      %5398 = vmatpush.bf16.xpose.msra.mxu0 %v5379
      %5399 = vmatpush.bf16.xpose.msra.mxu0 %v5378
      %5400 = vmatpush.bf16.xpose.msra.mxu0 %v5377
      %5401 = vmatpush.bf16.xpose.msra.mxu0 %v5376
      %5402 = vmatpush.bf16.xpose.msra.mxu0 %v5375
      %5403 = vmatpush.bf16.xpose.msra.mxu0 %v5374
      %5404 = vmatmul.bf16.gmra.mxu0 %v5394
      %v5405 = vpop.f32.mrf.mxu0
      %v5406 = vadd.f32 0.0, %v5405
      %v5407 = vpop.f32.mrf.mxu0
      %v5408 = vadd.f32 0.0, %v5407
      %5409 = vdwg.mxu0
      %5410 = vmatpush.bf16.xpose.msra.mxu0 %v5389
      %5411 = vmatpush.bf16.xpose.msra.mxu0 %v5388
      %5412 = vmatpush.bf16.xpose.msra.mxu0 %v5387
      %5413 = vmatpush.bf16.xpose.msra.mxu0 %v5386
      %5414 = vmatpush.bf16.xpose.msra.mxu0 %v5385
      %5415 = vmatpush.bf16.xpose.msra.mxu0 %v5384
      %5416 = vmatpush.bf16.xpose.msra.mxu0 %v5383
      %5417 = vmatpush.bf16.xpose.msra.mxu0 %v5382
      %5418 = vmatmul.bf16.gmra.mxu0 %v5394
      %v5419 = vpop.f32.mrf.mxu0
      %v5420 = vadd.f32 0.0, %v5419
      %v5421 = vpop.f32.mrf.mxu0
      %v5422 = vadd.f32 0.0, %v5421
      %5423 = vdwg.mxu0
      %v5424 = vmax.f32 %v5406, %v5420
      %5425 = vmax.xlane.f32.xlu0 %v5424
      %v5426 = vpop.xlane.xlu0 %5425
      %v5427 = vmax.f32 %v5408, %v5422
      %5428 = vmax.xlane.f32.xlu0 %v5427
      %v5429 = vpop.xlane.xlu0 %5428
      %v5430 = vsub.f32 %v5406, %v5426
      %v5431 = vsub.f32 %v5420, %v5426
      %v5432 = vsub.f32 %v5408, %v5429
      %v5433 = vsub.f32 %v5422, %v5429
      %v5434 = vmul.f32 %v5430, 1.442695
      %v5435 = vpow.pop %v5434
      %v5436 = vmul.f32 %v5431, 1.442695
      %v5437 = vpow.pop %v5436
      %v5438 = vmul.f32 %v5432, 1.442695
      %v5439 = vpow.pop %v5438
      %v5440 = vmul.f32 %v5433, 1.442695
      %v5441 = vpow.pop %v5440
      %v5442 = vadd.f32 %v5435, %v5437
      %5443 = vadd.xlane.f32.xlu0 %v5442
      %v5444 = vpop.xlane.xlu0 %5443
      %v5445 = vadd.f32 %v5439, %v5441
      %5446 = vadd.xlane.f32.xlu0 %v5445
      %v5447 = vpop.xlane.xlu0 %5446
      %v5448 = vrcp.pop %v5444
      %v5449 = vrcp.pop %v5447
      %v5450 = vmul.f32 %v5435, %v5448
      %v5451 = vmul.f32 %v5437, %v5448
      %v5452 = vmul.f32 %v5439, %v5449
      %v5453 = vmul.f32 %v5441, %v5449
      %v5454 = vpack.c.bf16 %v5452, %v5450
      %v5455 = vpack.c.bf16 %v5453, %v5451
      %v5456 = vpack.c.bf16 %v5295, %v5293
      %v5457 = vpack.c.bf16 %v5300, %v5298
      %v5458 = vpack.c.bf16 %v5305, %v5303
      %v5459 = vpack.c.bf16 %v5310, %v5308
      %v5460 = vpack.c.bf16 %v5315, %v5313
      %v5461 = vpack.c.bf16 %v5320, %v5318
      %v5462 = vpack.c.bf16 %v5325, %v5323
      %v5463 = vpack.c.bf16 %v5330, %v5328
      %v5464 = vpack.c.bf16 %v5335, %v5333
      %v5465 = vpack.c.bf16 %v5340, %v5338
      %v5466 = vpack.c.bf16 %v5345, %v5343
      %v5467 = vpack.c.bf16 %v5350, %v5348
      %v5468 = vpack.c.bf16 %v5355, %v5353
      %v5469 = vpack.c.bf16 %v5360, %v5358
      %v5470 = vpack.c.bf16 %v5365, %v5363
      %v5471 = vpack.c.bf16 %v5370, %v5368
      %5472 = vmatpush.bf16.msra.mxu0 %v5463
      %5473 = vmatpush.bf16.msra.mxu0 %v5462
      %5474 = vmatpush.bf16.msra.mxu0 %v5461
      %5475 = vmatpush.bf16.msra.mxu0 %v5460
      %5476 = vmatpush.bf16.msra.mxu0 %v5459
      %5477 = vmatpush.bf16.msra.mxu0 %v5458
      %5478 = vmatpush.bf16.msra.mxu0 %v5457
      %5479 = vmatpush.bf16.msra.mxu0 %v5456
      %5480 = vmatmul.bf16.gmra.mxu0 %v5454
      %v5481 = vpop.f32.mrf.mxu0
      %v5482 = vadd.f32 0.0, %v5481
      %v5483 = vpop.f32.mrf.mxu0
      %v5484 = vadd.f32 0.0, %v5483
      %5485 = vdwg.mxu0
      %5486 = vmatpush.bf16.msra.mxu0 %v5471
      %5487 = vmatpush.bf16.msra.mxu0 %v5470
      %5488 = vmatpush.bf16.msra.mxu0 %v5469
      %5489 = vmatpush.bf16.msra.mxu0 %v5468
      %5490 = vmatpush.bf16.msra.mxu0 %v5467
      %5491 = vmatpush.bf16.msra.mxu0 %v5466
      %5492 = vmatpush.bf16.msra.mxu0 %v5465
      %5493 = vmatpush.bf16.msra.mxu0 %v5464
      %5494 = vmatmul.bf16.gmra.mxu0 %v5455
      %v5495 = vpop.f32.mrf.mxu0
      %v5496 = vadd.f32 %v5482, %v5495
      %v5497 = vpop.f32.mrf.mxu0
      %v5498 = vadd.f32 %v5484, %v5497
      %5499 = vdwg.mxu0
      %v5500 = vpack.c.bf16 %v5498, %v5496
      %v5501 = vld [vmem:[%s6] sm:$0xf]
      %v5502 = vld [vmem:[%s6 + $0x4] sm:$0xf]
      %v5503 = vld [vmem:[%s6 + $0x8] sm:$0xf]
      %v5504 = vld [vmem:[%s6 + $0xc] sm:$0xf]
      %v5505 = vld [vmem:[%s6 + $0x10] sm:$0xf]
      %v5506 = vld [vmem:[%s6 + $0x14] sm:$0xf]
      %v5507 = vld [vmem:[%s6 + $0x18] sm:$0xf]
      %v5508 = vld [vmem:[%s6 + $0x1c] sm:$0xf]
      %v5509 = vld [vmem:[%s6 + $0x20] sm:$0xf]
      %v5510 = vld [vmem:[%s6 + $0x24] sm:$0xf]
      %v5511 = vld [vmem:[%s6 + $0x28] sm:$0xf]
      %v5512 = vld [vmem:[%s6 + $0x2c] sm:$0xf]
      %v5513 = vld [vmem:[%s6 + $0x30] sm:$0xf]
      %v5514 = vld [vmem:[%s6 + $0x34] sm:$0xf]
      %v5515 = vld [vmem:[%s6 + $0x38] sm:$0xf]
      %v5516 = vld [vmem:[%s6 + $0x3c] sm:$0xf]
      %v5517 = vld [vmem:[%s7] sm:$0x1]
      %v5519 = vperm.slane %v5517, 0
      %v5537 = vunpack.c.l.b16 %v5501
      %v5538 = vunpack.c.l.b16 %v5502
      %v5539 = vunpack.c.l.b16 %v5503
      %v5540 = vunpack.c.l.b16 %v5504
      %v5541 = vunpack.c.l.b16 %v5505
      %v5542 = vunpack.c.l.b16 %v5506
      %v5543 = vunpack.c.l.b16 %v5507
      %v5544 = vunpack.c.l.b16 %v5508
      %v5545 = vunpack.c.l.b16 %v5509
      %v5546 = vunpack.c.l.b16 %v5510
      %v5547 = vunpack.c.l.b16 %v5511
      %v5548 = vunpack.c.l.b16 %v5512
      %v5549 = vunpack.c.l.b16 %v5513
      %v5550 = vunpack.c.l.b16 %v5514
      %v5551 = vunpack.c.l.b16 %v5515
      %v5552 = vunpack.c.l.b16 %v5516
      %v5553 = vpack.c.b16 %v5538, %v5537
      %v5554 = vpack.c.b16 %v5540, %v5539
      %v5555 = vpack.c.b16 %v5542, %v5541
      %v5556 = vpack.c.b16 %v5544, %v5543
      %v5557 = vpack.c.b16 %v5546, %v5545
      %v5558 = vpack.c.b16 %v5548, %v5547
      %v5559 = vpack.c.b16 %v5550, %v5549
      %v5560 = vpack.c.b16 %v5552, %v5551
      %5569 = vmatpush.bf16.msra.mxu0 %v5560
      %5570 = vmatpush.bf16.msra.mxu0 %v5559
      %5571 = vmatpush.bf16.msra.mxu0 %v5558
      %5572 = vmatpush.bf16.msra.mxu0 %v5557
      %5573 = vmatpush.bf16.msra.mxu0 %v5556
      %5574 = vmatpush.bf16.msra.mxu0 %v5555
      %5575 = vmatpush.bf16.msra.mxu0 %v5554
      %5576 = vmatpush.bf16.msra.mxu0 %v5553
      %5577 = vmatmul.bf16.gmra.mxu0 %v5500
      %v5578 = vpop.f32.mrf.mxu0
      %v5579 = vadd.f32 %v5519, %v5578
      %v5580 = vpop.f32.mrf.mxu0
      %v5581 = vadd.f32 %v5519, %v5580
      %5582 = vdwg.mxu0
      %v5583 = vmax.f32 %v5579, 0.0
      %v5584 = vmax.f32 %v5581, 0.0
      %v5585 = vpack.c.bf16 %v5584, %v5583
      %v5586 = vld [vmem:[%s8] sm:$0xf]
      %v5587 = vld [vmem:[%s8 + $0x4] sm:$0xf]
      %v5588 = vld [vmem:[%s8 + $0x8] sm:$0xf]
      %v5589 = vld [vmem:[%s8 + $0xc] sm:$0xf]
      %v5590 = vld [vmem:[%s8 + $0x10] sm:$0xf]
      %v5591 = vld [vmem:[%s8 + $0x14] sm:$0xf]
      %v5592 = vld [vmem:[%s8 + $0x18] sm:$0xf]
      %v5593 = vld [vmem:[%s8 + $0x1c] sm:$0xf]
      %v5594 = vld [vmem:[%s8 + $0x20] sm:$0xf]
      %v5595 = vld [vmem:[%s8 + $0x24] sm:$0xf]
      %v5596 = vld [vmem:[%s8 + $0x28] sm:$0xf]
      %v5597 = vld [vmem:[%s8 + $0x2c] sm:$0xf]
      %v5598 = vld [vmem:[%s8 + $0x30] sm:$0xf]
      %v5599 = vld [vmem:[%s8 + $0x34] sm:$0xf]
      %v5600 = vld [vmem:[%s8 + $0x38] sm:$0xf]
      %v5601 = vld [vmem:[%s8 + $0x3c] sm:$0xf]
      %v5602 = vld [vmem:[%s9] sm:$0x1]
      %v5604 = vperm.slane %v5602, 0
      %v5622 = vunpack.c.l.b16 %v5586
      %v5623 = vunpack.c.l.b16 %v5587
      %v5624 = vunpack.c.l.b16 %v5588
      %v5625 = vunpack.c.l.b16 %v5589
      %v5626 = vunpack.c.l.b16 %v5590
      %v5627 = vunpack.c.l.b16 %v5591
      %v5628 = vunpack.c.l.b16 %v5592
      %v5629 = vunpack.c.l.b16 %v5593
      %v5630 = vunpack.c.l.b16 %v5594
      %v5631 = vunpack.c.l.b16 %v5595
      %v5632 = vunpack.c.l.b16 %v5596
      %v5633 = vunpack.c.l.b16 %v5597
      %v5634 = vunpack.c.l.b16 %v5598
      %v5635 = vunpack.c.l.b16 %v5599
      %v5636 = vunpack.c.l.b16 %v5600
      %v5637 = vunpack.c.l.b16 %v5601
      %v5638 = vpack.c.b16 %v5623, %v5622
      %v5639 = vpack.c.b16 %v5625, %v5624
      %v5640 = vpack.c.b16 %v5627, %v5626
      %v5641 = vpack.c.b16 %v5629, %v5628
      %v5642 = vpack.c.b16 %v5631, %v5630
      %v5643 = vpack.c.b16 %v5633, %v5632
      %v5644 = vpack.c.b16 %v5635, %v5634
      %v5645 = vpack.c.b16 %v5637, %v5636
      %5654 = vmatpush.bf16.msra.mxu0 %v5645
      %5655 = vmatpush.bf16.msra.mxu0 %v5644
      %5656 = vmatpush.bf16.msra.mxu0 %v5643
      %5657 = vmatpush.bf16.msra.mxu0 %v5642
      %5658 = vmatpush.bf16.msra.mxu0 %v5641
      %5659 = vmatpush.bf16.msra.mxu0 %v5640
      %5660 = vmatpush.bf16.msra.mxu0 %v5639
      %5661 = vmatpush.bf16.msra.mxu0 %v5638
      %5662 = vmatmul.bf16.gmra.mxu0 %v5585
      %v5663 = vpop.f32.mrf.mxu0
      %v5664 = vadd.f32 %v5604, %v5663
      %v5665 = vpop.f32.mrf.mxu0
      %v5666 = vadd.f32 %v5604, %v5665
      %5667 = vdwg.mxu0
      %5668 = vst [vmem:[%s359] sm:$0xff] %v5664
      %5669 = vst [vmem:[%s359 + $0x8] sm:$0xff] %v5666
      %p5670 = scmp.lt.s32.totalorder %s21, 1
      %s5671 = scalar_select %p5670, %s21, 1
      %s5672 = smul.addr %s5671, 2
      %s5673 = smul.addr %s5672, 8
      %s5674 = scalar_lea.vmem %s10, %s5673
      // Predicated region
      $region61: #{simrel_rcnn_forward.1} parent=59 // pred_check
        %p5675 = pneg %p254
      $region62: #{simrel_rcnn_forward.1} parent=59 // pred_check_branch
        %5677 = sbr.rel (%p5675) target = $region64
      $region63: #{simrel_rcnn_forward.1} parent=59 // pred_region
        _
      $region64: #{simrel_rcnn_forward.1} parent=59 // pred_fallthru
        _
    $region60: #{simrel_rcnn_forward.1} parent=5 // pred_fallthru
      _
    %p5678 = scmp.le.s32.totalorder 2, %s16
    // Predicated region
    $region65: #{simrel_rcnn_forward.1} parent=5 // pred_check
      %p5679 = pneg %p5678
    $region66: #{simrel_rcnn_forward.1} parent=5 // pred_check_branch
      %5681 = sbr.rel (%p5679) target = $region68
    $region67: #{simrel_rcnn_forward.1} parent=5 // pred_region
      %s5682 = ssub.s32 %s16, 2
      // Predicated region
      $region69: #{simrel_rcnn_forward.1} parent=67 // pred_check
        %p5683 = pneg %p260
      $region70: #{simrel_rcnn_forward.1} parent=67 // pred_check_branch
        %5685 = sbr.rel (%p5683) target = $region72
      $region71: #{simrel_rcnn_forward.1} parent=67 // pred_region
        %p5686 = scmp.lt.s32.totalorder %s22, 1
        %s5687 = scalar_select %p5686, %s22, 1
        %s5688 = smul.addr %s5687, 2
        %s5689 = smul.addr %s5688, 8
        %s5690 = scalar_lea.vmem %s10, %s5689
      $region72: #{simrel_rcnn_forward.1} parent=67 // pred_fallthru
        _
    $region68: #{simrel_rcnn_forward.1} parent=5 // pred_fallthru
      _
  $region6: #{simrel_rcnn_forward.1} parent=0 // loop_footer
    %s20 = sadd.s32 1, %s16
  $region7: #{simrel_rcnn_forward.1} parent=0 // loop_footer_branch
    %15 = sbr.rel target = $region3
  $region8: #{simrel_rcnn_forward.1} parent=0 // loop_exit
    _

</llo_original>
